<compile_context>
chip_gen: v5e
topology: v5e:2x2
jax: 0.10.0
libtpu: 0.0.40
codegen_flags: <defaults>
</compile_context>

<pallas_src>
import jax
import jax.numpy as jnp
from jax.experimental import pallas as pl
from jax.experimental.pallas import tpu as pltpu

_NEG_INF = -1e30
_PROJ_VMEM_WEIGHT_BUDGET = 8 * 1024 * 1024   # bytes of resident projection weight


# ----------------------------------------------------------------------------
# small helpers
# ----------------------------------------------------------------------------
def _round_up(n, m):
    return ((n + m - 1) // m) * m


def _choose_time_chunk(t, cap=8):
    """Largest chunk <= cap that divides t (chunk fully unrolled in-kernel)."""
    c = min(t, cap)
    while c > 1 and t % c:
        c -= 1
    return max(c, 1)


def _choose_v_tile(vp, cap=2048):
    """Largest multiple of 128 <= cap that divides vp (vp is a multiple of 128)."""
    nv = vp // 128
    best = 128
    for d in range(1, nv + 1):
        t = d * 128
        if nv % d == 0 and t <= cap:
            best = t
    return best


def _vmem_limit(byte_estimate):
    """Scoped-VMEM limit from an estimate of resident (double-buffered) bytes."""
    return int(min(96 * 1024 * 1024,
                   max(8 * 1024 * 1024, 2 * int(byte_estimate) + 2 * 1024 * 1024)))


# ----------------------------------------------------------------------------
# Kernel 1: GRU recurrence over precomputed (gathered) input gates.
#   gates_seq: (T, Bp, 3Hp) bf16  = table[token] = x@W_ih^T + b_ih (+ b_hr|b_hz fold)
#   Per step:  gh = h_bf16 @ W_hh_bf16 (f32 accum);  n-gate bias b_hn added inside.
#   Grid iterates over time CHUNKS; f32 hidden state lives in VMEM scratch.
# ----------------------------------------------------------------------------
def _gru_recurrent_kernel(gi_ref, h0_ref, whh_ref, bhn_ref,
                          out_ref, hn_ref, h_scratch):
    c = pl.program_id(0)

    @pl.when(c == 0)
    def _():
        h_scratch[...] = h0_ref[...]

    t_chunk = gi_ref.shape[0]
    hp = h0_ref.shape[-1]
    whh = whh_ref[...]            # (Hp, 3Hp) bf16, loop-invariant
    b_hn = bhn_ref[...]           # (1, Hp)  f32,  loop-invariant

    def step(s, h):
        gi = gi_ref[s].astype(jnp.float32)                      # (Bp, 3Hp)
        gh = jnp.dot(h.astype(jnp.bfloat16), whh,
                     preferred_element_type=jnp.float32)        # (Bp, 3Hp) f32
        # PyTorch GRU gate order: r, z, n  (lane-aligned, Hp % 128 == 0)
        r = jax.nn.sigmoid(gi[:, :hp] + gh[:, :hp])
        z = jax.nn.sigmoid(gi[:, hp:2 * hp] + gh[:, hp:2 * hp])
        n = jnp.tanh(gi[:, 2 * hp:] + r * (gh[:, 2 * hp:] + b_hn))
        h_new = (1.0 - z) * n + z * h
        out_ref[s] = h_new.astype(out_ref.dtype)
        return h_new

    h_final = jax.lax.fori_loop(0, t_chunk, step, h_scratch[...], unroll=True)
    h_scratch[...] = h_final

    @pl.when(c == pl.num_programs(0) - 1)
    def _():
        hn_ref[...] = h_final


def gru_recurrent(gates_seq, h0, w_hh, b_hn):
    """gates_seq: (T, Bp, 3Hp) bf16; h0: (Bp, Hp) f32; w_hh: (Hp, 3Hp) bf16;
    b_hn: (1, Hp) f32.  Returns (hidden_seq bf16 (T,Bp,Hp), h_n f32 (Bp,Hp))."""
    T, Bp, G = gates_seq.shape
    Hp = h0.shape[-1]
    t_chunk = _choose_time_chunk(T)
    bytes_est = (2 * t_chunk * Bp * G * gates_seq.dtype.itemsize   # gates chunk
                 + 2 * t_chunk * Bp * Hp * 2                        # hidden-seq chunk
                 + 2 * Hp * G * w_hh.dtype.itemsize                 # W_hh
                 + 6 * Bp * Hp * 4                                  # h0 / h_n / scratch
                 + 2 * Hp * 4)                                      # b_hn
    out_seq, h_n = pl.pallas_call(
        _gru_recurrent_kernel,
        out_shape=(jax.ShapeDtypeStruct((T, Bp, Hp), jnp.bfloat16),
                   jax.ShapeDtypeStruct((Bp, Hp), jnp.float32)),
        grid_spec=pltpu.PrefetchScalarGridSpec(
            num_scalar_prefetch=0,
            grid=(T // t_chunk,),
            in_specs=[
                pl.BlockSpec((t_chunk, Bp, G), lambda c: (c, 0, 0)),   # gates chunk
                pl.BlockSpec((Bp, Hp), lambda c: (0, 0)),              # h0 (invariant)
                pl.BlockSpec((Hp, G), lambda c: (0, 0)),               # W_hh (invariant)
                pl.BlockSpec((1, Hp), lambda c: (0, 0)),               # b_hn (invariant)
            ],
            out_specs=[
                pl.BlockSpec((t_chunk, Bp, Hp), lambda c: (c, 0, 0)),  # hidden seq
                pl.BlockSpec((Bp, Hp), lambda c: (0, 0)),              # final hidden
            ],
            scratch_shapes=[pltpu.VMEM((Bp, Hp), jnp.float32)],
        ),
        compiler_params=pltpu.CompilerParams(
            dimension_semantics=("arbitrary",),            # sequential recurrence
            vmem_limit_bytes=_vmem_limit(bytes_est)),
    )(gates_seq, h0, w_hh, b_hn)
    return out_seq, h_n


# ----------------------------------------------------------------------------
# Kernel 2a: single-pass projection + log_softmax (whole Vp resident).
# ----------------------------------------------------------------------------
def _proj_logsoftmax_kernel(h_ref, w_ref, b_ref, out_ref):
    logits = jnp.dot(h_ref[...], w_ref[...],
                     preferred_element_type=jnp.float32) + b_ref[...]
    m = jnp.max(logits, axis=-1, keepdims=True)
    s = logits - m
    lse = jnp.log(jnp.sum(jnp.exp(s), axis=-1, keepdims=True))
    out_ref[...] = s - lse


def _proj_logsoftmax_simple(h_flat, w_out, b_out, tn):
    Np, Hp = h_flat.shape
    Vp = w_out.shape[1]
    bytes_est = (2 * tn * Hp * h_flat.dtype.itemsize
                 + 2 * Hp * Vp * w_out.dtype.itemsize
                 + 2 * Vp * 4 + 2 * tn * Vp * 4)
    return pl.pallas_call(
        _proj_logsoftmax_kernel,
        out_shape=jax.ShapeDtypeStruct((Np, Vp), jnp.float32),
        grid_spec=pltpu.PrefetchScalarGridSpec(
            num_scalar_prefetch=0,
            grid=(Np // tn,),
            in_specs=[
                pl.BlockSpec((tn, Hp), lambda i: (i, 0)),
                pl.BlockSpec((Hp, Vp), lambda i: (0, 0)),
                pl.BlockSpec((1, Vp), lambda i: (0, 0)),
            ],
            out_specs=pl.BlockSpec((tn, Vp), lambda i: (i, 0)),
        ),
        compiler_params=pltpu.CompilerParams(
            dimension_semantics=("parallel",),
            vmem_limit_bytes=_vmem_limit(bytes_est)),
    )(h_flat, w_out, b_out)


# ----------------------------------------------------------------------------
# Kernel 2b: Vp-tiled online (flash-style) projection + log_softmax.
#   A: logits tiles + running max/sum -> lse (per-row), weight tile (Hp, tv) only.
#   B: out = logits - lse  (elementwise normalize).
# ----------------------------------------------------------------------------
def _proj_logits_stats_kernel(h_ref, w_ref, b_ref, logits_ref, lse_ref, m_s, l_s):
    v = pl.program_id(1)

    @pl.when(v == 0)
    def _():
        m_s[...] = jnp.full(m_s.shape, -jnp.inf, jnp.float32)
        l_s[...] = jnp.zeros(l_s.shape, jnp.float32)

    logits = jnp.dot(h_ref[...], w_ref[...],
                     preferred_element_type=jnp.float32) + b_ref[...]
    logits_ref[...] = logits
    m_prev = m_s[...]
    m_new = jnp.maximum(m_prev, jnp.max(logits, axis=-1, keepdims=True))
    l_s[...] = (l_s[...] * jnp.exp(m_prev - m_new)
                + jnp.sum(jnp.exp(logits - m_new), axis=-1, keepdims=True))
    m_s[...] = m_new

    @pl.when(v == pl.num_programs(1) - 1)
    def _():
        lse_ref[...] = m_s[...] + jnp.log(l_s[...])


def _logsoftmax_finalize_kernel(logits_ref, lse_ref, out_ref):
    out_ref[...] = logits_ref[...] - lse_ref[...]


def _proj_logsoftmax_tiled(h_flat, w_out, b_out, tn, tile_v=None):
    Np, Hp = h_flat.shape
    Vp = w_out.shape[1]
    tv = tile_v if tile_v is not None else _choose_v_tile(Vp)
    assert Vp % tv == 0
    nr, nv = Np // tn, Vp // tv

    bytes_a = (2 * tn * Hp * h_flat.dtype.itemsize
               + 2 * Hp * tv * w_out.dtype.itemsize
               + 2 * tv * 4 + 2 * tn * tv * 4 + 6 * tn * 4)
    logits, lse = pl.pallas_call(
        _proj_logits_stats_kernel,
        out_shape=(jax.ShapeDtypeStruct((Np, Vp), jnp.float32),
                   jax.ShapeDtypeStruct((Np, 1), jnp.float32)),
        grid_spec=pltpu.PrefetchScalarGridSpec(
            num_scalar_prefetch=0,
            grid=(nr, nv),
            in_specs=[
                pl.BlockSpec((tn, Hp), lambda i, v: (i, 0)),
                pl.BlockSpec((Hp, tv), lambda i, v: (0, v)),
                pl.BlockSpec((1, tv), lambda i, v: (0, v)),
            ],
            out_specs=[
                pl.BlockSpec((tn, tv), lambda i, v: (i, v)),
                pl.BlockSpec((tn, 1), lambda i, v: (i, 0)),
            ],
            scratch_shapes=[pltpu.VMEM((tn, 1), jnp.float32),
                            pltpu.VMEM((tn, 1), jnp.float32)],
        ),
        compiler_params=pltpu.CompilerParams(
            dimension_semantics=("parallel", "arbitrary"),
            vmem_limit_bytes=_vmem_limit(bytes_a)),
    )(h_flat, w_out, b_out)

    bytes_b = 6 * tn * tv * 4 + 2 * tn * 4
    return pl.pallas_call(
        _logsoftmax_finalize_kernel,
        out_shape=jax.ShapeDtypeStruct((Np, Vp), jnp.float32),
        grid_spec=pltpu.PrefetchScalarGridSpec(
            num_scalar_prefetch=0,
            grid=(nr, nv),
            in_specs=[
                pl.BlockSpec((tn, tv), lambda i, v: (i, v)),
                pl.BlockSpec((tn, 1), lambda i, v: (i, 0)),
            ],
            out_specs=pl.BlockSpec((tn, tv), lambda i, v: (i, v)),
        ),
        compiler_params=pltpu.CompilerParams(
            dimension_semantics=("parallel", "parallel"),
            vmem_limit_bytes=_vmem_limit(bytes_b)),
    )(logits, lse)


def proj_logsoftmax(h_flat, w_out, b_out, *, tile_v=None, force_tiled=False):
    """h_flat: (N, Hp) bf16; w_out: (Hp, Vp) bf16; b_out: (1, Vp) f32 (-1e30 on pad)."""
    N, Hp = h_flat.shape
    Vp = w_out.shape[1]
    # pad-to-tile (no divisor search): keep tiles at the 256-row sweet spot.
    tn = 256 if N >= 256 else _round_up(N, 8)
    Np = _round_up(N, tn)
    if Np != N:
        h_flat = jnp.pad(h_flat, ((0, Np - N), (0, 0)))
    weight_bytes = Hp * Vp * w_out.dtype.itemsize
    if force_tiled or weight_bytes > _PROJ_VMEM_WEIGHT_BUDGET:
        out = _proj_logsoftmax_tiled(h_flat, w_out, b_out, tn, tile_v)
    else:
        out = _proj_logsoftmax_simple(h_flat, w_out, b_out, tn)
    return out[:N]


# ----------------------------------------------------------------------------
# Parameters (PyTorch layout) + one-time preparation:
#   fused input-gate tables, pre-transposed bf16 W_hh / out_w, lane-dense padding.
# ----------------------------------------------------------------------------
def init_params(key, vocab_in, vocab_out, hidden):
    ks = jax.random.split(key, 10)
    s = 0.1
    return dict(
        enc_embed=jax.random.normal(ks[0], (vocab_in, hidden), jnp.float32) * s,
        enc_w_ih=jax.random.normal(ks[1], (3 * hidden, hidden), jnp.float32) * s,
        enc_w_hh=jax.random.normal(ks[2], (3 * hidden, hidden), jnp.float32) * s,
        enc_b_ih=jax.random.normal(ks[3], (1, 3 * hidden), jnp.float32) * s,
        enc_b_hh=jax.random.normal(ks[4], (1, 3 * hidden), jnp.float32) * s,
        dec_embed=jax.random.normal(ks[5], (vocab_out, hidden), jnp.float32) * s,
        dec_w_ih=jax.random.normal(ks[6], (3 * hidden, hidden), jnp.float32) * s,
        dec_w_hh=jax.random.normal(ks[7], (3 * hidden, hidden), jnp.float32) * s,
        dec_b_ih=jax.random.normal(ks[8], (1, 3 * hidden), jnp.float32) * s,
        dec_b_hh=jax.random.normal(ks[9], (1, 3 * hidden), jnp.float32) * s,
        out_w=jax.random.normal(jax.random.fold_in(key, 99),
                                (vocab_out, hidden), jnp.float32) * s,
        out_b=jnp.zeros((1, vocab_out), jnp.float32),
    )


def prepare_params(params, hidden, vocab_out):
    """One-time prep: fused gate tables (gather replaces X@W_ih), bf16 weights,
    per-gate lane padding (padded hidden lanes stay exactly 0 through the GRU)."""
    H, V = hidden, vocab_out
    Hp = _round_up(H, 128)
    Vp = _round_up(V, 128)

    def fuse_gate_table(embed, w_ih, b_ih, b_hh):
        # table[token] = embed[token] @ W_ih^T + b_ih, with b_hr / b_hz folded in.
        # The n-gate bias b_hn must stay inside r*(W_hn h + b_hn) -> NOT folded.
        gi = embed @ w_ih.T + b_ih                                   # (V_tok, 3H)
        fold = jnp.concatenate(
            [b_hh[:, :2 * H], jnp.zeros((1, H), jnp.float32)], axis=1)
        gi = (gi + fold).reshape(-1, 3, H)
        gi = jnp.pad(gi, ((0, 0), (0, 0), (0, Hp - H)))
        return gi.reshape(-1, 3 * Hp).astype(jnp.bfloat16)

    def prep_whh(w):   # (3H, H) -> (Hp, 3Hp): transposed + per-gate zero padding
        wt = w.T.reshape(H, 3, H)
        wt = jnp.pad(wt, ((0, Hp - H), (0, 0), (0, Hp - H)))
        return wt.reshape(Hp, 3 * Hp).astype(jnp.bfloat16)

    def prep_bhn(b_hh):   # keep only the n-gate third, f32 (1, Hp)
        return jnp.pad(b_hh[:, 2 * H:], ((0, 0), (0, Hp - H)))

    return dict(
        enc_gates=fuse_gate_table(params["enc_embed"], params["enc_w_ih"],
                                  params["enc_b_ih"], params["enc_b_hh"]),
        dec_gates=fuse_gate_table(params["dec_embed"], params["dec_w_ih"],
                                  params["dec_b_ih"], params["dec_b_hh"]),
        enc_w_hh=prep_whh(params["enc_w_hh"]), enc_b_hn=prep_bhn(params["enc_b_hh"]),
        dec_w_hh=prep_whh(params["dec_w_hh"]), dec_b_hn=prep_bhn(params["dec_b_hh"]),
        out_w=jnp.pad(params["out_w"].T,
                      ((0, Hp - H), (0, Vp - V))).astype(jnp.bfloat16),
        out_b=jnp.pad(params["out_b"], ((0, 0), (0, Vp - V)),
                      constant_values=_NEG_INF),                     # f32
    )


# ----------------------------------------------------------------------------
# Model forward (encoder -> decoder -> projection), matching the PyTorch module.
# ----------------------------------------------------------------------------
def _gates_timemajor_padded(gate_table, ids, Bp):
    """ids: (B, T) -> padded time-major input gates (T, Bp, 3Hp) (gather, no matmul)."""
    B, T = ids.shape
    g = jnp.take(gate_table, ids, axis=0)              # (B, T, 3Hp)
    g = jnp.transpose(g, (1, 0, 2))                    # (T, B, 3Hp)
    # NOTE: padded batch rows carry zero gates -> bounded junk hidden state; they
    # are sliced off before any output is returned.
    return jnp.pad(g, ((0, 0), (0, Bp - B), (0, 0)))   # (T, Bp, 3Hp)


def encoder_forward(prep, input_ids, input_length):
    # TODO(synk): pack_padded_sequence masking from input_length not implemented.
    B, _ = input_ids.shape
    Hp = prep["enc_w_hh"].shape[0]
    Bp = _round_up(B, 8)
    gates = _gates_timemajor_padded(prep["enc_gates"], input_ids, Bp)
    h0 = jnp.zeros((Bp, Hp), jnp.float32)
    enc_out, enc_hidden = gru_recurrent(gates, h0, prep["enc_w_hh"], prep["enc_b_hn"])
    return enc_out, enc_hidden                          # (T,Bp,Hp) bf16, (Bp,Hp) f32


def decoder_forward(prep, encoder_hidden, target_ids, vocab_out):
    B, T = target_ids.shape
    Hp = prep["dec_w_hh"].shape[0]
    Bp = encoder_hidden.shape[0]
    gates = _gates_timemajor_padded(prep["dec_gates"], target_ids, Bp)
    dec_out, dec_hidden = gru_recurrent(gates, encoder_hidden,
                                        prep["dec_w_hh"], prep["dec_b_hn"])
    # Batch-major BEFORE projection: Hp-wide transpose instead of Vp-wide afterwards.
    h_flat = jnp.transpose(dec_out, (1, 0, 2)).reshape(Bp * T, Hp)
    log_probs = proj_logsoftmax(h_flat, prep["out_w"], prep["out_b"])
    log_probs = log_probs.reshape(Bp, T, -1)[:B, :, :vocab_out]     # (B, T, V)
    return log_probs, dec_hidden


def seq2seq_forward(prep, input_ids, target_ids, input_length, target_length,
                    *, vocab_out):
    # TODO(synk): target_length unused (teacher forcing over the full target seq).
    _, encoder_hidden = encoder_forward(prep, input_ids, input_length)
    decoder_outputs, _ = decoder_forward(prep, encoder_hidden, target_ids, vocab_out)
    return decoder_outputs


# ----------------------------------------------------------------------------
# References for correctness checking.
#   * seq2seq_mirror:     XLA mirror of the exact kernel numerics (bf16 weights,
#                         f32 gate math / accumulation) -> tight tolerance.
#   * seq2seq_reference:  pure-f32 PyTorch semantics -> loose (bf16) tolerance.
# ----------------------------------------------------------------------------
def _gru_scan_mirror(gates_seq, h0, w_hh, b_hn):
    hp = h0.shape[-1]

    def step(h, gi):
        gi = gi.astype(jnp.float32)
        gh = jnp.dot(h.astype(jnp.bfloat16), w_hh,
                     preferred_element_type=jnp.float32)
        r = jax.nn.sigmoid(gi[:, :hp] + gh[:, :hp])
        z = jax.nn.sigmoid(gi[:, hp:2 * hp] + gh[:, hp:2 * hp])
        n = jnp.tanh(gi[:, 2 * hp:] + r * (gh[:, 2 * hp:] + b_hn))
        h_new = (1.0 - z) * n + z * h
        return h_new, h_new.astype(jnp.bfloat16)

    h_n, ys = jax.lax.scan(step, h0, gates_seq)
    return ys, h_n


def seq2seq_mirror(prep, input_ids, target_ids, vocab_out):
    B, T = target_ids.shape
    Hp = prep["enc_w_hh"].shape[0]
    Bp = _round_up(B, 8)
    g_enc = _gates_timemajor_padded(prep["enc_gates"], input_ids, Bp)
    _, h_enc = _gru_scan_mirror(g_enc, jnp.zeros((Bp, Hp), jnp.float32),
                                prep["enc_w_hh"], prep["enc_b_hn"])
    g_dec = _gates_timemajor_padded(prep["dec_gates"], target_ids, Bp)
    ys, _ = _gru_scan_mirror(g_dec, h_enc, prep["dec_w_hh"], prep["dec_b_hn"])
    h_flat = jnp.transpose(ys, (1, 0, 2)).reshape(Bp * T, Hp)
    logits = jnp.dot(h_flat, prep["out_w"],
                     preferred_element_type=jnp.float32) + prep["out_b"]
    lp = jax.nn.log_softmax(logits, axis=-1)
    return lp.reshape(Bp, T, -1)[:B, :, :vocab_out]


def _gru_ref(x_seq, h0, w_ih, w_hh, b_ih, b_hh):
    H = h0.shape[-1]

    def step(h, x):
        gi = x @ w_ih.T + b_ih
        gh = h @ w_hh.T + b_hh
        r = jax.nn.sigmoid(gi[:, :H] + gh[:, :H])
        z = jax.nn.sigmoid(gi[:, H:2 * H] + gh[:, H:2 * H])
        n = jnp.tanh(gi[:, 2 * H:] + r * gh[:, 2 * H:])
        h_new = (1.0 - z) * n + z * h
        return h_new, h_new

    h_n, ys = jax.lax.scan(step, h0, x_seq)
    return ys, h_n


def seq2seq_reference(params, input_ids, target_ids):
    H = params["enc_embed"].shape[1]
    B = input_ids.shape[0]
    x_enc = jnp.transpose(jnp.take(params["enc_embed"], input_ids, axis=0), (1, 0, 2))
    _, enc_h = _gru_ref(x_enc, jnp.zeros((B, H), jnp.float32),
                        params["enc_w_ih"], params["enc_w_hh"],
                        params["enc_b_ih"], params["enc_b_hh"])
    x_dec = jnp.transpose(jnp.take(params["dec_embed"], target_ids, axis=0), (1, 0, 2))
    dec_out, _ = _gru_ref(x_dec, enc_h,
                          params["dec_w_ih"], params["dec_w_hh"],
                          params["dec_b_ih"], params["dec_b_hh"])
    logits = jnp.einsum("tbh,vh->tbv", dec_out, params["out_w"]) + params["out_b"]
    return jnp.transpose(jax.nn.log_softmax(logits, axis=-1), (1, 0, 2))


if __name__ == "__main__":
    B, T_IN, T_OUT = 2, 8, 8
    HIDDEN, VOCAB_IN, VOCAB_OUT = 32, 16, 384

    key = jax.random.PRNGKey(0)
    kp, ki, kt, kh = jax.random.split(key, 4)
    params = init_params(kp, VOCAB_IN, VOCAB_OUT, HIDDEN)
    prep = prepare_params(params, HIDDEN, VOCAB_OUT)

    input_ids = jax.random.randint(ki, (B, T_IN), 0, VOCAB_IN, dtype=jnp.int32)
    target_ids = jax.random.randint(kt, (B, T_OUT), 0, VOCAB_OUT, dtype=jnp.int32)
    input_length = jnp.full((B,), T_IN, jnp.int32)
    target_length = jnp.full((B,), T_OUT, jnp.int32)

    fwd = jax.jit(seq2seq_forward, static_argnames=("vocab_out",))
    out = fwd(prep, input_ids, target_ids, input_length, target_length,
              vocab_out=VOCAB_OUT)
    out = jax.block_until_ready(out)
    assert out.shape == (B, T_OUT, VOCAB_OUT), out.shape

    # 1) Tight check vs an XLA mirror of the exact kernel numerics.
    mirror = seq2seq_mirror(prep, input_ids, target_ids, VOCAB_OUT)
    err_mirror = float(jnp.max(jnp.abs(out - mirror)))
    assert err_mirror < 2e-3, f"mismatch vs bf16 mirror: max_err={err_mirror}"

    # 2) Sanity check vs the pure-f32 PyTorch-semantics reference (bf16 tolerance).
    ref = seq2seq_reference(params, input_ids, target_ids)
    err_f32 = float(jnp.max(jnp.abs(out - ref)))
    assert err_f32 < 1e-1, f"mismatch vs f32 reference: max_err={err_f32}"

    # 3) Exercise the Vp-tiled online-softmax projection path (3 vocab tiles) and
    #    check it against the single-pass path.
    Hp = prep["out_w"].shape[0]
    h_test = (jax.random.normal(kh, (64, Hp), jnp.float32) * 0.1).astype(jnp.bfloat16)
    p_simple = proj_logsoftmax(h_test, prep["out_w"], prep["out_b"])
    p_tiled = proj_logsoftmax(h_test, prep["out_w"], prep["out_b"],
                              force_tiled=True, tile_v=128)
    err_proj = float(jnp.max(jnp.abs(p_simple[:, :VOCAB_OUT]
                                     - p_tiled[:, :VOCAB_OUT])))
    assert err_proj < 1e-4, f"tiled projection mismatch: max_err={err_proj}"

    print("KERNEL_OK")
</pallas_src>

<mosaic_0001>
module attributes {stable_mosaic.version = 11 : i64} {
  func.func @_gru_recurrent_kernel(%arg0: i32, %arg1: memref<8x8x384xbf16, #tpu.memory_space<vmem>>, %arg2: memref<8x128xf32, #tpu.memory_space<vmem>>, %arg3: memref<128x384xbf16, #tpu.memory_space<vmem>>, %arg4: memref<1x128xf32, #tpu.memory_space<vmem>>, %arg5: memref<8x8x128xbf16, #tpu.memory_space<vmem>>, %arg6: memref<8x128xf32, #tpu.memory_space<vmem>>, %arg7: memref<8x128xf32, #tpu.memory_space<vmem>>) attributes {dimension_semantics = [#tpu.dimension_semantics<arbitrary>], iteration_bounds = array<i64: 1>, scalar_prefetch = 0 : i64, scratch_operands = 1 : i64, tpu.core_type = #tpu.core_type<tc>, window_params = [{transform_indices = @transform_0, window_bounds = array<i64: 8, 8, 384>}, {pipeline_mode = #tpu.pipeline_mode<synchronous>, transform_indices = @transform_1, window_bounds = array<i64: 8, 128>}, {pipeline_mode = #tpu.pipeline_mode<synchronous>, transform_indices = @transform_2, window_bounds = array<i64: 128, 384>}, {pipeline_mode = #tpu.pipeline_mode<synchronous>, transform_indices = @transform_3, window_bounds = array<i64: 1, 128>}, {transform_indices = @transform_4, window_bounds = array<i64: 8, 8, 128>}, {pipeline_mode = #tpu.pipeline_mode<synchronous>, transform_indices = @transform_5, window_bounds = array<i64: 8, 128>}]} {
    %c0_i32 = arith.constant 0 : i32
    %0 = arith.cmpi eq, %arg0, %c0_i32 : i32
    %1 = arith.extui %0 : i1 to i32
    %c0_i32_0 = arith.constant 0 : i32
    %2 = arith.cmpi ne, %1, %c0_i32_0 : i32
    scf.if %2 {
      %c0_74 = arith.constant 0 : index
      %c0_75 = arith.constant 0 : index
      %322 = vector.load %arg2[%c0_74, %c0_75] : memref<8x128xf32, #tpu.memory_space<vmem>>, vector<8x128xf32>
      %c0_76 = arith.constant 0 : index
      %c0_77 = arith.constant 0 : index
      %323 = vector.load %arg7[%c0_76, %c0_77] : memref<8x128xf32, #tpu.memory_space<vmem>>, vector<8x128xf32>
      tpu.vector_store %arg7[%c0_76, %c0_77], %322 {strides = array<i32>} : memref<8x128xf32, #tpu.memory_space<vmem>>, vector<8x128xf32>,
    } else {
    }
    %c0 = arith.constant 0 : index
    %c0_1 = arith.constant 0 : index
    %3 = vector.load %arg3[%c0, %c0_1] : memref<128x384xbf16, #tpu.memory_space<vmem>>, vector<128x384xbf16>
    %c0_2 = arith.constant 0 : index
    %c0_3 = arith.constant 0 : index
    %4 = vector.load %arg4[%c0_2, %c0_3] : memref<1x128xf32, #tpu.memory_space<vmem>>, vector<1x128xf32>
    %c0_4 = arith.constant 0 : index
    %c0_5 = arith.constant 0 : index
    %5 = vector.load %arg7[%c0_4, %c0_5] : memref<8x128xf32, #tpu.memory_space<vmem>>, vector<8x128xf32>
    %c0_i32_6 = arith.constant 0 : i32
    %6 = arith.index_cast %c0_i32_6 : i32 to index
    %c0_7 = arith.constant 0 : index
    %c0_8 = arith.constant 0 : index
    %7 = vector.load %arg1[%6, %c0_7, %c0_8] : memref<8x8x384xbf16, #tpu.memory_space<vmem>>, vector<1x8x384xbf16>
    %8 = vector.shape_cast %7 : vector<1x8x384xbf16> to vector<8x384xbf16>
    %9 = arith.extf %8 : vector<8x384xbf16> to vector<8x384xf32>
    %10 = arith.truncf %5 : vector<8x128xf32> to vector<8x128xbf16>
    %cst = arith.constant dense<0.000000e+00> : vector<8x384xf32>
    %11 = tpu.matmul %10, %3, %cst {dimension_numbers = #tpu.dot_dimension_numbers<[1], [0], [0], [1], [0, 0, 1, 1], [], []>} : vector<8x128xbf16>, vector<128x384xbf16>, vector<8x384xf32> -> vector<8x384xf32>
    %12 = vector.extract_strided_slice %9 {offsets = [0, 0], sizes = [8, 128], strides = [1, 1]} : vector<8x384xf32> to vector<8x128xf32>
    %13 = vector.extract_strided_slice %11 {offsets = [0, 0], sizes = [8, 128], strides = [1, 1]} : vector<8x384xf32> to vector<8x128xf32>
    %14 = arith.addf %12, %13 : vector<8x128xf32>
    %15 = arith.negf %14 : vector<8x128xf32>
    %16 = math.exp %15 : vector<8x128xf32>
    %cst_9 = arith.constant 1.000000e+00 : f32
    %17 = vector.broadcast %cst_9 : f32 to vector<8x128xf32>
    %18 = arith.addf %17, %16 : vector<8x128xf32>
    %19 = arith.divf %17, %18 : vector<8x128xf32>
    %20 = vector.extract_strided_slice %9 {offsets = [0, 128], sizes = [8, 128], strides = [1, 1]} : vector<8x384xf32> to vector<8x128xf32>
    %21 = vector.extract_strided_slice %11 {offsets = [0, 128], sizes = [8, 128], strides = [1, 1]} : vector<8x384xf32> to vector<8x128xf32>
    %22 = arith.addf %20, %21 : vector<8x128xf32>
    %23 = arith.negf %22 : vector<8x128xf32>
    %24 = math.exp %23 : vector<8x128xf32>
    %cst_10 = arith.constant 1.000000e+00 : f32
    %25 = vector.broadcast %cst_10 : f32 to vector<8x128xf32>
    %26 = arith.addf %25, %24 : vector<8x128xf32>
    %27 = arith.divf %25, %26 : vector<8x128xf32>
    %28 = vector.extract_strided_slice %9 {offsets = [0, 256], sizes = [8, 128], strides = [1, 1]} : vector<8x384xf32> to vector<8x128xf32>
    %29 = vector.extract_strided_slice %11 {offsets = [0, 256], sizes = [8, 128], strides = [1, 1]} : vector<8x384xf32> to vector<8x128xf32>
    %30 = vector.broadcast %4 : vector<1x128xf32> to vector<8x128xf32>
    %31 = arith.addf %29, %30 : vector<8x128xf32>
    %32 = arith.mulf %19, %31 : vector<8x128xf32>
    %33 = arith.addf %28, %32 : vector<8x128xf32>
    %34 = math.tanh %33 : vector<8x128xf32>
    %cst_11 = arith.constant 1.000000e+00 : f32
    %35 = vector.broadcast %cst_11 : f32 to vector<8x128xf32>
    %36 = arith.subf %35, %27 : vector<8x128xf32>
    %37 = arith.mulf %36, %34 : vector<8x128xf32>
    %38 = arith.mulf %27, %5 : vector<8x128xf32>
    %39 = arith.addf %37, %38 : vector<8x128xf32>
    %40 = arith.truncf %39 : vector<8x128xf32> to vector<8x128xbf16>
    %41 = arith.index_cast %c0_i32_6 : i32 to index
    %c0_12 = arith.constant 0 : index
    %c0_13 = arith.constant 0 : index
    %42 = vector.load %arg5[%41, %c0_12, %c0_13] : memref<8x8x128xbf16, #tpu.memory_space<vmem>>, vector<1x8x128xbf16>
    %43 = vector.shape_cast %42 : vector<1x8x128xbf16> to vector<8x128xbf16>
    %44 = vector.shape_cast %40 : vector<8x128xbf16> to vector<1x8x128xbf16>
    tpu.vector_store %arg5[%41, %c0_12, %c0_13], %44 {strides = array<i32>} : memref<8x8x128xbf16, #tpu.memory_space<vmem>>, vector<1x8x128xbf16>,
    %c1_i32 = arith.constant 1 : i32
    %45 = arith.index_cast %c1_i32 : i32 to index
    %c0_14 = arith.constant 0 : index
    %c0_15 = arith.constant 0 : index
    %46 = vector.load %arg1[%45, %c0_14, %c0_15] : memref<8x8x384xbf16, #tpu.memory_space<vmem>>, vector<1x8x384xbf16>
    %47 = vector.shape_cast %46 : vector<1x8x384xbf16> to vector<8x384xbf16>
    %48 = arith.extf %47 : vector<8x384xbf16> to vector<8x384xf32>
    %49 = arith.truncf %39 : vector<8x128xf32> to vector<8x128xbf16>
    %cst_16 = arith.constant dense<0.000000e+00> : vector<8x384xf32>
    %50 = tpu.matmul %49, %3, %cst_16 {dimension_numbers = #tpu.dot_dimension_numbers<[1], [0], [0], [1], [0, 0, 1, 1], [], []>} : vector<8x128xbf16>, vector<128x384xbf16>, vector<8x384xf32> -> vector<8x384xf32>
    %51 = vector.extract_strided_slice %48 {offsets = [0, 0], sizes = [8, 128], strides = [1, 1]} : vector<8x384xf32> to vector<8x128xf32>
    %52 = vector.extract_strided_slice %50 {offsets = [0, 0], sizes = [8, 128], strides = [1, 1]} : vector<8x384xf32> to vector<8x128xf32>
    %53 = arith.addf %51, %52 : vector<8x128xf32>
    %54 = arith.negf %53 : vector<8x128xf32>
    %55 = math.exp %54 : vector<8x128xf32>
    %cst_17 = arith.constant 1.000000e+00 : f32
    %56 = vector.broadcast %cst_17 : f32 to vector<8x128xf32>
    %57 = arith.addf %56, %55 : vector<8x128xf32>
    %58 = arith.divf %56, %57 : vector<8x128xf32>
    %59 = vector.extract_strided_slice %48 {offsets = [0, 128], sizes = [8, 128], strides = [1, 1]} : vector<8x384xf32> to vector<8x128xf32>
    %60 = vector.extract_strided_slice %50 {offsets = [0, 128], sizes = [8, 128], strides = [1, 1]} : vector<8x384xf32> to vector<8x128xf32>
    %61 = arith.addf %59, %60 : vector<8x128xf32>
    %62 = arith.negf %61 : vector<8x128xf32>
    %63 = math.exp %62 : vector<8x128xf32>
    %cst_18 = arith.constant 1.000000e+00 : f32
    %64 = vector.broadcast %cst_18 : f32 to vector<8x128xf32>
    %65 = arith.addf %64, %63 : vector<8x128xf32>
    %66 = arith.divf %64, %65 : vector<8x128xf32>
    %67 = vector.extract_strided_slice %48 {offsets = [0, 256], sizes = [8, 128], strides = [1, 1]} : vector<8x384xf32> to vector<8x128xf32>
    %68 = vector.extract_strided_slice %50 {offsets = [0, 256], sizes = [8, 128], strides = [1, 1]} : vector<8x384xf32> to vector<8x128xf32>
    %69 = vector.broadcast %4 : vector<1x128xf32> to vector<8x128xf32>
    %70 = arith.addf %68, %69 : vector<8x128xf32>
    %71 = arith.mulf %58, %70 : vector<8x128xf32>
    %72 = arith.addf %67, %71 : vector<8x128xf32>
    %73 = math.tanh %72 : vector<8x128xf32>
    %cst_19 = arith.constant 1.000000e+00 : f32
    %74 = vector.broadcast %cst_19 : f32 to vector<8x128xf32>
    %75 = arith.subf %74, %66 : vector<8x128xf32>
    %76 = arith.mulf %75, %73 : vector<8x128xf32>
    %77 = arith.mulf %66, %39 : vector<8x128xf32>
    %78 = arith.addf %76, %77 : vector<8x128xf32>
    %79 = arith.truncf %78 : vector<8x128xf32> to vector<8x128xbf16>
    %80 = arith.index_cast %c1_i32 : i32 to index
    %c0_20 = arith.constant 0 : index
    %c0_21 = arith.constant 0 : index
    %81 = vector.load %arg5[%80, %c0_20, %c0_21] : memref<8x8x128xbf16, #tpu.memory_space<vmem>>, vector<1x8x128xbf16>
    %82 = vector.shape_cast %81 : vector<1x8x128xbf16> to vector<8x128xbf16>
    %83 = vector.shape_cast %79 : vector<8x128xbf16> to vector<1x8x128xbf16>
    tpu.vector_store %arg5[%80, %c0_20, %c0_21], %83 {strides = array<i32>} : memref<8x8x128xbf16, #tpu.memory_space<vmem>>, vector<1x8x128xbf16>,
    %c2_i32 = arith.constant 2 : i32
    %84 = arith.index_cast %c2_i32 : i32 to index
    %c0_22 = arith.constant 0 : index
    %c0_23 = arith.constant 0 : index
    %85 = vector.load %arg1[%84, %c0_22, %c0_23] : memref<8x8x384xbf16, #tpu.memory_space<vmem>>, vector<1x8x384xbf16>
    %86 = vector.shape_cast %85 : vector<1x8x384xbf16> to vector<8x384xbf16>
    %87 = arith.extf %86 : vector<8x384xbf16> to vector<8x384xf32>
    %88 = arith.truncf %78 : vector<8x128xf32> to vector<8x128xbf16>
    %cst_24 = arith.constant dense<0.000000e+00> : vector<8x384xf32>
    %89 = tpu.matmul %88, %3, %cst_24 {dimension_numbers = #tpu.dot_dimension_numbers<[1], [0], [0], [1], [0, 0, 1, 1], [], []>} : vector<8x128xbf16>, vector<128x384xbf16>, vector<8x384xf32> -> vector<8x384xf32>
    %90 = vector.extract_strided_slice %87 {offsets = [0, 0], sizes = [8, 128], strides = [1, 1]} : vector<8x384xf32> to vector<8x128xf32>
    %91 = vector.extract_strided_slice %89 {offsets = [0, 0], sizes = [8, 128], strides = [1, 1]} : vector<8x384xf32> to vector<8x128xf32>
    %92 = arith.addf %90, %91 : vector<8x128xf32>
    %93 = arith.negf %92 : vector<8x128xf32>
    %94 = math.exp %93 : vector<8x128xf32>
    %cst_25 = arith.constant 1.000000e+00 : f32
    %95 = vector.broadcast %cst_25 : f32 to vector<8x128xf32>
    %96 = arith.addf %95, %94 : vector<8x128xf32>
    %97 = arith.divf %95, %96 : vector<8x128xf32>
    %98 = vector.extract_strided_slice %87 {offsets = [0, 128], sizes = [8, 128], strides = [1, 1]} : vector<8x384xf32> to vector<8x128xf32>
    %99 = vector.extract_strided_slice %89 {offsets = [0, 128], sizes = [8, 128], strides = [1, 1]} : vector<8x384xf32> to vector<8x128xf32>
    %100 = arith.addf %98, %99 : vector<8x128xf32>
    %101 = arith.negf %100 : vector<8x128xf32>
    %102 = math.exp %101 : vector<8x128xf32>
    %cst_26 = arith.constant 1.000000e+00 : f32
    %103 = vector.broadcast %cst_26 : f32 to vector<8x128xf32>
    %104 = arith.addf %103, %102 : vector<8x128xf32>
    %105 = arith.divf %103, %104 : vector<8x128xf32>
    %106 = vector.extract_strided_slice %87 {offsets = [0, 256], sizes = [8, 128], strides = [1, 1]} : vector<8x384xf32> to vector<8x128xf32>
    %107 = vector.extract_strided_slice %89 {offsets = [0, 256], sizes = [8, 128], strides = [1, 1]} : vector<8x384xf32> to vector<8x128xf32>
    %108 = vector.broadcast %4 : vector<1x128xf32> to vector<8x128xf32>
    %109 = arith.addf %107, %108 : vector<8x128xf32>
    %110 = arith.mulf %97, %109 : vector<8x128xf32>
    %111 = arith.addf %106, %110 : vector<8x128xf32>
    %112 = math.tanh %111 : vector<8x128xf32>
    %cst_27 = arith.constant 1.000000e+00 : f32
    %113 = vector.broadcast %cst_27 : f32 to vector<8x128xf32>
    %114 = arith.subf %113, %105 : vector<8x128xf32>
    %115 = arith.mulf %114, %112 : vector<8x128xf32>
    %116 = arith.mulf %105, %78 : vector<8x128xf32>
    %117 = arith.addf %115, %116 : vector<8x128xf32>
    %118 = arith.truncf %117 : vector<8x128xf32> to vector<8x128xbf16>
    %119 = arith.index_cast %c2_i32 : i32 to index
    %c0_28 = arith.constant 0 : index
    %c0_29 = arith.constant 0 : index
    %120 = vector.load %arg5[%119, %c0_28, %c0_29] : memref<8x8x128xbf16, #tpu.memory_space<vmem>>, vector<1x8x128xbf16>
    %121 = vector.shape_cast %120 : vector<1x8x128xbf16> to vector<8x128xbf16>
    %122 = vector.shape_cast %118 : vector<8x128xbf16> to vector<1x8x128xbf16>
    tpu.vector_store %arg5[%119, %c0_28, %c0_29], %122 {strides = array<i32>} : memref<8x8x128xbf16, #tpu.memory_space<vmem>>, vector<1x8x128xbf16>,
    %c3_i32 = arith.constant 3 : i32
    %123 = arith.index_cast %c3_i32 : i32 to index
    %c0_30 = arith.constant 0 : index
    %c0_31 = arith.constant 0 : index
    %124 = vector.load %arg1[%123, %c0_30, %c0_31] : memref<8x8x384xbf16, #tpu.memory_space<vmem>>, vector<1x8x384xbf16>
    %125 = vector.shape_cast %124 : vector<1x8x384xbf16> to vector<8x384xbf16>
    %126 = arith.extf %125 : vector<8x384xbf16> to vector<8x384xf32>
    %127 = arith.truncf %117 : vector<8x128xf32> to vector<8x128xbf16>
    %cst_32 = arith.constant dense<0.000000e+00> : vector<8x384xf32>
    %128 = tpu.matmul %127, %3, %cst_32 {dimension_numbers = #tpu.dot_dimension_numbers<[1], [0], [0], [1], [0, 0, 1, 1], [], []>} : vector<8x128xbf16>, vector<128x384xbf16>, vector<8x384xf32> -> vector<8x384xf32>
    %129 = vector.extract_strided_slice %126 {offsets = [0, 0], sizes = [8, 128], strides = [1, 1]} : vector<8x384xf32> to vector<8x128xf32>
    %130 = vector.extract_strided_slice %128 {offsets = [0, 0], sizes = [8, 128], strides = [1, 1]} : vector<8x384xf32> to vector<8x128xf32>
    %131 = arith.addf %129, %130 : vector<8x128xf32>
    %132 = arith.negf %131 : vector<8x128xf32>
    %133 = math.exp %132 : vector<8x128xf32>
    %cst_33 = arith.constant 1.000000e+00 : f32
    %134 = vector.broadcast %cst_33 : f32 to vector<8x128xf32>
    %135 = arith.addf %134, %133 : vector<8x128xf32>
    %136 = arith.divf %134, %135 : vector<8x128xf32>
    %137 = vector.extract_strided_slice %126 {offsets = [0, 128], sizes = [8, 128], strides = [1, 1]} : vector<8x384xf32> to vector<8x128xf32>
    %138 = vector.extract_strided_slice %128 {offsets = [0, 128], sizes = [8, 128], strides = [1, 1]} : vector<8x384xf32> to vector<8x128xf32>
    %139 = arith.addf %137, %138 : vector<8x128xf32>
    %140 = arith.negf %139 : vector<8x128xf32>
    %141 = math.exp %140 : vector<8x128xf32>
    %cst_34 = arith.constant 1.000000e+00 : f32
    %142 = vector.broadcast %cst_34 : f32 to vector<8x128xf32>
    %143 = arith.addf %142, %141 : vector<8x128xf32>
    %144 = arith.divf %142, %143 : vector<8x128xf32>
    %145 = vector.extract_strided_slice %126 {offsets = [0, 256], sizes = [8, 128], strides = [1, 1]} : vector<8x384xf32> to vector<8x128xf32>
    %146 = vector.extract_strided_slice %128 {offsets = [0, 256], sizes = [8, 128], strides = [1, 1]} : vector<8x384xf32> to vector<8x128xf32>
    %147 = vector.broadcast %4 : vector<1x128xf32> to vector<8x128xf32>
    %148 = arith.addf %146, %147 : vector<8x128xf32>
    %149 = arith.mulf %136, %148 : vector<8x128xf32>
    %150 = arith.addf %145, %149 : vector<8x128xf32>
    %151 = math.tanh %150 : vector<8x128xf32>
    %cst_35 = arith.constant 1.000000e+00 : f32
    %152 = vector.broadcast %cst_35 : f32 to vector<8x128xf32>
    %153 = arith.subf %152, %144 : vector<8x128xf32>
    %154 = arith.mulf %153, %151 : vector<8x128xf32>
    %155 = arith.mulf %144, %117 : vector<8x128xf32>
    %156 = arith.addf %154, %155 : vector<8x128xf32>
    %157 = arith.truncf %156 : vector<8x128xf32> to vector<8x128xbf16>
    %158 = arith.index_cast %c3_i32 : i32 to index
    %c0_36 = arith.constant 0 : index
    %c0_37 = arith.constant 0 : index
    %159 = vector.load %arg5[%158, %c0_36, %c0_37] : memref<8x8x128xbf16, #tpu.memory_space<vmem>>, vector<1x8x128xbf16>
    %160 = vector.shape_cast %159 : vector<1x8x128xbf16> to vector<8x128xbf16>
    %161 = vector.shape_cast %157 : vector<8x128xbf16> to vector<1x8x128xbf16>
    tpu.vector_store %arg5[%158, %c0_36, %c0_37], %161 {strides = array<i32>} : memref<8x8x128xbf16, #tpu.memory_space<vmem>>, vector<1x8x128xbf16>,
    %c4_i32 = arith.constant 4 : i32
    %162 = arith.index_cast %c4_i32 : i32 to index
    %c0_38 = arith.constant 0 : index
    %c0_39 = arith.constant 0 : index
    %163 = vector.load %arg1[%162, %c0_38, %c0_39] : memref<8x8x384xbf16, #tpu.memory_space<vmem>>, vector<1x8x384xbf16>
    %164 = vector.shape_cast %163 : vector<1x8x384xbf16> to vector<8x384xbf16>
    %165 = arith.extf %164 : vector<8x384xbf16> to vector<8x384xf32>
    %166 = arith.truncf %156 : vector<8x128xf32> to vector<8x128xbf16>
    %cst_40 = arith.constant dense<0.000000e+00> : vector<8x384xf32>
    %167 = tpu.matmul %166, %3, %cst_40 {dimension_numbers = #tpu.dot_dimension_numbers<[1], [0], [0], [1], [0, 0, 1, 1], [], []>} : vector<8x128xbf16>, vector<128x384xbf16>, vector<8x384xf32> -> vector<8x384xf32>
    %168 = vector.extract_strided_slice %165 {offsets = [0, 0], sizes = [8, 128], strides = [1, 1]} : vector<8x384xf32> to vector<8x128xf32>
    %169 = vector.extract_strided_slice %167 {offsets = [0, 0], sizes = [8, 128], strides = [1, 1]} : vector<8x384xf32> to vector<8x128xf32>
    %170 = arith.addf %168, %169 : vector<8x128xf32>
    %171 = arith.negf %170 : vector<8x128xf32>
    %172 = math.exp %171 : vector<8x128xf32>
    %cst_41 = arith.constant 1.000000e+00 : f32
    %173 = vector.broadcast %cst_41 : f32 to vector<8x128xf32>
    %174 = arith.addf %173, %172 : vector<8x128xf32>
    %175 = arith.divf %173, %174 : vector<8x128xf32>
    %176 = vector.extract_strided_slice %165 {offsets = [0, 128], sizes = [8, 128], strides = [1, 1]} : vector<8x384xf32> to vector<8x128xf32>
    %177 = vector.extract_strided_slice %167 {offsets = [0, 128], sizes = [8, 128], strides = [1, 1]} : vector<8x384xf32> to vector<8x128xf32>
    %178 = arith.addf %176, %177 : vector<8x128xf32>
    %179 = arith.negf %178 : vector<8x128xf32>
    %180 = math.exp %179 : vector<8x128xf32>
    %cst_42 = arith.constant 1.000000e+00 : f32
    %181 = vector.broadcast %cst_42 : f32 to vector<8x128xf32>
    %182 = arith.addf %181, %180 : vector<8x128xf32>
    %183 = arith.divf %181, %182 : vector<8x128xf32>
    %184 = vector.extract_strided_slice %165 {offsets = [0, 256], sizes = [8, 128], strides = [1, 1]} : vector<8x384xf32> to vector<8x128xf32>
    %185 = vector.extract_strided_slice %167 {offsets = [0, 256], sizes = [8, 128], strides = [1, 1]} : vector<8x384xf32> to vector<8x128xf32>
    %186 = vector.broadcast %4 : vector<1x128xf32> to vector<8x128xf32>
    %187 = arith.addf %185, %186 : vector<8x128xf32>
    %188 = arith.mulf %175, %187 : vector<8x128xf32>
    %189 = arith.addf %184, %188 : vector<8x128xf32>
    %190 = math.tanh %189 : vector<8x128xf32>
    %cst_43 = arith.constant 1.000000e+00 : f32
    %191 = vector.broadcast %cst_43 : f32 to vector<8x128xf32>
    %192 = arith.subf %191, %183 : vector<8x128xf32>
    %193 = arith.mulf %192, %190 : vector<8x128xf32>
    %194 = arith.mulf %183, %156 : vector<8x128xf32>
    %195 = arith.addf %193, %194 : vector<8x128xf32>
    %196 = arith.truncf %195 : vector<8x128xf32> to vector<8x128xbf16>
    %197 = arith.index_cast %c4_i32 : i32 to index
    %c0_44 = arith.constant 0 : index
    %c0_45 = arith.constant 0 : index
    %198 = vector.load %arg5[%197, %c0_44, %c0_45] : memref<8x8x128xbf16, #tpu.memory_space<vmem>>, vector<1x8x128xbf16>
    %199 = vector.shape_cast %198 : vector<1x8x128xbf16> to vector<8x128xbf16>
    %200 = vector.shape_cast %196 : vector<8x128xbf16> to vector<1x8x128xbf16>
    tpu.vector_store %arg5[%197, %c0_44, %c0_45], %200 {strides = array<i32>} : memref<8x8x128xbf16, #tpu.memory_space<vmem>>, vector<1x8x128xbf16>,
    %c5_i32 = arith.constant 5 : i32
    %201 = arith.index_cast %c5_i32 : i32 to index
    %c0_46 = arith.constant 0 : index
    %c0_47 = arith.constant 0 : index
    %202 = vector.load %arg1[%201, %c0_46, %c0_47] : memref<8x8x384xbf16, #tpu.memory_space<vmem>>, vector<1x8x384xbf16>
    %203 = vector.shape_cast %202 : vector<1x8x384xbf16> to vector<8x384xbf16>
    %204 = arith.extf %203 : vector<8x384xbf16> to vector<8x384xf32>
    %205 = arith.truncf %195 : vector<8x128xf32> to vector<8x128xbf16>
    %cst_48 = arith.constant dense<0.000000e+00> : vector<8x384xf32>
    %206 = tpu.matmul %205, %3, %cst_48 {dimension_numbers = #tpu.dot_dimension_numbers<[1], [0], [0], [1], [0, 0, 1, 1], [], []>} : vector<8x128xbf16>, vector<128x384xbf16>, vector<8x384xf32> -> vector<8x384xf32>
    %207 = vector.extract_strided_slice %204 {offsets = [0, 0], sizes = [8, 128], strides = [1, 1]} : vector<8x384xf32> to vector<8x128xf32>
    %208 = vector.extract_strided_slice %206 {offsets = [0, 0], sizes = [8, 128], strides = [1, 1]} : vector<8x384xf32> to vector<8x128xf32>
    %209 = arith.addf %207, %208 : vector<8x128xf32>
    %210 = arith.negf %209 : vector<8x128xf32>
    %211 = math.exp %210 : vector<8x128xf32>
    %cst_49 = arith.constant 1.000000e+00 : f32
    %212 = vector.broadcast %cst_49 : f32 to vector<8x128xf32>
    %213 = arith.addf %212, %211 : vector<8x128xf32>
    %214 = arith.divf %212, %213 : vector<8x128xf32>
    %215 = vector.extract_strided_slice %204 {offsets = [0, 128], sizes = [8, 128], strides = [1, 1]} : vector<8x384xf32> to vector<8x128xf32>
    %216 = vector.extract_strided_slice %206 {offsets = [0, 128], sizes = [8, 128], strides = [1, 1]} : vector<8x384xf32> to vector<8x128xf32>
    %217 = arith.addf %215, %216 : vector<8x128xf32>
    %218 = arith.negf %217 : vector<8x128xf32>
    %219 = math.exp %218 : vector<8x128xf32>
    %cst_50 = arith.constant 1.000000e+00 : f32
    %220 = vector.broadcast %cst_50 : f32 to vector<8x128xf32>
    %221 = arith.addf %220, %219 : vector<8x128xf32>
    %222 = arith.divf %220, %221 : vector<8x128xf32>
    %223 = vector.extract_strided_slice %204 {offsets = [0, 256], sizes = [8, 128], strides = [1, 1]} : vector<8x384xf32> to vector<8x128xf32>
    %224 = vector.extract_strided_slice %206 {offsets = [0, 256], sizes = [8, 128], strides = [1, 1]} : vector<8x384xf32> to vector<8x128xf32>
    %225 = vector.broadcast %4 : vector<1x128xf32> to vector<8x128xf32>
    %226 = arith.addf %224, %225 : vector<8x128xf32>
    %227 = arith.mulf %214, %226 : vector<8x128xf32>
    %228 = arith.addf %223, %227 : vector<8x128xf32>
    %229 = math.tanh %228 : vector<8x128xf32>
    %cst_51 = arith.constant 1.000000e+00 : f32
    %230 = vector.broadcast %cst_51 : f32 to vector<8x128xf32>
    %231 = arith.subf %230, %222 : vector<8x128xf32>
    %232 = arith.mulf %231, %229 : vector<8x128xf32>
    %233 = arith.mulf %222, %195 : vector<8x128xf32>
    %234 = arith.addf %232, %233 : vector<8x128xf32>
    %235 = arith.truncf %234 : vector<8x128xf32> to vector<8x128xbf16>
    %236 = arith.index_cast %c5_i32 : i32 to index
    %c0_52 = arith.constant 0 : index
    %c0_53 = arith.constant 0 : index
    %237 = vector.load %arg5[%236, %c0_52, %c0_53] : memref<8x8x128xbf16, #tpu.memory_space<vmem>>, vector<1x8x128xbf16>
    %238 = vector.shape_cast %237 : vector<1x8x128xbf16> to vector<8x128xbf16>
    %239 = vector.shape_cast %235 : vector<8x128xbf16> to vector<1x8x128xbf16>
    tpu.vector_store %arg5[%236, %c0_52, %c0_53], %239 {strides = array<i32>} : memref<8x8x128xbf16, #tpu.memory_space<vmem>>, vector<1x8x128xbf16>,
    %c6_i32 = arith.constant 6 : i32
    %240 = arith.index_cast %c6_i32 : i32 to index
    %c0_54 = arith.constant 0 : index
    %c0_55 = arith.constant 0 : index
    %241 = vector.load %arg1[%240, %c0_54, %c0_55] : memref<8x8x384xbf16, #tpu.memory_space<vmem>>, vector<1x8x384xbf16>
    %242 = vector.shape_cast %241 : vector<1x8x384xbf16> to vector<8x384xbf16>
    %243 = arith.extf %242 : vector<8x384xbf16> to vector<8x384xf32>
    %244 = arith.truncf %234 : vector<8x128xf32> to vector<8x128xbf16>
    %cst_56 = arith.constant dense<0.000000e+00> : vector<8x384xf32>
    %245 = tpu.matmul %244, %3, %cst_56 {dimension_numbers = #tpu.dot_dimension_numbers<[1], [0], [0], [1], [0, 0, 1, 1], [], []>} : vector<8x128xbf16>, vector<128x384xbf16>, vector<8x384xf32> -> vector<8x384xf32>
    %246 = vector.extract_strided_slice %243 {offsets = [0, 0], sizes = [8, 128], strides = [1, 1]} : vector<8x384xf32> to vector<8x128xf32>
    %247 = vector.extract_strided_slice %245 {offsets = [0, 0], sizes = [8, 128], strides = [1, 1]} : vector<8x384xf32> to vector<8x128xf32>
    %248 = arith.addf %246, %247 : vector<8x128xf32>
    %249 = arith.negf %248 : vector<8x128xf32>
    %250 = math.exp %249 : vector<8x128xf32>
    %cst_57 = arith.constant 1.000000e+00 : f32
    %251 = vector.broadcast %cst_57 : f32 to vector<8x128xf32>
    %252 = arith.addf %251, %250 : vector<8x128xf32>
    %253 = arith.divf %251, %252 : vector<8x128xf32>
    %254 = vector.extract_strided_slice %243 {offsets = [0, 128], sizes = [8, 128], strides = [1, 1]} : vector<8x384xf32> to vector<8x128xf32>
    %255 = vector.extract_strided_slice %245 {offsets = [0, 128], sizes = [8, 128], strides = [1, 1]} : vector<8x384xf32> to vector<8x128xf32>
    %256 = arith.addf %254, %255 : vector<8x128xf32>
    %257 = arith.negf %256 : vector<8x128xf32>
    %258 = math.exp %257 : vector<8x128xf32>
    %cst_58 = arith.constant 1.000000e+00 : f32
    %259 = vector.broadcast %cst_58 : f32 to vector<8x128xf32>
    %260 = arith.addf %259, %258 : vector<8x128xf32>
    %261 = arith.divf %259, %260 : vector<8x128xf32>
    %262 = vector.extract_strided_slice %243 {offsets = [0, 256], sizes = [8, 128], strides = [1, 1]} : vector<8x384xf32> to vector<8x128xf32>
    %263 = vector.extract_strided_slice %245 {offsets = [0, 256], sizes = [8, 128], strides = [1, 1]} : vector<8x384xf32> to vector<8x128xf32>
    %264 = vector.broadcast %4 : vector<1x128xf32> to vector<8x128xf32>
    %265 = arith.addf %263, %264 : vector<8x128xf32>
    %266 = arith.mulf %253, %265 : vector<8x128xf32>
    %267 = arith.addf %262, %266 : vector<8x128xf32>
    %268 = math.tanh %267 : vector<8x128xf32>
    %cst_59 = arith.constant 1.000000e+00 : f32
    %269 = vector.broadcast %cst_59 : f32 to vector<8x128xf32>
    %270 = arith.subf %269, %261 : vector<8x128xf32>
    %271 = arith.mulf %270, %268 : vector<8x128xf32>
    %272 = arith.mulf %261, %234 : vector<8x128xf32>
    %273 = arith.addf %271, %272 : vector<8x128xf32>
    %274 = arith.truncf %273 : vector<8x128xf32> to vector<8x128xbf16>
    %275 = arith.index_cast %c6_i32 : i32 to index
    %c0_60 = arith.constant 0 : index
    %c0_61 = arith.constant 0 : index
    %276 = vector.load %arg5[%275, %c0_60, %c0_61] : memref<8x8x128xbf16, #tpu.memory_space<vmem>>, vector<1x8x128xbf16>
    %277 = vector.shape_cast %276 : vector<1x8x128xbf16> to vector<8x128xbf16>
    %278 = vector.shape_cast %274 : vector<8x128xbf16> to vector<1x8x128xbf16>
    tpu.vector_store %arg5[%275, %c0_60, %c0_61], %278 {strides = array<i32>} : memref<8x8x128xbf16, #tpu.memory_space<vmem>>, vector<1x8x128xbf16>,
    %c7_i32 = arith.constant 7 : i32
    %279 = arith.index_cast %c7_i32 : i32 to index
    %c0_62 = arith.constant 0 : index
    %c0_63 = arith.constant 0 : index
    %280 = vector.load %arg1[%279, %c0_62, %c0_63] : memref<8x8x384xbf16, #tpu.memory_space<vmem>>, vector<1x8x384xbf16>
    %281 = vector.shape_cast %280 : vector<1x8x384xbf16> to vector<8x384xbf16>
    %282 = arith.extf %281 : vector<8x384xbf16> to vector<8x384xf32>
    %283 = arith.truncf %273 : vector<8x128xf32> to vector<8x128xbf16>
    %cst_64 = arith.constant dense<0.000000e+00> : vector<8x384xf32>
    %284 = tpu.matmul %283, %3, %cst_64 {dimension_numbers = #tpu.dot_dimension_numbers<[1], [0], [0], [1], [0, 0, 1, 1], [], []>} : vector<8x128xbf16>, vector<128x384xbf16>, vector<8x384xf32> -> vector<8x384xf32>
    %285 = vector.extract_strided_slice %282 {offsets = [0, 0], sizes = [8, 128], strides = [1, 1]} : vector<8x384xf32> to vector<8x128xf32>
    %286 = vector.extract_strided_slice %284 {offsets = [0, 0], sizes = [8, 128], strides = [1, 1]} : vector<8x384xf32> to vector<8x128xf32>
    %287 = arith.addf %285, %286 : vector<8x128xf32>
    %288 = arith.negf %287 : vector<8x128xf32>
    %289 = math.exp %288 : vector<8x128xf32>
    %cst_65 = arith.constant 1.000000e+00 : f32
    %290 = vector.broadcast %cst_65 : f32 to vector<8x128xf32>
    %291 = arith.addf %290, %289 : vector<8x128xf32>
    %292 = arith.divf %290, %291 : vector<8x128xf32>
    %293 = vector.extract_strided_slice %282 {offsets = [0, 128], sizes = [8, 128], strides = [1, 1]} : vector<8x384xf32> to vector<8x128xf32>
    %294 = vector.extract_strided_slice %284 {offsets = [0, 128], sizes = [8, 128], strides = [1, 1]} : vector<8x384xf32> to vector<8x128xf32>
    %295 = arith.addf %293, %294 : vector<8x128xf32>
    %296 = arith.negf %295 : vector<8x128xf32>
    %297 = math.exp %296 : vector<8x128xf32>
    %cst_66 = arith.constant 1.000000e+00 : f32
    %298 = vector.broadcast %cst_66 : f32 to vector<8x128xf32>
    %299 = arith.addf %298, %297 : vector<8x128xf32>
    %300 = arith.divf %298, %299 : vector<8x128xf32>
    %301 = vector.extract_strided_slice %282 {offsets = [0, 256], sizes = [8, 128], strides = [1, 1]} : vector<8x384xf32> to vector<8x128xf32>
    %302 = vector.extract_strided_slice %284 {offsets = [0, 256], sizes = [8, 128], strides = [1, 1]} : vector<8x384xf32> to vector<8x128xf32>
    %303 = vector.broadcast %4 : vector<1x128xf32> to vector<8x128xf32>
    %304 = arith.addf %302, %303 : vector<8x128xf32>
    %305 = arith.mulf %292, %304 : vector<8x128xf32>
    %306 = arith.addf %301, %305 : vector<8x128xf32>
    %307 = math.tanh %306 : vector<8x128xf32>
    %cst_67 = arith.constant 1.000000e+00 : f32
    %308 = vector.broadcast %cst_67 : f32 to vector<8x128xf32>
    %309 = arith.subf %308, %300 : vector<8x128xf32>
    %310 = arith.mulf %309, %307 : vector<8x128xf32>
    %311 = arith.mulf %300, %273 : vector<8x128xf32>
    %312 = arith.addf %310, %311 : vector<8x128xf32>
    %313 = arith.truncf %312 : vector<8x128xf32> to vector<8x128xbf16>
    %314 = arith.index_cast %c7_i32 : i32 to index
    %c0_68 = arith.constant 0 : index
    %c0_69 = arith.constant 0 : index
    %315 = vector.load %arg5[%314, %c0_68, %c0_69] : memref<8x8x128xbf16, #tpu.memory_space<vmem>>, vector<1x8x128xbf16>
    %316 = vector.shape_cast %315 : vector<1x8x128xbf16> to vector<8x128xbf16>
    %317 = vector.shape_cast %313 : vector<8x128xbf16> to vector<1x8x128xbf16>
    tpu.vector_store %arg5[%314, %c0_68, %c0_69], %317 {strides = array<i32>} : memref<8x8x128xbf16, #tpu.memory_space<vmem>>, vector<1x8x128xbf16>,
    %c8_i32 = arith.constant 8 : i32
    %c0_70 = arith.constant 0 : index
    %c0_71 = arith.constant 0 : index
    %318 = vector.load %arg7[%c0_70, %c0_71] : memref<8x128xf32, #tpu.memory_space<vmem>>, vector<8x128xf32>
    tpu.vector_store %arg7[%c0_70, %c0_71], %312 {strides = array<i32>} : memref<8x128xf32, #tpu.memory_space<vmem>>, vector<8x128xf32>,
    %c0_i32_72 = arith.constant 0 : i32
    %319 = arith.cmpi eq, %arg0, %c0_i32_72 : i32
    %320 = arith.extui %319 : i1 to i32
    %c0_i32_73 = arith.constant 0 : i32
    %321 = arith.cmpi ne, %320, %c0_i32_73 : i32
    scf.if %321 {
      %c0_74 = arith.constant 0 : index
      %c0_75 = arith.constant 0 : index
      %322 = vector.load %arg6[%c0_74, %c0_75] : memref<8x128xf32, #tpu.memory_space<vmem>>, vector<8x128xf32>
      tpu.vector_store %arg6[%c0_74, %c0_75], %312 {strides = array<i32>} : memref<8x128xf32, #tpu.memory_space<vmem>>, vector<8x128xf32>,
    } else {
    }
    return
  }
  func.func @transform_0(%arg0: i32) -> (i32, i32, i32) {
    %c0_i32 = arith.constant 0 : i32
    %c0_i32_0 = arith.constant 0 : i32
    %c0_i32_1 = arith.constant 0 : i32
    return %arg0, %c0_i32, %c0_i32_0 : i32, i32, i32
  }
  func.func @transform_1(%arg0: i32) -> (i32, i32) {
    %c0_i32 = arith.constant 0 : i32
    %c0_i32_0 = arith.constant 0 : i32
    %c0_i32_1 = arith.constant 0 : i32
    return %c0_i32, %c0_i32_0 : i32, i32
  }
  func.func @transform_2(%arg0: i32) -> (i32, i32) {
    %c0_i32 = arith.constant 0 : i32
    %c0_i32_0 = arith.constant 0 : i32
    %c0_i32_1 = arith.constant 0 : i32
    return %c0_i32, %c0_i32_0 : i32, i32
  }
  func.func @transform_3(%arg0: i32) -> (i32, i32) {
    %c0_i32 = arith.constant 0 : i32
    %c0_i32_0 = arith.constant 0 : i32
    %c0_i32_1 = arith.constant 0 : i32
    return %c0_i32, %c0_i32_0 : i32, i32
  }
  func.func @transform_4(%arg0: i32) -> (i32, i32, i32) {
    %c0_i32 = arith.constant 0 : i32
    %c0_i32_0 = arith.constant 0 : i32
    %c0_i32_1 = arith.constant 0 : i32
    return %arg0, %c0_i32, %c0_i32_0 : i32, i32, i32
  }
  func.func @transform_5(%arg0: i32) -> (i32, i32) {
    %c0_i32 = arith.constant 0 : i32
    %c0_i32_0 = arith.constant 0 : i32
    %c0_i32_1 = arith.constant 0 : i32
    return %c0_i32, %c0_i32_0 : i32, i32
  }
}

module attributes {stable_mosaic.version = 11 : i64} {
  func.func @_gru_recurrent_kernel(%arg0: i32, %arg1: memref<8x8x384xbf16, #tpu.memory_space<vmem>>, %arg2: memref<8x128xf32, #tpu.memory_space<vmem>>, %arg3: memref<128x384xbf16, #tpu.memory_space<vmem>>, %arg4: memref<1x128xf32, #tpu.memory_space<vmem>>, %arg5: memref<8x8x128xbf16, #tpu.memory_space<vmem>>, %arg6: memref<8x128xf32, #tpu.memory_space<vmem>>, %arg7: memref<8x128xf32, #tpu.memory_space<vmem>>) attributes {dimension_semantics = [#tpu.dimension_semantics<arbitrary>], iteration_bounds = array<i64: 1>, scalar_prefetch = 0 : i64, scratch_operands = 1 : i64, tpu.core_type = #tpu.core_type<tc>, window_params = [{transform_indices = @transform_0, window_bounds = array<i64: 8, 8, 384>}, {pipeline_mode = #tpu.pipeline_mode<synchronous>, transform_indices = @transform_1, window_bounds = array<i64: 8, 128>}, {pipeline_mode = #tpu.pipeline_mode<synchronous>, transform_indices = @transform_2, window_bounds = array<i64: 128, 384>}, {pipeline_mode = #tpu.pipeline_mode<synchronous>, transform_indices = @transform_3, window_bounds = array<i64: 1, 128>}, {transform_indices = @transform_4, window_bounds = array<i64: 8, 8, 128>}, {pipeline_mode = #tpu.pipeline_mode<synchronous>, transform_indices = @transform_5, window_bounds = array<i64: 8, 128>}]} {
    %c0_i32 = arith.constant 0 : i32
    %0 = arith.cmpi eq, %arg0, %c0_i32 : i32
    %1 = arith.extui %0 : i1 to i32
    %c0_i32_0 = arith.constant 0 : i32
    %2 = arith.cmpi ne, %1, %c0_i32_0 : i32
    scf.if %2 {
      %c0_74 = arith.constant 0 : index
      %c0_75 = arith.constant 0 : index
      %322 = vector.load %arg2[%c0_74, %c0_75] : memref<8x128xf32, #tpu.memory_space<vmem>>, vector<8x128xf32>
      %c0_76 = arith.constant 0 : index
      %c0_77 = arith.constant 0 : index
      %323 = vector.load %arg7[%c0_76, %c0_77] : memref<8x128xf32, #tpu.memory_space<vmem>>, vector<8x128xf32>
      tpu.vector_store %arg7[%c0_76, %c0_77], %322 {strides = array<i32>} : memref<8x128xf32, #tpu.memory_space<vmem>>, vector<8x128xf32>,
    } else {
    }
    %c0 = arith.constant 0 : index
    %c0_1 = arith.constant 0 : index
    %3 = vector.load %arg3[%c0, %c0_1] : memref<128x384xbf16, #tpu.memory_space<vmem>>, vector<128x384xbf16>
    %c0_2 = arith.constant 0 : index
    %c0_3 = arith.constant 0 : index
    %4 = vector.load %arg4[%c0_2, %c0_3] : memref<1x128xf32, #tpu.memory_space<vmem>>, vector<1x128xf32>
    %c0_4 = arith.constant 0 : index
    %c0_5 = arith.constant 0 : index
    %5 = vector.load %arg7[%c0_4, %c0_5] : memref<8x128xf32, #tpu.memory_space<vmem>>, vector<8x128xf32>
    %c0_i32_6 = arith.constant 0 : i32
    %6 = arith.index_cast %c0_i32_6 : i32 to index
    %c0_7 = arith.constant 0 : index
    %c0_8 = arith.constant 0 : index
    %7 = vector.load %arg1[%6, %c0_7, %c0_8] : memref<8x8x384xbf16, #tpu.memory_space<vmem>>, vector<1x8x384xbf16>
    %8 = vector.shape_cast %7 : vector<1x8x384xbf16> to vector<8x384xbf16>
    %9 = arith.extf %8 : vector<8x384xbf16> to vector<8x384xf32>
    %10 = arith.truncf %5 : vector<8x128xf32> to vector<8x128xbf16>
    %cst = arith.constant dense<0.000000e+00> : vector<8x384xf32>
    %11 = tpu.matmul %10, %3, %cst {dimension_numbers = #tpu.dot_dimension_numbers<[1], [0], [0], [1], [0, 0, 1, 1], [], []>} : vector<8x128xbf16>, vector<128x384xbf16>, vector<8x384xf32> -> vector<8x384xf32>
    %12 = vector.extract_strided_slice %9 {offsets = [0, 0], sizes = [8, 128], strides = [1, 1]} : vector<8x384xf32> to vector<8x128xf32>
    %13 = vector.extract_strided_slice %11 {offsets = [0, 0], sizes = [8, 128], strides = [1, 1]} : vector<8x384xf32> to vector<8x128xf32>
    %14 = arith.addf %12, %13 : vector<8x128xf32>
    %15 = arith.negf %14 : vector<8x128xf32>
    %16 = math.exp %15 : vector<8x128xf32>
    %cst_9 = arith.constant 1.000000e+00 : f32
    %17 = vector.broadcast %cst_9 : f32 to vector<8x128xf32>
    %18 = arith.addf %17, %16 : vector<8x128xf32>
    %19 = arith.divf %17, %18 : vector<8x128xf32>
    %20 = vector.extract_strided_slice %9 {offsets = [0, 128], sizes = [8, 128], strides = [1, 1]} : vector<8x384xf32> to vector<8x128xf32>
    %21 = vector.extract_strided_slice %11 {offsets = [0, 128], sizes = [8, 128], strides = [1, 1]} : vector<8x384xf32> to vector<8x128xf32>
    %22 = arith.addf %20, %21 : vector<8x128xf32>
    %23 = arith.negf %22 : vector<8x128xf32>
    %24 = math.exp %23 : vector<8x128xf32>
    %cst_10 = arith.constant 1.000000e+00 : f32
    %25 = vector.broadcast %cst_10 : f32 to vector<8x128xf32>
    %26 = arith.addf %25, %24 : vector<8x128xf32>
    %27 = arith.divf %25, %26 : vector<8x128xf32>
    %28 = vector.extract_strided_slice %9 {offsets = [0, 256], sizes = [8, 128], strides = [1, 1]} : vector<8x384xf32> to vector<8x128xf32>
    %29 = vector.extract_strided_slice %11 {offsets = [0, 256], sizes = [8, 128], strides = [1, 1]} : vector<8x384xf32> to vector<8x128xf32>
    %30 = vector.broadcast %4 : vector<1x128xf32> to vector<8x128xf32>
    %31 = arith.addf %29, %30 : vector<8x128xf32>
    %32 = arith.mulf %19, %31 : vector<8x128xf32>
    %33 = arith.addf %28, %32 : vector<8x128xf32>
    %34 = math.tanh %33 : vector<8x128xf32>
    %cst_11 = arith.constant 1.000000e+00 : f32
    %35 = vector.broadcast %cst_11 : f32 to vector<8x128xf32>
    %36 = arith.subf %35, %27 : vector<8x128xf32>
    %37 = arith.mulf %36, %34 : vector<8x128xf32>
    %38 = arith.mulf %27, %5 : vector<8x128xf32>
    %39 = arith.addf %37, %38 : vector<8x128xf32>
    %40 = arith.truncf %39 : vector<8x128xf32> to vector<8x128xbf16>
    %41 = arith.index_cast %c0_i32_6 : i32 to index
    %c0_12 = arith.constant 0 : index
    %c0_13 = arith.constant 0 : index
    %42 = vector.load %arg5[%41, %c0_12, %c0_13] : memref<8x8x128xbf16, #tpu.memory_space<vmem>>, vector<1x8x128xbf16>
    %43 = vector.shape_cast %42 : vector<1x8x128xbf16> to vector<8x128xbf16>
    %44 = vector.shape_cast %40 : vector<8x128xbf16> to vector<1x8x128xbf16>
    tpu.vector_store %arg5[%41, %c0_12, %c0_13], %44 {strides = array<i32>} : memref<8x8x128xbf16, #tpu.memory_space<vmem>>, vector<1x8x128xbf16>,
    %c1_i32 = arith.constant 1 : i32
    %45 = arith.index_cast %c1_i32 : i32 to index
    %c0_14 = arith.constant 0 : index
    %c0_15 = arith.constant 0 : index
    %46 = vector.load %arg1[%45, %c0_14, %c0_15] : memref<8x8x384xbf16, #tpu.memory_space<vmem>>, vector<1x8x384xbf16>
    %47 = vector.shape_cast %46 : vector<1x8x384xbf16> to vector<8x384xbf16>
    %48 = arith.extf %47 : vector<8x384xbf16> to vector<8x384xf32>
    %49 = arith.truncf %39 : vector<8x128xf32> to vector<8x128xbf16>
    %cst_16 = arith.constant dense<0.000000e+00> : vector<8x384xf32>
    %50 = tpu.matmul %49, %3, %cst_16 {dimension_numbers = #tpu.dot_dimension_numbers<[1], [0], [0], [1], [0, 0, 1, 1], [], []>} : vector<8x128xbf16>, vector<128x384xbf16>, vector<8x384xf32> -> vector<8x384xf32>
    %51 = vector.extract_strided_slice %48 {offsets = [0, 0], sizes = [8, 128], strides = [1, 1]} : vector<8x384xf32> to vector<8x128xf32>
    %52 = vector.extract_strided_slice %50 {offsets = [0, 0], sizes = [8, 128], strides = [1, 1]} : vector<8x384xf32> to vector<8x128xf32>
    %53 = arith.addf %51, %52 : vector<8x128xf32>
    %54 = arith.negf %53 : vector<8x128xf32>
    %55 = math.exp %54 : vector<8x128xf32>
    %cst_17 = arith.constant 1.000000e+00 : f32
    %56 = vector.broadcast %cst_17 : f32 to vector<8x128xf32>
    %57 = arith.addf %56, %55 : vector<8x128xf32>
    %58 = arith.divf %56, %57 : vector<8x128xf32>
    %59 = vector.extract_strided_slice %48 {offsets = [0, 128], sizes = [8, 128], strides = [1, 1]} : vector<8x384xf32> to vector<8x128xf32>
    %60 = vector.extract_strided_slice %50 {offsets = [0, 128], sizes = [8, 128], strides = [1, 1]} : vector<8x384xf32> to vector<8x128xf32>
    %61 = arith.addf %59, %60 : vector<8x128xf32>
    %62 = arith.negf %61 : vector<8x128xf32>
    %63 = math.exp %62 : vector<8x128xf32>
    %cst_18 = arith.constant 1.000000e+00 : f32
    %64 = vector.broadcast %cst_18 : f32 to vector<8x128xf32>
    %65 = arith.addf %64, %63 : vector<8x128xf32>
    %66 = arith.divf %64, %65 : vector<8x128xf32>
    %67 = vector.extract_strided_slice %48 {offsets = [0, 256], sizes = [8, 128], strides = [1, 1]} : vector<8x384xf32> to vector<8x128xf32>
    %68 = vector.extract_strided_slice %50 {offsets = [0, 256], sizes = [8, 128], strides = [1, 1]} : vector<8x384xf32> to vector<8x128xf32>
    %69 = vector.broadcast %4 : vector<1x128xf32> to vector<8x128xf32>
    %70 = arith.addf %68, %69 : vector<8x128xf32>
    %71 = arith.mulf %58, %70 : vector<8x128xf32>
    %72 = arith.addf %67, %71 : vector<8x128xf32>
    %73 = math.tanh %72 : vector<8x128xf32>
    %cst_19 = arith.constant 1.000000e+00 : f32
    %74 = vector.broadcast %cst_19 : f32 to vector<8x128xf32>
    %75 = arith.subf %74, %66 : vector<8x128xf32>
    %76 = arith.mulf %75, %73 : vector<8x128xf32>
    %77 = arith.mulf %66, %39 : vector<8x128xf32>
    %78 = arith.addf %76, %77 : vector<8x128xf32>
    %79 = arith.truncf %78 : vector<8x128xf32> to vector<8x128xbf16>
    %80 = arith.index_cast %c1_i32 : i32 to index
    %c0_20 = arith.constant 0 : index
    %c0_21 = arith.constant 0 : index
    %81 = vector.load %arg5[%80, %c0_20, %c0_21] : memref<8x8x128xbf16, #tpu.memory_space<vmem>>, vector<1x8x128xbf16>
    %82 = vector.shape_cast %81 : vector<1x8x128xbf16> to vector<8x128xbf16>
    %83 = vector.shape_cast %79 : vector<8x128xbf16> to vector<1x8x128xbf16>
    tpu.vector_store %arg5[%80, %c0_20, %c0_21], %83 {strides = array<i32>} : memref<8x8x128xbf16, #tpu.memory_space<vmem>>, vector<1x8x128xbf16>,
    %c2_i32 = arith.constant 2 : i32
    %84 = arith.index_cast %c2_i32 : i32 to index
    %c0_22 = arith.constant 0 : index
    %c0_23 = arith.constant 0 : index
    %85 = vector.load %arg1[%84, %c0_22, %c0_23] : memref<8x8x384xbf16, #tpu.memory_space<vmem>>, vector<1x8x384xbf16>
    %86 = vector.shape_cast %85 : vector<1x8x384xbf16> to vector<8x384xbf16>
    %87 = arith.extf %86 : vector<8x384xbf16> to vector<8x384xf32>
    %88 = arith.truncf %78 : vector<8x128xf32> to vector<8x128xbf16>
    %cst_24 = arith.constant dense<0.000000e+00> : vector<8x384xf32>
    %89 = tpu.matmul %88, %3, %cst_24 {dimension_numbers = #tpu.dot_dimension_numbers<[1], [0], [0], [1], [0, 0, 1, 1], [], []>} : vector<8x128xbf16>, vector<128x384xbf16>, vector<8x384xf32> -> vector<8x384xf32>
    %90 = vector.extract_strided_slice %87 {offsets = [0, 0], sizes = [8, 128], strides = [1, 1]} : vector<8x384xf32> to vector<8x128xf32>
    %91 = vector.extract_strided_slice %89 {offsets = [0, 0], sizes = [8, 128], strides = [1, 1]} : vector<8x384xf32> to vector<8x128xf32>
    %92 = arith.addf %90, %91 : vector<8x128xf32>
    %93 = arith.negf %92 : vector<8x128xf32>
    %94 = math.exp %93 : vector<8x128xf32>
    %cst_25 = arith.constant 1.000000e+00 : f32
    %95 = vector.broadcast %cst_25 : f32 to vector<8x128xf32>
    %96 = arith.addf %95, %94 : vector<8x128xf32>
    %97 = arith.divf %95, %96 : vector<8x128xf32>
    %98 = vector.extract_strided_slice %87 {offsets = [0, 128], sizes = [8, 128], strides = [1, 1]} : vector<8x384xf32> to vector<8x128xf32>
    %99 = vector.extract_strided_slice %89 {offsets = [0, 128], sizes = [8, 128], strides = [1, 1]} : vector<8x384xf32> to vector<8x128xf32>
    %100 = arith.addf %98, %99 : vector<8x128xf32>
    %101 = arith.negf %100 : vector<8x128xf32>
    %102 = math.exp %101 : vector<8x128xf32>
    %cst_26 = arith.constant 1.000000e+00 : f32
    %103 = vector.broadcast %cst_26 : f32 to vector<8x128xf32>
    %104 = arith.addf %103, %102 : vector<8x128xf32>
    %105 = arith.divf %103, %104 : vector<8x128xf32>
    %106 = vector.extract_strided_slice %87 {offsets = [0, 256], sizes = [8, 128], strides = [1, 1]} : vector<8x384xf32> to vector<8x128xf32>
    %107 = vector.extract_strided_slice %89 {offsets = [0, 256], sizes = [8, 128], strides = [1, 1]} : vector<8x384xf32> to vector<8x128xf32>
    %108 = vector.broadcast %4 : vector<1x128xf32> to vector<8x128xf32>
    %109 = arith.addf %107, %108 : vector<8x128xf32>
    %110 = arith.mulf %97, %109 : vector<8x128xf32>
    %111 = arith.addf %106, %110 : vector<8x128xf32>
    %112 = math.tanh %111 : vector<8x128xf32>
    %cst_27 = arith.constant 1.000000e+00 : f32
    %113 = vector.broadcast %cst_27 : f32 to vector<8x128xf32>
    %114 = arith.subf %113, %105 : vector<8x128xf32>
    %115 = arith.mulf %114, %112 : vector<8x128xf32>
    %116 = arith.mulf %105, %78 : vector<8x128xf32>
    %117 = arith.addf %115, %116 : vector<8x128xf32>
    %118 = arith.truncf %117 : vector<8x128xf32> to vector<8x128xbf16>
    %119 = arith.index_cast %c2_i32 : i32 to index
    %c0_28 = arith.constant 0 : index
    %c0_29 = arith.constant 0 : index
    %120 = vector.load %arg5[%119, %c0_28, %c0_29] : memref<8x8x128xbf16, #tpu.memory_space<vmem>>, vector<1x8x128xbf16>
    %121 = vector.shape_cast %120 : vector<1x8x128xbf16> to vector<8x128xbf16>
    %122 = vector.shape_cast %118 : vector<8x128xbf16> to vector<1x8x128xbf16>
    tpu.vector_store %arg5[%119, %c0_28, %c0_29], %122 {strides = array<i32>} : memref<8x8x128xbf16, #tpu.memory_space<vmem>>, vector<1x8x128xbf16>,
    %c3_i32 = arith.constant 3 : i32
    %123 = arith.index_cast %c3_i32 : i32 to index
    %c0_30 = arith.constant 0 : index
    %c0_31 = arith.constant 0 : index
    %124 = vector.load %arg1[%123, %c0_30, %c0_31] : memref<8x8x384xbf16, #tpu.memory_space<vmem>>, vector<1x8x384xbf16>
    %125 = vector.shape_cast %124 : vector<1x8x384xbf16> to vector<8x384xbf16>
    %126 = arith.extf %125 : vector<8x384xbf16> to vector<8x384xf32>
    %127 = arith.truncf %117 : vector<8x128xf32> to vector<8x128xbf16>
    %cst_32 = arith.constant dense<0.000000e+00> : vector<8x384xf32>
    %128 = tpu.matmul %127, %3, %cst_32 {dimension_numbers = #tpu.dot_dimension_numbers<[1], [0], [0], [1], [0, 0, 1, 1], [], []>} : vector<8x128xbf16>, vector<128x384xbf16>, vector<8x384xf32> -> vector<8x384xf32>
    %129 = vector.extract_strided_slice %126 {offsets = [0, 0], sizes = [8, 128], strides = [1, 1]} : vector<8x384xf32> to vector<8x128xf32>
    %130 = vector.extract_strided_slice %128 {offsets = [0, 0], sizes = [8, 128], strides = [1, 1]} : vector<8x384xf32> to vector<8x128xf32>
    %131 = arith.addf %129, %130 : vector<8x128xf32>
    %132 = arith.negf %131 : vector<8x128xf32>
    %133 = math.exp %132 : vector<8x128xf32>
    %cst_33 = arith.constant 1.000000e+00 : f32
    %134 = vector.broadcast %cst_33 : f32 to vector<8x128xf32>
    %135 = arith.addf %134, %133 : vector<8x128xf32>
    %136 = arith.divf %134, %135 : vector<8x128xf32>
    %137 = vector.extract_strided_slice %126 {offsets = [0, 128], sizes = [8, 128], strides = [1, 1]} : vector<8x384xf32> to vector<8x128xf32>
    %138 = vector.extract_strided_slice %128 {offsets = [0, 128], sizes = [8, 128], strides = [1, 1]} : vector<8x384xf32> to vector<8x128xf32>
    %139 = arith.addf %137, %138 : vector<8x128xf32>
    %140 = arith.negf %139 : vector<8x128xf32>
    %141 = math.exp %140 : vector<8x128xf32>
    %cst_34 = arith.constant 1.000000e+00 : f32
    %142 = vector.broadcast %cst_34 : f32 to vector<8x128xf32>
    %143 = arith.addf %142, %141 : vector<8x128xf32>
    %144 = arith.divf %142, %143 : vector<8x128xf32>
    %145 = vector.extract_strided_slice %126 {offsets = [0, 256], sizes = [8, 128], strides = [1, 1]} : vector<8x384xf32> to vector<8x128xf32>
    %146 = vector.extract_strided_slice %128 {offsets = [0, 256], sizes = [8, 128], strides = [1, 1]} : vector<8x384xf32> to vector<8x128xf32>
    %147 = vector.broadcast %4 : vector<1x128xf32> to vector<8x128xf32>
    %148 = arith.addf %146, %147 : vector<8x128xf32>
    %149 = arith.mulf %136, %148 : vector<8x128xf32>
    %150 = arith.addf %145, %149 : vector<8x128xf32>
    %151 = math.tanh %150 : vector<8x128xf32>
    %cst_35 = arith.constant 1.000000e+00 : f32
    %152 = vector.broadcast %cst_35 : f32 to vector<8x128xf32>
    %153 = arith.subf %152, %144 : vector<8x128xf32>
    %154 = arith.mulf %153, %151 : vector<8x128xf32>
    %155 = arith.mulf %144, %117 : vector<8x128xf32>
    %156 = arith.addf %154, %155 : vector<8x128xf32>
    %157 = arith.truncf %156 : vector<8x128xf32> to vector<8x128xbf16>
    %158 = arith.index_cast %c3_i32 : i32 to index
    %c0_36 = arith.constant 0 : index
    %c0_37 = arith.constant 0 : index
    %159 = vector.load %arg5[%158, %c0_36, %c0_37] : memref<8x8x128xbf16, #tpu.memory_space<vmem>>, vector<1x8x128xbf16>
    %160 = vector.shape_cast %159 : vector<1x8x128xbf16> to vector<8x128xbf16>
    %161 = vector.shape_cast %157 : vector<8x128xbf16> to vector<1x8x128xbf16>
    tpu.vector_store %arg5[%158, %c0_36, %c0_37], %161 {strides = array<i32>} : memref<8x8x128xbf16, #tpu.memory_space<vmem>>, vector<1x8x128xbf16>,
    %c4_i32 = arith.constant 4 : i32
    %162 = arith.index_cast %c4_i32 : i32 to index
    %c0_38 = arith.constant 0 : index
    %c0_39 = arith.constant 0 : index
    %163 = vector.load %arg1[%162, %c0_38, %c0_39] : memref<8x8x384xbf16, #tpu.memory_space<vmem>>, vector<1x8x384xbf16>
    %164 = vector.shape_cast %163 : vector<1x8x384xbf16> to vector<8x384xbf16>
    %165 = arith.extf %164 : vector<8x384xbf16> to vector<8x384xf32>
    %166 = arith.truncf %156 : vector<8x128xf32> to vector<8x128xbf16>
    %cst_40 = arith.constant dense<0.000000e+00> : vector<8x384xf32>
    %167 = tpu.matmul %166, %3, %cst_40 {dimension_numbers = #tpu.dot_dimension_numbers<[1], [0], [0], [1], [0, 0, 1, 1], [], []>} : vector<8x128xbf16>, vector<128x384xbf16>, vector<8x384xf32> -> vector<8x384xf32>
    %168 = vector.extract_strided_slice %165 {offsets = [0, 0], sizes = [8, 128], strides = [1, 1]} : vector<8x384xf32> to vector<8x128xf32>
    %169 = vector.extract_strided_slice %167 {offsets = [0, 0], sizes = [8, 128], strides = [1, 1]} : vector<8x384xf32> to vector<8x128xf32>
    %170 = arith.addf %168, %169 : vector<8x128xf32>
    %171 = arith.negf %170 : vector<8x128xf32>
    %172 = math.exp %171 : vector<8x128xf32>
    %cst_41 = arith.constant 1.000000e+00 : f32
    %173 = vector.broadcast %cst_41 : f32 to vector<8x128xf32>
    %174 = arith.addf %173, %172 : vector<8x128xf32>
    %175 = arith.divf %173, %174 : vector<8x128xf32>
    %176 = vector.extract_strided_slice %165 {offsets = [0, 128], sizes = [8, 128], strides = [1, 1]} : vector<8x384xf32> to vector<8x128xf32>
    %177 = vector.extract_strided_slice %167 {offsets = [0, 128], sizes = [8, 128], strides = [1, 1]} : vector<8x384xf32> to vector<8x128xf32>
    %178 = arith.addf %176, %177 : vector<8x128xf32>
    %179 = arith.negf %178 : vector<8x128xf32>
    %180 = math.exp %179 : vector<8x128xf32>
    %cst_42 = arith.constant 1.000000e+00 : f32
    %181 = vector.broadcast %cst_42 : f32 to vector<8x128xf32>
    %182 = arith.addf %181, %180 : vector<8x128xf32>
    %183 = arith.divf %181, %182 : vector<8x128xf32>
    %184 = vector.extract_strided_slice %165 {offsets = [0, 256], sizes = [8, 128], strides = [1, 1]} : vector<8x384xf32> to vector<8x128xf32>
    %185 = vector.extract_strided_slice %167 {offsets = [0, 256], sizes = [8, 128], strides = [1, 1]} : vector<8x384xf32> to vector<8x128xf32>
    %186 = vector.broadcast %4 : vector<1x128xf32> to vector<8x128xf32>
    %187 = arith.addf %185, %186 : vector<8x128xf32>
    %188 = arith.mulf %175, %187 : vector<8x128xf32>
    %189 = arith.addf %184, %188 : vector<8x128xf32>
    %190 = math.tanh %189 : vector<8x128xf32>
    %cst_43 = arith.constant 1.000000e+00 : f32
    %191 = vector.broadcast %cst_43 : f32 to vector<8x128xf32>
    %192 = arith.subf %191, %183 : vector<8x128xf32>
    %193 = arith.mulf %192, %190 : vector<8x128xf32>
    %194 = arith.mulf %183, %156 : vector<8x128xf32>
    %195 = arith.addf %193, %194 : vector<8x128xf32>
    %196 = arith.truncf %195 : vector<8x128xf32> to vector<8x128xbf16>
    %197 = arith.index_cast %c4_i32 : i32 to index
    %c0_44 = arith.constant 0 : index
    %c0_45 = arith.constant 0 : index
    %198 = vector.load %arg5[%197, %c0_44, %c0_45] : memref<8x8x128xbf16, #tpu.memory_space<vmem>>, vector<1x8x128xbf16>
    %199 = vector.shape_cast %198 : vector<1x8x128xbf16> to vector<8x128xbf16>
    %200 = vector.shape_cast %196 : vector<8x128xbf16> to vector<1x8x128xbf16>
    tpu.vector_store %arg5[%197, %c0_44, %c0_45], %200 {strides = array<i32>} : memref<8x8x128xbf16, #tpu.memory_space<vmem>>, vector<1x8x128xbf16>,
    %c5_i32 = arith.constant 5 : i32
    %201 = arith.index_cast %c5_i32 : i32 to index
    %c0_46 = arith.constant 0 : index
    %c0_47 = arith.constant 0 : index
    %202 = vector.load %arg1[%201, %c0_46, %c0_47] : memref<8x8x384xbf16, #tpu.memory_space<vmem>>, vector<1x8x384xbf16>
    %203 = vector.shape_cast %202 : vector<1x8x384xbf16> to vector<8x384xbf16>
    %204 = arith.extf %203 : vector<8x384xbf16> to vector<8x384xf32>
    %205 = arith.truncf %195 : vector<8x128xf32> to vector<8x128xbf16>
    %cst_48 = arith.constant dense<0.000000e+00> : vector<8x384xf32>
    %206 = tpu.matmul %205, %3, %cst_48 {dimension_numbers = #tpu.dot_dimension_numbers<[1], [0], [0], [1], [0, 0, 1, 1], [], []>} : vector<8x128xbf16>, vector<128x384xbf16>, vector<8x384xf32> -> vector<8x384xf32>
    %207 = vector.extract_strided_slice %204 {offsets = [0, 0], sizes = [8, 128], strides = [1, 1]} : vector<8x384xf32> to vector<8x128xf32>
    %208 = vector.extract_strided_slice %206 {offsets = [0, 0], sizes = [8, 128], strides = [1, 1]} : vector<8x384xf32> to vector<8x128xf32>
    %209 = arith.addf %207, %208 : vector<8x128xf32>
    %210 = arith.negf %209 : vector<8x128xf32>
    %211 = math.exp %210 : vector<8x128xf32>
    %cst_49 = arith.constant 1.000000e+00 : f32
    %212 = vector.broadcast %cst_49 : f32 to vector<8x128xf32>
    %213 = arith.addf %212, %211 : vector<8x128xf32>
    %214 = arith.divf %212, %213 : vector<8x128xf32>
    %215 = vector.extract_strided_slice %204 {offsets = [0, 128], sizes = [8, 128], strides = [1, 1]} : vector<8x384xf32> to vector<8x128xf32>
    %216 = vector.extract_strided_slice %206 {offsets = [0, 128], sizes = [8, 128], strides = [1, 1]} : vector<8x384xf32> to vector<8x128xf32>
    %217 = arith.addf %215, %216 : vector<8x128xf32>
    %218 = arith.negf %217 : vector<8x128xf32>
    %219 = math.exp %218 : vector<8x128xf32>
    %cst_50 = arith.constant 1.000000e+00 : f32
    %220 = vector.broadcast %cst_50 : f32 to vector<8x128xf32>
    %221 = arith.addf %220, %219 : vector<8x128xf32>
    %222 = arith.divf %220, %221 : vector<8x128xf32>
    %223 = vector.extract_strided_slice %204 {offsets = [0, 256], sizes = [8, 128], strides = [1, 1]} : vector<8x384xf32> to vector<8x128xf32>
    %224 = vector.extract_strided_slice %206 {offsets = [0, 256], sizes = [8, 128], strides = [1, 1]} : vector<8x384xf32> to vector<8x128xf32>
    %225 = vector.broadcast %4 : vector<1x128xf32> to vector<8x128xf32>
    %226 = arith.addf %224, %225 : vector<8x128xf32>
    %227 = arith.mulf %214, %226 : vector<8x128xf32>
    %228 = arith.addf %223, %227 : vector<8x128xf32>
    %229 = math.tanh %228 : vector<8x128xf32>
    %cst_51 = arith.constant 1.000000e+00 : f32
    %230 = vector.broadcast %cst_51 : f32 to vector<8x128xf32>
    %231 = arith.subf %230, %222 : vector<8x128xf32>
    %232 = arith.mulf %231, %229 : vector<8x128xf32>
    %233 = arith.mulf %222, %195 : vector<8x128xf32>
    %234 = arith.addf %232, %233 : vector<8x128xf32>
    %235 = arith.truncf %234 : vector<8x128xf32> to vector<8x128xbf16>
    %236 = arith.index_cast %c5_i32 : i32 to index
    %c0_52 = arith.constant 0 : index
    %c0_53 = arith.constant 0 : index
    %237 = vector.load %arg5[%236, %c0_52, %c0_53] : memref<8x8x128xbf16, #tpu.memory_space<vmem>>, vector<1x8x128xbf16>
    %238 = vector.shape_cast %237 : vector<1x8x128xbf16> to vector<8x128xbf16>
    %239 = vector.shape_cast %235 : vector<8x128xbf16> to vector<1x8x128xbf16>
    tpu.vector_store %arg5[%236, %c0_52, %c0_53], %239 {strides = array<i32>} : memref<8x8x128xbf16, #tpu.memory_space<vmem>>, vector<1x8x128xbf16>,
    %c6_i32 = arith.constant 6 : i32
    %240 = arith.index_cast %c6_i32 : i32 to index
    %c0_54 = arith.constant 0 : index
    %c0_55 = arith.constant 0 : index
    %241 = vector.load %arg1[%240, %c0_54, %c0_55] : memref<8x8x384xbf16, #tpu.memory_space<vmem>>, vector<1x8x384xbf16>
    %242 = vector.shape_cast %241 : vector<1x8x384xbf16> to vector<8x384xbf16>
    %243 = arith.extf %242 : vector<8x384xbf16> to vector<8x384xf32>
    %244 = arith.truncf %234 : vector<8x128xf32> to vector<8x128xbf16>
    %cst_56 = arith.constant dense<0.000000e+00> : vector<8x384xf32>
    %245 = tpu.matmul %244, %3, %cst_56 {dimension_numbers = #tpu.dot_dimension_numbers<[1], [0], [0], [1], [0, 0, 1, 1], [], []>} : vector<8x128xbf16>, vector<128x384xbf16>, vector<8x384xf32> -> vector<8x384xf32>
    %246 = vector.extract_strided_slice %243 {offsets = [0, 0], sizes = [8, 128], strides = [1, 1]} : vector<8x384xf32> to vector<8x128xf32>
    %247 = vector.extract_strided_slice %245 {offsets = [0, 0], sizes = [8, 128], strides = [1, 1]} : vector<8x384xf32> to vector<8x128xf32>
    %248 = arith.addf %246, %247 : vector<8x128xf32>
    %249 = arith.negf %248 : vector<8x128xf32>
    %250 = math.exp %249 : vector<8x128xf32>
    %cst_57 = arith.constant 1.000000e+00 : f32
    %251 = vector.broadcast %cst_57 : f32 to vector<8x128xf32>
    %252 = arith.addf %251, %250 : vector<8x128xf32>
    %253 = arith.divf %251, %252 : vector<8x128xf32>
    %254 = vector.extract_strided_slice %243 {offsets = [0, 128], sizes = [8, 128], strides = [1, 1]} : vector<8x384xf32> to vector<8x128xf32>
    %255 = vector.extract_strided_slice %245 {offsets = [0, 128], sizes = [8, 128], strides = [1, 1]} : vector<8x384xf32> to vector<8x128xf32>
    %256 = arith.addf %254, %255 : vector<8x128xf32>
    %257 = arith.negf %256 : vector<8x128xf32>
    %258 = math.exp %257 : vector<8x128xf32>
    %cst_58 = arith.constant 1.000000e+00 : f32
    %259 = vector.broadcast %cst_58 : f32 to vector<8x128xf32>
    %260 = arith.addf %259, %258 : vector<8x128xf32>
    %261 = arith.divf %259, %260 : vector<8x128xf32>
    %262 = vector.extract_strided_slice %243 {offsets = [0, 256], sizes = [8, 128], strides = [1, 1]} : vector<8x384xf32> to vector<8x128xf32>
    %263 = vector.extract_strided_slice %245 {offsets = [0, 256], sizes = [8, 128], strides = [1, 1]} : vector<8x384xf32> to vector<8x128xf32>
    %264 = vector.broadcast %4 : vector<1x128xf32> to vector<8x128xf32>
    %265 = arith.addf %263, %264 : vector<8x128xf32>
    %266 = arith.mulf %253, %265 : vector<8x128xf32>
    %267 = arith.addf %262, %266 : vector<8x128xf32>
    %268 = math.tanh %267 : vector<8x128xf32>
    %cst_59 = arith.constant 1.000000e+00 : f32
    %269 = vector.broadcast %cst_59 : f32 to vector<8x128xf32>
    %270 = arith.subf %269, %261 : vector<8x128xf32>
    %271 = arith.mulf %270, %268 : vector<8x128xf32>
    %272 = arith.mulf %261, %234 : vector<8x128xf32>
    %273 = arith.addf %271, %272 : vector<8x128xf32>
    %274 = arith.truncf %273 : vector<8x128xf32> to vector<8x128xbf16>
    %275 = arith.index_cast %c6_i32 : i32 to index
    %c0_60 = arith.constant 0 : index
    %c0_61 = arith.constant 0 : index
    %276 = vector.load %arg5[%275, %c0_60, %c0_61] : memref<8x8x128xbf16, #tpu.memory_space<vmem>>, vector<1x8x128xbf16>
    %277 = vector.shape_cast %276 : vector<1x8x128xbf16> to vector<8x128xbf16>
    %278 = vector.shape_cast %274 : vector<8x128xbf16> to vector<1x8x128xbf16>
    tpu.vector_store %arg5[%275, %c0_60, %c0_61], %278 {strides = array<i32>} : memref<8x8x128xbf16, #tpu.memory_space<vmem>>, vector<1x8x128xbf16>,
    %c7_i32 = arith.constant 7 : i32
    %279 = arith.index_cast %c7_i32 : i32 to index
    %c0_62 = arith.constant 0 : index
    %c0_63 = arith.constant 0 : index
    %280 = vector.load %arg1[%279, %c0_62, %c0_63] : memref<8x8x384xbf16, #tpu.memory_space<vmem>>, vector<1x8x384xbf16>
    %281 = vector.shape_cast %280 : vector<1x8x384xbf16> to vector<8x384xbf16>
    %282 = arith.extf %281 : vector<8x384xbf16> to vector<8x384xf32>
    %283 = arith.truncf %273 : vector<8x128xf32> to vector<8x128xbf16>
    %cst_64 = arith.constant dense<0.000000e+00> : vector<8x384xf32>
    %284 = tpu.matmul %283, %3, %cst_64 {dimension_numbers = #tpu.dot_dimension_numbers<[1], [0], [0], [1], [0, 0, 1, 1], [], []>} : vector<8x128xbf16>, vector<128x384xbf16>, vector<8x384xf32> -> vector<8x384xf32>
    %285 = vector.extract_strided_slice %282 {offsets = [0, 0], sizes = [8, 128], strides = [1, 1]} : vector<8x384xf32> to vector<8x128xf32>
    %286 = vector.extract_strided_slice %284 {offsets = [0, 0], sizes = [8, 128], strides = [1, 1]} : vector<8x384xf32> to vector<8x128xf32>
    %287 = arith.addf %285, %286 : vector<8x128xf32>
    %288 = arith.negf %287 : vector<8x128xf32>
    %289 = math.exp %288 : vector<8x128xf32>
    %cst_65 = arith.constant 1.000000e+00 : f32
    %290 = vector.broadcast %cst_65 : f32 to vector<8x128xf32>
    %291 = arith.addf %290, %289 : vector<8x128xf32>
    %292 = arith.divf %290, %291 : vector<8x128xf32>
    %293 = vector.extract_strided_slice %282 {offsets = [0, 128], sizes = [8, 128], strides = [1, 1]} : vector<8x384xf32> to vector<8x128xf32>
    %294 = vector.extract_strided_slice %284 {offsets = [0, 128], sizes = [8, 128], strides = [1, 1]} : vector<8x384xf32> to vector<8x128xf32>
    %295 = arith.addf %293, %294 : vector<8x128xf32>
    %296 = arith.negf %295 : vector<8x128xf32>
    %297 = math.exp %296 : vector<8x128xf32>
    %cst_66 = arith.constant 1.000000e+00 : f32
    %298 = vector.broadcast %cst_66 : f32 to vector<8x128xf32>
    %299 = arith.addf %298, %297 : vector<8x128xf32>
    %300 = arith.divf %298, %299 : vector<8x128xf32>
    %301 = vector.extract_strided_slice %282 {offsets = [0, 256], sizes = [8, 128], strides = [1, 1]} : vector<8x384xf32> to vector<8x128xf32>
    %302 = vector.extract_strided_slice %284 {offsets = [0, 256], sizes = [8, 128], strides = [1, 1]} : vector<8x384xf32> to vector<8x128xf32>
    %303 = vector.broadcast %4 : vector<1x128xf32> to vector<8x128xf32>
    %304 = arith.addf %302, %303 : vector<8x128xf32>
    %305 = arith.mulf %292, %304 : vector<8x128xf32>
    %306 = arith.addf %301, %305 : vector<8x128xf32>
    %307 = math.tanh %306 : vector<8x128xf32>
    %cst_67 = arith.constant 1.000000e+00 : f32
    %308 = vector.broadcast %cst_67 : f32 to vector<8x128xf32>
    %309 = arith.subf %308, %300 : vector<8x128xf32>
    %310 = arith.mulf %309, %307 : vector<8x128xf32>
    %311 = arith.mulf %300, %273 : vector<8x128xf32>
    %312 = arith.addf %310, %311 : vector<8x128xf32>
    %313 = arith.truncf %312 : vector<8x128xf32> to vector<8x128xbf16>
    %314 = arith.index_cast %c7_i32 : i32 to index
    %c0_68 = arith.constant 0 : index
    %c0_69 = arith.constant 0 : index
    %315 = vector.load %arg5[%314, %c0_68, %c0_69] : memref<8x8x128xbf16, #tpu.memory_space<vmem>>, vector<1x8x128xbf16>
    %316 = vector.shape_cast %315 : vector<1x8x128xbf16> to vector<8x128xbf16>
    %317 = vector.shape_cast %313 : vector<8x128xbf16> to vector<1x8x128xbf16>
    tpu.vector_store %arg5[%314, %c0_68, %c0_69], %317 {strides = array<i32>} : memref<8x8x128xbf16, #tpu.memory_space<vmem>>, vector<1x8x128xbf16>,
    %c8_i32 = arith.constant 8 : i32
    %c0_70 = arith.constant 0 : index
    %c0_71 = arith.constant 0 : index
    %318 = vector.load %arg7[%c0_70, %c0_71] : memref<8x128xf32, #tpu.memory_space<vmem>>, vector<8x128xf32>
    tpu.vector_store %arg7[%c0_70, %c0_71], %312 {strides = array<i32>} : memref<8x128xf32, #tpu.memory_space<vmem>>, vector<8x128xf32>,
    %c0_i32_72 = arith.constant 0 : i32
    %319 = arith.cmpi eq, %arg0, %c0_i32_72 : i32
    %320 = arith.extui %319 : i1 to i32
    %c0_i32_73 = arith.constant 0 : i32
    %321 = arith.cmpi ne, %320, %c0_i32_73 : i32
    scf.if %321 {
      %c0_74 = arith.constant 0 : index
      %c0_75 = arith.constant 0 : index
      %322 = vector.load %arg6[%c0_74, %c0_75] : memref<8x128xf32, #tpu.memory_space<vmem>>, vector<8x128xf32>
      tpu.vector_store %arg6[%c0_74, %c0_75], %312 {strides = array<i32>} : memref<8x128xf32, #tpu.memory_space<vmem>>, vector<8x128xf32>,
    } else {
    }
    return
  }
  func.func @transform_0(%arg0: i32) -> (i32, i32, i32) {
    %c0_i32 = arith.constant 0 : i32
    %c0_i32_0 = arith.constant 0 : i32
    %c0_i32_1 = arith.constant 0 : i32
    return %arg0, %c0_i32, %c0_i32_0 : i32, i32, i32
  }
  func.func @transform_1(%arg0: i32) -> (i32, i32) {
    %c0_i32 = arith.constant 0 : i32
    %c0_i32_0 = arith.constant 0 : i32
    %c0_i32_1 = arith.constant 0 : i32
    return %c0_i32, %c0_i32_0 : i32, i32
  }
  func.func @transform_2(%arg0: i32) -> (i32, i32) {
    %c0_i32 = arith.constant 0 : i32
    %c0_i32_0 = arith.constant 0 : i32
    %c0_i32_1 = arith.constant 0 : i32
    return %c0_i32, %c0_i32_0 : i32, i32
  }
  func.func @transform_3(%arg0: i32) -> (i32, i32) {
    %c0_i32 = arith.constant 0 : i32
    %c0_i32_0 = arith.constant 0 : i32
    %c0_i32_1 = arith.constant 0 : i32
    return %c0_i32, %c0_i32_0 : i32, i32
  }
  func.func @transform_4(%arg0: i32) -> (i32, i32, i32) {
    %c0_i32 = arith.constant 0 : i32
    %c0_i32_0 = arith.constant 0 : i32
    %c0_i32_1 = arith.constant 0 : i32
    return %arg0, %c0_i32, %c0_i32_0 : i32, i32, i32
  }
  func.func @transform_5(%arg0: i32) -> (i32, i32) {
    %c0_i32 = arith.constant 0 : i32
    %c0_i32_0 = arith.constant 0 : i32
    %c0_i32_1 = arith.constant 0 : i32
    return %c0_i32, %c0_i32_0 : i32, i32
  }
}

module attributes {stable_mosaic.version = 11 : i64} {
  func.func @_proj_logsoftmax_kernel(%arg0: i32, %arg1: memref<64x128xbf16, #tpu.memory_space<vmem>>, %arg2: memref<128x384xbf16, #tpu.memory_space<vmem>>, %arg3: memref<1x384xf32, #tpu.memory_space<vmem>>, %arg4: memref<64x384xf32, #tpu.memory_space<vmem>>) attributes {dimension_semantics = [#tpu.dimension_semantics<parallel>], iteration_bounds = array<i64: 1>, scalar_prefetch = 0 : i64, scratch_operands = 0 : i64, tpu.core_type = #tpu.core_type<tc>, window_params = [{transform_indices = @transform_0, window_bounds = array<i64: 64, 128>}, {pipeline_mode = #tpu.pipeline_mode<synchronous>, transform_indices = @transform_1, window_bounds = array<i64: 128, 384>}, {pipeline_mode = #tpu.pipeline_mode<synchronous>, transform_indices = @transform_2, window_bounds = array<i64: 1, 384>}, {transform_indices = @transform_3, window_bounds = array<i64: 64, 384>}]} {
    %c0 = arith.constant 0 : index
    %c0_0 = arith.constant 0 : index
    %0 = vector.load %arg1[%c0, %c0_0] : memref<64x128xbf16, #tpu.memory_space<vmem>>, vector<64x128xbf16>
    %c0_1 = arith.constant 0 : index
    %c0_2 = arith.constant 0 : index
    %1 = vector.load %arg2[%c0_1, %c0_2] : memref<128x384xbf16, #tpu.memory_space<vmem>>, vector<128x384xbf16>
    %cst = arith.constant dense<0.000000e+00> : vector<64x384xf32>
    %2 = tpu.matmul %0, %1, %cst {dimension_numbers = #tpu.dot_dimension_numbers<[1], [0], [0], [1], [0, 0, 1, 1], [], []>} : vector<64x128xbf16>, vector<128x384xbf16>, vector<64x384xf32> -> vector<64x384xf32>
    %c0_3 = arith.constant 0 : index
    %c0_4 = arith.constant 0 : index
    %3 = vector.load %arg3[%c0_3, %c0_4] : memref<1x384xf32, #tpu.memory_space<vmem>>, vector<1x384xf32>
    %4 = vector.broadcast %3 : vector<1x384xf32> to vector<64x384xf32>
    %5 = arith.addf %2, %4 : vector<64x384xf32>
    %cst_5 = arith.constant dense<0xFF800000> : vector<64xf32>
    %6 = vector.multi_reduction <maximumf>, %5, %cst_5 [1] : vector<64x384xf32> to vector<64xf32>
    %7 = vector.shape_cast %6 : vector<64xf32> to vector<64x1xf32>
    %8 = vector.broadcast %7 : vector<64x1xf32> to vector<64x384xf32>
    %9 = arith.subf %5, %8 : vector<64x384xf32>
    %10 = math.exp %9 : vector<64x384xf32>
    %cst_6 = arith.constant dense<0.000000e+00> : vector<64xf32>
    %11 = vector.multi_reduction <add>, %10, %cst_6 [1] : vector<64x384xf32> to vector<64xf32>
    %12 = vector.shape_cast %11 : vector<64xf32> to vector<64x1xf32>
    %13 = math.log %12 : vector<64x1xf32>
    %14 = vector.broadcast %13 : vector<64x1xf32> to vector<64x384xf32>
    %15 = arith.subf %9, %14 : vector<64x384xf32>
    %c0_7 = arith.constant 0 : index
    %c0_8 = arith.constant 0 : index
    %16 = vector.load %arg4[%c0_7, %c0_8] : memref<64x384xf32, #tpu.memory_space<vmem>>, vector<64x384xf32>
    tpu.vector_store %arg4[%c0_7, %c0_8], %15 {strides = array<i32>} : memref<64x384xf32, #tpu.memory_space<vmem>>, vector<64x384xf32>,
    return
  }
  func.func @transform_0(%arg0: i32) -> (i32, i32) {
    %c0_i32 = arith.constant 0 : i32
    %c0_i32_0 = arith.constant 0 : i32
    return %arg0, %c0_i32 : i32, i32
  }
  func.func @transform_1(%arg0: i32) -> (i32, i32) {
    %c0_i32 = arith.constant 0 : i32
    %c0_i32_0 = arith.constant 0 : i32
    %c0_i32_1 = arith.constant 0 : i32
    return %c0_i32, %c0_i32_0 : i32, i32
  }
  func.func @transform_2(%arg0: i32) -> (i32, i32) {
    %c0_i32 = arith.constant 0 : i32
    %c0_i32_0 = arith.constant 0 : i32
    %c0_i32_1 = arith.constant 0 : i32
    return %c0_i32, %c0_i32_0 : i32, i32
  }
  func.func @transform_3(%arg0: i32) -> (i32, i32) {
    %c0_i32 = arith.constant 0 : i32
    %c0_i32_0 = arith.constant 0 : i32
    return %arg0, %c0_i32 : i32, i32
  }
}

</mosaic_0001>

<llo_original>
// kernel: seq2seq_forward.3
$region0: #{seq2seq_forward.3}
  #allocation0 [shape = 'u32[]', space=smem, size = 0x4, offset = 0x4, fixed_abs, tag = 'smem constant byte address 0x4 - core index']
  #allocation1 [shape = 'u32[72,128]{1,0:T(1,128)}', space=vmem, size = 0x9000, scoped, tag = 'internal scratch']
  #allocation2 [shape = 'f32[8,128]{1,0:T(8,128)}', space=vmem, size = 0x1000, scoped, tag = 'scratch operand']
  %s0 = inlined_call_operand.vmem [shape: bf16[8,8,384], index: 0, kind: input, shape index: {}]
  %s1 = inlined_call_operand.vmem [shape: f32[8,128], index: 1, kind: input, shape index: {}]
  %s2 = inlined_call_operand.vmem [shape: bf16[128,384], index: 2, kind: input, shape index: {}]
  %s3 = inlined_call_operand.vmem [shape: f32[1,128], index: 3, kind: input, shape index: {}]
  %s4 = inlined_call_operand.hbm [shape: bf16[8,8,128], index: 4, kind: output, shape index: {0}]
  %s5 = inlined_call_operand.vmem [shape: f32[8,128], index: 5, kind: output, shape index: {1}]
  %6 = xla_tuple %s4, %s5
  %s7 = sld [smem:[#allocation0]]
  $region42: #{seq2seq_forward.3} parent=0
    _
  %s9 = ssub.s32 1, %s7
  %s10 = scalar_select 0, %s9, %s7
  $region1: #{seq2seq_forward.3} parent=0
    #allocation3 [shape = 'u8[16384]{0}', space=vmem, size = 0x4000, scoped, tag = 'output window, operand 0, single buffered']
    #allocation4 [shape = 's32[1]{0}', space=sflag, size = 0x4, scoped, tag = 'scoped memory for seq2seq_forward.3']
    %11 = vsyncpa [#allocation4], 0
    // Predicated region
    $region2: #{seq2seq_forward.3} parent=1 // pred_check
      _
    $region3: #{seq2seq_forward.3} parent=1 // pred_check_branch
      %13 = sbr.rel (0) target = $region5
    $region4: #{seq2seq_forward.3} parent=1 // pred_region
      _
    $region5: #{seq2seq_forward.3} parent=1 // pred_fallthru
      _
    // Predicated region
    $region6: #{seq2seq_forward.3} parent=1 // pred_check
      _
    $region7: #{seq2seq_forward.3} parent=1 // pred_check_branch
      %15 = sbr.rel (0) target = $region9
    $region8: #{seq2seq_forward.3} parent=1 // pred_region
      _
    $region9: #{seq2seq_forward.3} parent=1 // pred_fallthru
      _
    // Predicated region
    $region10: #{seq2seq_forward.3} parent=1 // pred_check
      _
    $region11: #{seq2seq_forward.3} parent=1 // pred_check_branch
      %17 = sbr.rel (0) target = $region13
    $region12: #{seq2seq_forward.3} parent=1 // pred_region
      _
    $region13: #{seq2seq_forward.3} parent=1 // pred_fallthru
      _
    // Predicated region
    $region14: #{seq2seq_forward.3} parent=1 // pred_check
      _
    $region15: #{seq2seq_forward.3} parent=1 // pred_check_branch
      %19 = sbr.rel (0) target = $region17
    $region16: #{seq2seq_forward.3} parent=1 // pred_region
      _
    $region17: #{seq2seq_forward.3} parent=1 // pred_fallthru
      _
    %p20 = scmp.eq.s32.totalorder 0, 0
    // Predicated region
    $region18: #{seq2seq_forward.3} parent=1 // pred_check
      %p21 = pneg %p20
    $region19: #{seq2seq_forward.3} parent=1 // pred_check_branch
      %23 = sbr.rel (%p21) target = $region21
    $region20: #{seq2seq_forward.3} parent=1 // pred_region
      %v24 = vld [vmem:[%s1] sm:$0xff]
      %25 = vst [vmem:[#allocation2] sm:$0xff] %v24
    $region21: #{seq2seq_forward.3} parent=1 // pred_fallthru
      _
    %v26 = vld [vmem:[%s2] sm:$0xff]
    %v27 = vld [vmem:[%s2 + $0x8] sm:$0xf]
    %v28 = vld [vmem:[%s2 + $0xc] sm:$0xff]
    %v29 = vld [vmem:[%s2 + $0x14] sm:$0xf]
    %v30 = vld [vmem:[%s2 + $0x18] sm:$0xff]
    %v31 = vld [vmem:[%s2 + $0x20] sm:$0xf]
    %v32 = vld [vmem:[%s2 + $0x24] sm:$0xff]
    %v33 = vld [vmem:[%s2 + $0x2c] sm:$0xf]
    %v34 = vld [vmem:[%s2 + $0x30] sm:$0xff]
    %v35 = vld [vmem:[%s2 + $0x38] sm:$0xf]
    %v36 = vld [vmem:[%s2 + $0x3c] sm:$0xff]
    %v37 = vld [vmem:[%s2 + $0x44] sm:$0xf]
    %v38 = vld [vmem:[%s2 + $0x48] sm:$0xff]
    %v39 = vld [vmem:[%s2 + $0x50] sm:$0xf]
    %v40 = vld [vmem:[%s2 + $0x54] sm:$0xff]
    %v41 = vld [vmem:[%s2 + $0x5c] sm:$0xf]
    %v42 = vld [vmem:[%s2 + $0x60] sm:$0xff]
    %v43 = vld [vmem:[%s2 + $0x68] sm:$0xf]
    %v44 = vld [vmem:[%s2 + $0x6c] sm:$0xff]
    %v45 = vld [vmem:[%s2 + $0x74] sm:$0xf]
    %v46 = vld [vmem:[%s2 + $0x78] sm:$0xff]
    %v47 = vld [vmem:[%s2 + $0x80] sm:$0xf]
    %v48 = vld [vmem:[%s2 + $0x84] sm:$0xff]
    %v49 = vld [vmem:[%s2 + $0x8c] sm:$0xf]
    %v50 = vld [vmem:[%s2 + $0x90] sm:$0xff]
    %v51 = vld [vmem:[%s2 + $0x98] sm:$0xf]
    %v52 = vld [vmem:[%s2 + $0x9c] sm:$0xff]
    %v53 = vld [vmem:[%s2 + $0xa4] sm:$0xf]
    %v54 = vld [vmem:[%s2 + $0xa8] sm:$0xff]
    %v55 = vld [vmem:[%s2 + $0xb0] sm:$0xf]
    %v56 = vld [vmem:[%s2 + $0xb4] sm:$0xff]
    %v57 = vld [vmem:[%s2 + $0xbc] sm:$0xf]
    %v58 = vld [vmem:[%s3] sm:$0x1]
    %v59 = vld [vmem:[#allocation2] sm:$0xff]
    %v60 = vld [vmem:[%s0] sm:$0xff]
    %v61 = vld [vmem:[%s0 + $0x8] sm:$0xf]
    %v62 = vunpack.c.l.bf16 %v60
    %v63 = vunpack.c.h.bf16 %v60
    %v64 = vunpack.c.l.bf16 %v61
    %v65 = vpack.c.bf16 %v59, %v59
    %v98 = vunpack.c.l.b16 %v26
    %v99 = vunpack.c.h.b16 %v26
    %v100 = vunpack.c.l.b16 %v27
    %v101 = vunpack.c.l.b16 %v28
    %v102 = vunpack.c.h.b16 %v28
    %v103 = vunpack.c.l.b16 %v29
    %v104 = vunpack.c.l.b16 %v30
    %v105 = vunpack.c.h.b16 %v30
    %v106 = vunpack.c.l.b16 %v31
    %v107 = vunpack.c.l.b16 %v32
    %v108 = vunpack.c.h.b16 %v32
    %v109 = vunpack.c.l.b16 %v33
    %v110 = vunpack.c.l.b16 %v34
    %v111 = vunpack.c.h.b16 %v34
    %v112 = vunpack.c.l.b16 %v35
    %v113 = vunpack.c.l.b16 %v36
    %v114 = vunpack.c.h.b16 %v36
    %v115 = vunpack.c.l.b16 %v37
    %v116 = vunpack.c.l.b16 %v38
    %v117 = vunpack.c.h.b16 %v38
    %v118 = vunpack.c.l.b16 %v39
    %v119 = vunpack.c.l.b16 %v40
    %v120 = vunpack.c.h.b16 %v40
    %v121 = vunpack.c.l.b16 %v41
    %v122 = vunpack.c.l.b16 %v42
    %v123 = vunpack.c.h.b16 %v42
    %v124 = vunpack.c.l.b16 %v43
    %v125 = vunpack.c.l.b16 %v44
    %v126 = vunpack.c.h.b16 %v44
    %v127 = vunpack.c.l.b16 %v45
    %v128 = vunpack.c.l.b16 %v46
    %v129 = vunpack.c.h.b16 %v46
    %v130 = vunpack.c.l.b16 %v47
    %v131 = vunpack.c.l.b16 %v48
    %v132 = vunpack.c.h.b16 %v48
    %v133 = vunpack.c.l.b16 %v49
    %v134 = vunpack.c.l.b16 %v50
    %v135 = vunpack.c.h.b16 %v50
    %v136 = vunpack.c.l.b16 %v51
    %v137 = vunpack.c.l.b16 %v52
    %v138 = vunpack.c.h.b16 %v52
    %v139 = vunpack.c.l.b16 %v53
    %v140 = vunpack.c.l.b16 %v54
    %v141 = vunpack.c.h.b16 %v54
    %v142 = vunpack.c.l.b16 %v55
    %v143 = vunpack.c.l.b16 %v56
    %v144 = vunpack.c.h.b16 %v56
    %v145 = vunpack.c.l.b16 %v57
    %v146 = vpack.c.b16 %v101, %v98
    %v147 = vpack.c.b16 %v102, %v99
    %v148 = vpack.c.b16 %v103, %v100
    %v149 = vpack.c.b16 %v107, %v104
    %v150 = vpack.c.b16 %v108, %v105
    %v151 = vpack.c.b16 %v109, %v106
    %v152 = vpack.c.b16 %v113, %v110
    %v153 = vpack.c.b16 %v114, %v111
    %v154 = vpack.c.b16 %v115, %v112
    %v155 = vpack.c.b16 %v119, %v116
    %v156 = vpack.c.b16 %v120, %v117
    %v157 = vpack.c.b16 %v121, %v118
    %v158 = vpack.c.b16 %v125, %v122
    %v159 = vpack.c.b16 %v126, %v123
    %v160 = vpack.c.b16 %v127, %v124
    %v161 = vpack.c.b16 %v131, %v128
    %v162 = vpack.c.b16 %v132, %v129
    %v163 = vpack.c.b16 %v133, %v130
    %v164 = vpack.c.b16 %v137, %v134
    %v165 = vpack.c.b16 %v138, %v135
    %v166 = vpack.c.b16 %v139, %v136
    %v167 = vpack.c.b16 %v143, %v140
    %v168 = vpack.c.b16 %v144, %v141
    %v169 = vpack.c.b16 %v145, %v142
    %194 = vmatpush.bf16.msra.mxu0 %v167
    %195 = vmatpush.bf16.msra.mxu0 %v164
    %196 = vmatpush.bf16.msra.mxu0 %v161
    %197 = vmatpush.bf16.msra.mxu0 %v158
    %198 = vmatpush.bf16.msra.mxu0 %v155
    %199 = vmatpush.bf16.msra.mxu0 %v152
    %200 = vmatpush.bf16.msra.mxu0 %v149
    %201 = vmatpush.bf16.msra.mxu0 %v146
    %202 = vmatmul.bf16.gmra.mxu0 %v65
    %v203 = vpop.f32.mrf.mxu0
    %v204 = vadd.f32 0.0, %v203
    %v205 = vpop.f32.mrf.mxu0
    %206 = vdwg.mxu0
    %207 = vmatpush.bf16.msra.mxu0 %v168
    %208 = vmatpush.bf16.msra.mxu0 %v165
    %209 = vmatpush.bf16.msra.mxu0 %v162
    %210 = vmatpush.bf16.msra.mxu0 %v159
    %211 = vmatpush.bf16.msra.mxu0 %v156
    %212 = vmatpush.bf16.msra.mxu0 %v153
    %213 = vmatpush.bf16.msra.mxu0 %v150
    %214 = vmatpush.bf16.msra.mxu0 %v147
    %215 = vmatmul.bf16.gmra.mxu0 %v65
    %v216 = vpop.f32.mrf.mxu0
    %v217 = vadd.f32 0.0, %v216
    %v218 = vpop.f32.mrf.mxu0
    %219 = vdwg.mxu0
    %220 = vmatpush.bf16.msra.mxu0 %v169
    %221 = vmatpush.bf16.msra.mxu0 %v166
    %222 = vmatpush.bf16.msra.mxu0 %v163
    %223 = vmatpush.bf16.msra.mxu0 %v160
    %224 = vmatpush.bf16.msra.mxu0 %v157
    %225 = vmatpush.bf16.msra.mxu0 %v154
    %226 = vmatpush.bf16.msra.mxu0 %v151
    %227 = vmatpush.bf16.msra.mxu0 %v148
    %228 = vmatmul.bf16.gmra.mxu0 %v65
    %v229 = vpop.f32.mrf.mxu0
    %v230 = vadd.f32 0.0, %v229
    %v231 = vpop.f32.mrf.mxu0
    %232 = vdwg.mxu0
    %v233 = vadd.f32 %v62, %v204
    %v234 = vxor.u32 %v233, 2147483648
    %v235 = vmul.f32 %v234, 1.442695
    %v236 = vpow.pop %v235
    %v237 = vadd.f32 %v236, 1.0
    %v238 = vrcp.pop %v237
    %v239 = vmul.f32 %v237, %v238
    %v240 = vsub.f32 1.0, %v239
    %v241 = vmul.f32 %v238, %v240
    %v242 = vadd.f32 %v238, %v241
    %vm243 = vweird.f32 %v237
    %vm244 = vweird.f32 %v238
    %vm245 = vmor %vm243, %vm244
    %v246 = vsel %vm245, %v238, %v242
    %v247 = vand.u32 2147483647, %v237
    %vm248 = vcmp.eq.f32.partialorder %v247, 8.507059e+37
    %v249 = vand.u32 %v237, 2147483648
    %v250 = vor.u32 1.1754944e-38, %v249
    %v251 = vsel %vm248, %v250, %v246
    %v252 = vmul.f32 1.0, %v251
    %v253 = vadd.f32 %v63, %v217
    %v254 = vxor.u32 %v253, 2147483648
    %v255 = vmul.f32 %v254, 1.442695
    %v256 = vpow.pop %v255
    %v257 = vadd.f32 %v256, 1.0
    %v258 = vrcp.pop %v257
    %v259 = vmul.f32 %v257, %v258
    %v260 = vsub.f32 1.0, %v259
    %v261 = vmul.f32 %v258, %v260
    %v262 = vadd.f32 %v258, %v261
    %vm263 = vweird.f32 %v257
    %vm264 = vweird.f32 %v258
    %vm265 = vmor %vm263, %vm264
    %v266 = vsel %vm265, %v258, %v262
    %v267 = vand.u32 2147483647, %v257
    %vm268 = vcmp.eq.f32.partialorder %v267, 8.507059e+37
    %v269 = vand.u32 %v257, 2147483648
    %v270 = vor.u32 1.1754944e-38, %v269
    %v271 = vsel %vm268, %v270, %v266
    %v272 = vmul.f32 1.0, %v271
    %v274 = vperm.slane %v58, 0
    %v276 = vadd.f32 %v230, %v274
    %v277 = vmul.f32 %v252, %v276
    %v278 = vadd.f32 %v64, %v277
    %v279 = vtanh.pop %v278
    %v280 = vsub.f32 1.0, %v272
    %v281 = vmul.f32 %v280, %v279
    %v282 = vmul.f32 %v272, %v59
    %v283 = vadd.f32 %v281, %v282
    %v284 = vpack.c.bf16 %v283, %v283
    %285 = vst [vmem:[#allocation3] sm:$0xf] %v284
    %s286 = scalar_lea.vmem %s0, 12
    %v287 = vld [vmem:[%s286] sm:$0xff]
    %v288 = vld [vmem:[%s286 + $0x8] sm:$0xf]
    %v289 = vunpack.c.l.bf16 %v287
    %v290 = vunpack.c.h.bf16 %v287
    %v291 = vunpack.c.l.bf16 %v288
    %292 = vmatpush.bf16.msra.mxu0 %v167
    %293 = vmatpush.bf16.msra.mxu0 %v164
    %294 = vmatpush.bf16.msra.mxu0 %v161
    %295 = vmatpush.bf16.msra.mxu0 %v158
    %296 = vmatpush.bf16.msra.mxu0 %v155
    %297 = vmatpush.bf16.msra.mxu0 %v152
    %298 = vmatpush.bf16.msra.mxu0 %v149
    %299 = vmatpush.bf16.msra.mxu0 %v146
    %300 = vmatmul.bf16.gmra.mxu0 %v284
    %v301 = vpop.f32.mrf.mxu0
    %v302 = vadd.f32 0.0, %v301
    %v303 = vpop.f32.mrf.mxu0
    %304 = vdwg.mxu0
    %305 = vmatpush.bf16.msra.mxu0 %v168
    %306 = vmatpush.bf16.msra.mxu0 %v165
    %307 = vmatpush.bf16.msra.mxu0 %v162
    %308 = vmatpush.bf16.msra.mxu0 %v159
    %309 = vmatpush.bf16.msra.mxu0 %v156
    %310 = vmatpush.bf16.msra.mxu0 %v153
    %311 = vmatpush.bf16.msra.mxu0 %v150
    %312 = vmatpush.bf16.msra.mxu0 %v147
    %313 = vmatmul.bf16.gmra.mxu0 %v284
    %v314 = vpop.f32.mrf.mxu0
    %v315 = vadd.f32 0.0, %v314
    %v316 = vpop.f32.mrf.mxu0
    %317 = vdwg.mxu0
    %318 = vmatpush.bf16.msra.mxu0 %v169
    %319 = vmatpush.bf16.msra.mxu0 %v166
    %320 = vmatpush.bf16.msra.mxu0 %v163
    %321 = vmatpush.bf16.msra.mxu0 %v160
    %322 = vmatpush.bf16.msra.mxu0 %v157
    %323 = vmatpush.bf16.msra.mxu0 %v154
    %324 = vmatpush.bf16.msra.mxu0 %v151
    %325 = vmatpush.bf16.msra.mxu0 %v148
    %326 = vmatmul.bf16.gmra.mxu0 %v284
    %v327 = vpop.f32.mrf.mxu0
    %v328 = vadd.f32 0.0, %v327
    %v329 = vpop.f32.mrf.mxu0
    %330 = vdwg.mxu0
    %v331 = vadd.f32 %v289, %v302
    %v332 = vxor.u32 %v331, 2147483648
    %v333 = vmul.f32 %v332, 1.442695
    %v334 = vpow.pop %v333
    %v335 = vadd.f32 %v334, 1.0
    %v336 = vrcp.pop %v335
    %v337 = vmul.f32 %v335, %v336
    %v338 = vsub.f32 1.0, %v337
    %v339 = vmul.f32 %v336, %v338
    %v340 = vadd.f32 %v336, %v339
    %vm341 = vweird.f32 %v335
    %vm342 = vweird.f32 %v336
    %vm343 = vmor %vm341, %vm342
    %v344 = vsel %vm343, %v336, %v340
    %v345 = vand.u32 2147483647, %v335
    %vm346 = vcmp.eq.f32.partialorder %v345, 8.507059e+37
    %v347 = vand.u32 %v335, 2147483648
    %v348 = vor.u32 1.1754944e-38, %v347
    %v349 = vsel %vm346, %v348, %v344
    %v350 = vmul.f32 1.0, %v349
    %v351 = vadd.f32 %v290, %v315
    %v352 = vxor.u32 %v351, 2147483648
    %v353 = vmul.f32 %v352, 1.442695
    %v354 = vpow.pop %v353
    %v355 = vadd.f32 %v354, 1.0
    %v356 = vrcp.pop %v355
    %v357 = vmul.f32 %v355, %v356
    %v358 = vsub.f32 1.0, %v357
    %v359 = vmul.f32 %v356, %v358
    %v360 = vadd.f32 %v356, %v359
    %vm361 = vweird.f32 %v355
    %vm362 = vweird.f32 %v356
    %vm363 = vmor %vm361, %vm362
    %v364 = vsel %vm363, %v356, %v360
    %v365 = vand.u32 2147483647, %v355
    %vm366 = vcmp.eq.f32.partialorder %v365, 8.507059e+37
    %v367 = vand.u32 %v355, 2147483648
    %v368 = vor.u32 1.1754944e-38, %v367
    %v369 = vsel %vm366, %v368, %v364
    %v370 = vmul.f32 1.0, %v369
    %v371 = vadd.f32 %v328, %v274
    %v372 = vmul.f32 %v350, %v371
    %v373 = vadd.f32 %v291, %v372
    %v374 = vtanh.pop %v373
    %v375 = vsub.f32 1.0, %v370
    %v376 = vmul.f32 %v375, %v374
    %v377 = vmul.f32 %v370, %v283
    %v378 = vadd.f32 %v376, %v377
    %v379 = vpack.c.bf16 %v378, %v378
    %s380 = scalar_lea.vmem [#allocation3], 4
    %381 = vst [vmem:[%s380] sm:$0xf] %v379
    %s382 = scalar_lea.vmem %s0, 24
    %v383 = vld [vmem:[%s382] sm:$0xff]
    %v384 = vld [vmem:[%s382 + $0x8] sm:$0xf]
    %v385 = vunpack.c.l.bf16 %v383
    %v386 = vunpack.c.h.bf16 %v383
    %v387 = vunpack.c.l.bf16 %v384
    %388 = vmatpush.bf16.msra.mxu0 %v167
    %389 = vmatpush.bf16.msra.mxu0 %v164
    %390 = vmatpush.bf16.msra.mxu0 %v161
    %391 = vmatpush.bf16.msra.mxu0 %v158
    %392 = vmatpush.bf16.msra.mxu0 %v155
    %393 = vmatpush.bf16.msra.mxu0 %v152
    %394 = vmatpush.bf16.msra.mxu0 %v149
    %395 = vmatpush.bf16.msra.mxu0 %v146
    %396 = vmatmul.bf16.gmra.mxu0 %v379
    %v397 = vpop.f32.mrf.mxu0
    %v398 = vadd.f32 0.0, %v397
    %v399 = vpop.f32.mrf.mxu0
    %400 = vdwg.mxu0
    %401 = vmatpush.bf16.msra.mxu0 %v168
    %402 = vmatpush.bf16.msra.mxu0 %v165
    %403 = vmatpush.bf16.msra.mxu0 %v162
    %404 = vmatpush.bf16.msra.mxu0 %v159
    %405 = vmatpush.bf16.msra.mxu0 %v156
    %406 = vmatpush.bf16.msra.mxu0 %v153
    %407 = vmatpush.bf16.msra.mxu0 %v150
    %408 = vmatpush.bf16.msra.mxu0 %v147
    %409 = vmatmul.bf16.gmra.mxu0 %v379
    %v410 = vpop.f32.mrf.mxu0
    %v411 = vadd.f32 0.0, %v410
    %v412 = vpop.f32.mrf.mxu0
    %413 = vdwg.mxu0
    %414 = vmatpush.bf16.msra.mxu0 %v169
    %415 = vmatpush.bf16.msra.mxu0 %v166
    %416 = vmatpush.bf16.msra.mxu0 %v163
    %417 = vmatpush.bf16.msra.mxu0 %v160
    %418 = vmatpush.bf16.msra.mxu0 %v157
    %419 = vmatpush.bf16.msra.mxu0 %v154
    %420 = vmatpush.bf16.msra.mxu0 %v151
    %421 = vmatpush.bf16.msra.mxu0 %v148
    %422 = vmatmul.bf16.gmra.mxu0 %v379
    %v423 = vpop.f32.mrf.mxu0
    %v424 = vadd.f32 0.0, %v423
    %v425 = vpop.f32.mrf.mxu0
    %426 = vdwg.mxu0
    %v427 = vadd.f32 %v385, %v398
    %v428 = vxor.u32 %v427, 2147483648
    %v429 = vmul.f32 %v428, 1.442695
    %v430 = vpow.pop %v429
    %v431 = vadd.f32 %v430, 1.0
    %v432 = vrcp.pop %v431
    %v433 = vmul.f32 %v431, %v432
    %v434 = vsub.f32 1.0, %v433
    %v435 = vmul.f32 %v432, %v434
    %v436 = vadd.f32 %v432, %v435
    %vm437 = vweird.f32 %v431
    %vm438 = vweird.f32 %v432
    %vm439 = vmor %vm437, %vm438
    %v440 = vsel %vm439, %v432, %v436
    %v441 = vand.u32 2147483647, %v431
    %vm442 = vcmp.eq.f32.partialorder %v441, 8.507059e+37
    %v443 = vand.u32 %v431, 2147483648
    %v444 = vor.u32 1.1754944e-38, %v443
    %v445 = vsel %vm442, %v444, %v440
    %v446 = vmul.f32 1.0, %v445
    %v447 = vadd.f32 %v386, %v411
    %v448 = vxor.u32 %v447, 2147483648
    %v449 = vmul.f32 %v448, 1.442695
    %v450 = vpow.pop %v449
    %v451 = vadd.f32 %v450, 1.0
    %v452 = vrcp.pop %v451
    %v453 = vmul.f32 %v451, %v452
    %v454 = vsub.f32 1.0, %v453
    %v455 = vmul.f32 %v452, %v454
    %v456 = vadd.f32 %v452, %v455
    %vm457 = vweird.f32 %v451
    %vm458 = vweird.f32 %v452
    %vm459 = vmor %vm457, %vm458
    %v460 = vsel %vm459, %v452, %v456
    %v461 = vand.u32 2147483647, %v451
    %vm462 = vcmp.eq.f32.partialorder %v461, 8.507059e+37
    %v463 = vand.u32 %v451, 2147483648
    %v464 = vor.u32 1.1754944e-38, %v463
    %v465 = vsel %vm462, %v464, %v460
    %v466 = vmul.f32 1.0, %v465
    %v467 = vadd.f32 %v424, %v274
    %v468 = vmul.f32 %v446, %v467
    %v469 = vadd.f32 %v387, %v468
    %v470 = vtanh.pop %v469
    %v471 = vsub.f32 1.0, %v466
    %v472 = vmul.f32 %v471, %v470
    %v473 = vmul.f32 %v466, %v378
    %v474 = vadd.f32 %v472, %v473
    %v475 = vpack.c.bf16 %v474, %v474
    %s476 = scalar_lea.vmem [#allocation3], 8
    %477 = vst [vmem:[%s476] sm:$0xf] %v475
    %s478 = scalar_lea.vmem %s0, 36
    %v479 = vld [vmem:[%s478] sm:$0xff]
    %v480 = vld [vmem:[%s478 + $0x8] sm:$0xf]
    %v481 = vunpack.c.l.bf16 %v479
    %v482 = vunpack.c.h.bf16 %v479
    %v483 = vunpack.c.l.bf16 %v480
    %484 = vmatpush.bf16.msra.mxu0 %v167
    %485 = vmatpush.bf16.msra.mxu0 %v164
    %486 = vmatpush.bf16.msra.mxu0 %v161
    %487 = vmatpush.bf16.msra.mxu0 %v158
    %488 = vmatpush.bf16.msra.mxu0 %v155
    %489 = vmatpush.bf16.msra.mxu0 %v152
    %490 = vmatpush.bf16.msra.mxu0 %v149
    %491 = vmatpush.bf16.msra.mxu0 %v146
    %492 = vmatmul.bf16.gmra.mxu0 %v475
    %v493 = vpop.f32.mrf.mxu0
    %v494 = vadd.f32 0.0, %v493
    %v495 = vpop.f32.mrf.mxu0
    %496 = vdwg.mxu0
    %497 = vmatpush.bf16.msra.mxu0 %v168
    %498 = vmatpush.bf16.msra.mxu0 %v165
    %499 = vmatpush.bf16.msra.mxu0 %v162
    %500 = vmatpush.bf16.msra.mxu0 %v159
    %501 = vmatpush.bf16.msra.mxu0 %v156
    %502 = vmatpush.bf16.msra.mxu0 %v153
    %503 = vmatpush.bf16.msra.mxu0 %v150
    %504 = vmatpush.bf16.msra.mxu0 %v147
    %505 = vmatmul.bf16.gmra.mxu0 %v475
    %v506 = vpop.f32.mrf.mxu0
    %v507 = vadd.f32 0.0, %v506
    %v508 = vpop.f32.mrf.mxu0
    %509 = vdwg.mxu0
    %510 = vmatpush.bf16.msra.mxu0 %v169
    %511 = vmatpush.bf16.msra.mxu0 %v166
    %512 = vmatpush.bf16.msra.mxu0 %v163
    %513 = vmatpush.bf16.msra.mxu0 %v160
    %514 = vmatpush.bf16.msra.mxu0 %v157
    %515 = vmatpush.bf16.msra.mxu0 %v154
    %516 = vmatpush.bf16.msra.mxu0 %v151
    %517 = vmatpush.bf16.msra.mxu0 %v148
    %518 = vmatmul.bf16.gmra.mxu0 %v475
    %v519 = vpop.f32.mrf.mxu0
    %v520 = vadd.f32 0.0, %v519
    %v521 = vpop.f32.mrf.mxu0
    %522 = vdwg.mxu0
    %v523 = vadd.f32 %v481, %v494
    %v524 = vxor.u32 %v523, 2147483648
    %v525 = vmul.f32 %v524, 1.442695
    %v526 = vpow.pop %v525
    %v527 = vadd.f32 %v526, 1.0
    %v528 = vrcp.pop %v527
    %v529 = vmul.f32 %v527, %v528
    %v530 = vsub.f32 1.0, %v529
    %v531 = vmul.f32 %v528, %v530
    %v532 = vadd.f32 %v528, %v531
    %vm533 = vweird.f32 %v527
    %vm534 = vweird.f32 %v528
    %vm535 = vmor %vm533, %vm534
    %v536 = vsel %vm535, %v528, %v532
    %v537 = vand.u32 2147483647, %v527
    %vm538 = vcmp.eq.f32.partialorder %v537, 8.507059e+37
    %v539 = vand.u32 %v527, 2147483648
    %v540 = vor.u32 1.1754944e-38, %v539
    %v541 = vsel %vm538, %v540, %v536
    %v542 = vmul.f32 1.0, %v541
    %v543 = vadd.f32 %v482, %v507
    %v544 = vxor.u32 %v543, 2147483648
    %v545 = vmul.f32 %v544, 1.442695
    %v546 = vpow.pop %v545
    %v547 = vadd.f32 %v546, 1.0
    %v548 = vrcp.pop %v547
    %v549 = vmul.f32 %v547, %v548
    %v550 = vsub.f32 1.0, %v549
    %v551 = vmul.f32 %v548, %v550
    %v552 = vadd.f32 %v548, %v551
    %vm553 = vweird.f32 %v547
    %vm554 = vweird.f32 %v548
    %vm555 = vmor %vm553, %vm554
    %v556 = vsel %vm555, %v548, %v552
    %v557 = vand.u32 2147483647, %v547
    %vm558 = vcmp.eq.f32.partialorder %v557, 8.507059e+37
    %v559 = vand.u32 %v547, 2147483648
    %v560 = vor.u32 1.1754944e-38, %v559
    %v561 = vsel %vm558, %v560, %v556
    %v562 = vmul.f32 1.0, %v561
    %v563 = vadd.f32 %v520, %v274
    %v564 = vmul.f32 %v542, %v563
    %v565 = vadd.f32 %v483, %v564
    %v566 = vtanh.pop %v565
    %v567 = vsub.f32 1.0, %v562
    %v568 = vmul.f32 %v567, %v566
    %v569 = vmul.f32 %v562, %v474
    %v570 = vadd.f32 %v568, %v569
    %v571 = vpack.c.bf16 %v570, %v570
    %s572 = scalar_lea.vmem [#allocation3], 12
    %573 = vst [vmem:[%s572] sm:$0xf] %v571
    %s574 = scalar_lea.vmem %s0, 48
    %v575 = vld [vmem:[%s574] sm:$0xff]
    %v576 = vld [vmem:[%s574 + $0x8] sm:$0xf]
    %v577 = vunpack.c.l.bf16 %v575
    %v578 = vunpack.c.h.bf16 %v575
    %v579 = vunpack.c.l.bf16 %v576
    %580 = vmatpush.bf16.msra.mxu0 %v167
    %581 = vmatpush.bf16.msra.mxu0 %v164
    %582 = vmatpush.bf16.msra.mxu0 %v161
    %583 = vmatpush.bf16.msra.mxu0 %v158
    %584 = vmatpush.bf16.msra.mxu0 %v155
    %585 = vmatpush.bf16.msra.mxu0 %v152
    %586 = vmatpush.bf16.msra.mxu0 %v149
    %587 = vmatpush.bf16.msra.mxu0 %v146
    %588 = vmatmul.bf16.gmra.mxu0 %v571
    %v589 = vpop.f32.mrf.mxu0
    %v590 = vadd.f32 0.0, %v589
    %v591 = vpop.f32.mrf.mxu0
    %592 = vdwg.mxu0
    %593 = vmatpush.bf16.msra.mxu0 %v168
    %594 = vmatpush.bf16.msra.mxu0 %v165
    %595 = vmatpush.bf16.msra.mxu0 %v162
    %596 = vmatpush.bf16.msra.mxu0 %v159
    %597 = vmatpush.bf16.msra.mxu0 %v156
    %598 = vmatpush.bf16.msra.mxu0 %v153
    %599 = vmatpush.bf16.msra.mxu0 %v150
    %600 = vmatpush.bf16.msra.mxu0 %v147
    %601 = vmatmul.bf16.gmra.mxu0 %v571
    %v602 = vpop.f32.mrf.mxu0
    %v603 = vadd.f32 0.0, %v602
    %v604 = vpop.f32.mrf.mxu0
    %605 = vdwg.mxu0
    %606 = vmatpush.bf16.msra.mxu0 %v169
    %607 = vmatpush.bf16.msra.mxu0 %v166
    %608 = vmatpush.bf16.msra.mxu0 %v163
    %609 = vmatpush.bf16.msra.mxu0 %v160
    %610 = vmatpush.bf16.msra.mxu0 %v157
    %611 = vmatpush.bf16.msra.mxu0 %v154
    %612 = vmatpush.bf16.msra.mxu0 %v151
    %613 = vmatpush.bf16.msra.mxu0 %v148
    %614 = vmatmul.bf16.gmra.mxu0 %v571
    %v615 = vpop.f32.mrf.mxu0
    %v616 = vadd.f32 0.0, %v615
    %v617 = vpop.f32.mrf.mxu0
    %618 = vdwg.mxu0
    %v619 = vadd.f32 %v577, %v590
    %v620 = vxor.u32 %v619, 2147483648
    %v621 = vmul.f32 %v620, 1.442695
    %v622 = vpow.pop %v621
    %v623 = vadd.f32 %v622, 1.0
    %v624 = vrcp.pop %v623
    %v625 = vmul.f32 %v623, %v624
    %v626 = vsub.f32 1.0, %v625
    %v627 = vmul.f32 %v624, %v626
    %v628 = vadd.f32 %v624, %v627
    %vm629 = vweird.f32 %v623
    %vm630 = vweird.f32 %v624
    %vm631 = vmor %vm629, %vm630
    %v632 = vsel %vm631, %v624, %v628
    %v633 = vand.u32 2147483647, %v623
    %vm634 = vcmp.eq.f32.partialorder %v633, 8.507059e+37
    %v635 = vand.u32 %v623, 2147483648
    %v636 = vor.u32 1.1754944e-38, %v635
    %v637 = vsel %vm634, %v636, %v632
    %v638 = vmul.f32 1.0, %v637
    %v639 = vadd.f32 %v578, %v603
    %v640 = vxor.u32 %v639, 2147483648
    %v641 = vmul.f32 %v640, 1.442695
    %v642 = vpow.pop %v641
    %v643 = vadd.f32 %v642, 1.0
    %v644 = vrcp.pop %v643
    %v645 = vmul.f32 %v643, %v644
    %v646 = vsub.f32 1.0, %v645
    %v647 = vmul.f32 %v644, %v646
    %v648 = vadd.f32 %v644, %v647
    %vm649 = vweird.f32 %v643
    %vm650 = vweird.f32 %v644
    %vm651 = vmor %vm649, %vm650
    %v652 = vsel %vm651, %v644, %v648
    %v653 = vand.u32 2147483647, %v643
    %vm654 = vcmp.eq.f32.partialorder %v653, 8.507059e+37
    %v655 = vand.u32 %v643, 2147483648
    %v656 = vor.u32 1.1754944e-38, %v655
    %v657 = vsel %vm654, %v656, %v652
    %v658 = vmul.f32 1.0, %v657
    %v659 = vadd.f32 %v616, %v274
    %v660 = vmul.f32 %v638, %v659
    %v661 = vadd.f32 %v579, %v660
    %v662 = vtanh.pop %v661
    %v663 = vsub.f32 1.0, %v658
    %v664 = vmul.f32 %v663, %v662
    %v665 = vmul.f32 %v658, %v570
    %v666 = vadd.f32 %v664, %v665
    %v667 = vpack.c.bf16 %v666, %v666
    %s668 = scalar_lea.vmem [#allocation3], 16
    %669 = vst [vmem:[%s668] sm:$0xf] %v667
    %s670 = scalar_lea.vmem %s0, 60
    %v671 = vld [vmem:[%s670] sm:$0xff]
    %v672 = vld [vmem:[%s670 + $0x8] sm:$0xf]
    %v673 = vunpack.c.l.bf16 %v671
    %v674 = vunpack.c.h.bf16 %v671
    %v675 = vunpack.c.l.bf16 %v672
    %676 = vmatpush.bf16.msra.mxu0 %v167
    %677 = vmatpush.bf16.msra.mxu0 %v164
    %678 = vmatpush.bf16.msra.mxu0 %v161
    %679 = vmatpush.bf16.msra.mxu0 %v158
    %680 = vmatpush.bf16.msra.mxu0 %v155
    %681 = vmatpush.bf16.msra.mxu0 %v152
    %682 = vmatpush.bf16.msra.mxu0 %v149
    %683 = vmatpush.bf16.msra.mxu0 %v146
    %684 = vmatmul.bf16.gmra.mxu0 %v667
    %v685 = vpop.f32.mrf.mxu0
    %v686 = vadd.f32 0.0, %v685
    %v687 = vpop.f32.mrf.mxu0
    %688 = vdwg.mxu0
    %689 = vmatpush.bf16.msra.mxu0 %v168
    %690 = vmatpush.bf16.msra.mxu0 %v165
    %691 = vmatpush.bf16.msra.mxu0 %v162
    %692 = vmatpush.bf16.msra.mxu0 %v159
    %693 = vmatpush.bf16.msra.mxu0 %v156
    %694 = vmatpush.bf16.msra.mxu0 %v153
    %695 = vmatpush.bf16.msra.mxu0 %v150
    %696 = vmatpush.bf16.msra.mxu0 %v147
    %697 = vmatmul.bf16.gmra.mxu0 %v667
    %v698 = vpop.f32.mrf.mxu0
    %v699 = vadd.f32 0.0, %v698
    %v700 = vpop.f32.mrf.mxu0
    %701 = vdwg.mxu0
    %702 = vmatpush.bf16.msra.mxu0 %v169
    %703 = vmatpush.bf16.msra.mxu0 %v166
    %704 = vmatpush.bf16.msra.mxu0 %v163
    %705 = vmatpush.bf16.msra.mxu0 %v160
    %706 = vmatpush.bf16.msra.mxu0 %v157
    %707 = vmatpush.bf16.msra.mxu0 %v154
    %708 = vmatpush.bf16.msra.mxu0 %v151
    %709 = vmatpush.bf16.msra.mxu0 %v148
    %710 = vmatmul.bf16.gmra.mxu0 %v667
    %v711 = vpop.f32.mrf.mxu0
    %v712 = vadd.f32 0.0, %v711
    %v713 = vpop.f32.mrf.mxu0
    %714 = vdwg.mxu0
    %v715 = vadd.f32 %v673, %v686
    %v716 = vxor.u32 %v715, 2147483648
    %v717 = vmul.f32 %v716, 1.442695
    %v718 = vpow.pop %v717
    %v719 = vadd.f32 %v718, 1.0
    %v720 = vrcp.pop %v719
    %v721 = vmul.f32 %v719, %v720
    %v722 = vsub.f32 1.0, %v721
    %v723 = vmul.f32 %v720, %v722
    %v724 = vadd.f32 %v720, %v723
    %vm725 = vweird.f32 %v719
    %vm726 = vweird.f32 %v720
    %vm727 = vmor %vm725, %vm726
    %v728 = vsel %vm727, %v720, %v724
    %v729 = vand.u32 2147483647, %v719
    %vm730 = vcmp.eq.f32.partialorder %v729, 8.507059e+37
    %v731 = vand.u32 %v719, 2147483648
    %v732 = vor.u32 1.1754944e-38, %v731
    %v733 = vsel %vm730, %v732, %v728
    %v734 = vmul.f32 1.0, %v733
    %v735 = vadd.f32 %v674, %v699
    %v736 = vxor.u32 %v735, 2147483648
    %v737 = vmul.f32 %v736, 1.442695
    %v738 = vpow.pop %v737
    %v739 = vadd.f32 %v738, 1.0
    %v740 = vrcp.pop %v739
    %v741 = vmul.f32 %v739, %v740
    %v742 = vsub.f32 1.0, %v741
    %v743 = vmul.f32 %v740, %v742
    %v744 = vadd.f32 %v740, %v743
    %vm745 = vweird.f32 %v739
    %vm746 = vweird.f32 %v740
    %vm747 = vmor %vm745, %vm746
    %v748 = vsel %vm747, %v740, %v744
    %v749 = vand.u32 2147483647, %v739
    %vm750 = vcmp.eq.f32.partialorder %v749, 8.507059e+37
    %v751 = vand.u32 %v739, 2147483648
    %v752 = vor.u32 1.1754944e-38, %v751
    %v753 = vsel %vm750, %v752, %v748
    %v754 = vmul.f32 1.0, %v753
    %v755 = vadd.f32 %v712, %v274
    %v756 = vmul.f32 %v734, %v755
    %v757 = vadd.f32 %v675, %v756
    %v758 = vtanh.pop %v757
    %v759 = vsub.f32 1.0, %v754
    %v760 = vmul.f32 %v759, %v758
    %v761 = vmul.f32 %v754, %v666
    %v762 = vadd.f32 %v760, %v761
    %v763 = vpack.c.bf16 %v762, %v762
    %s764 = scalar_lea.vmem [#allocation3], 20
    %765 = vst [vmem:[%s764] sm:$0xf] %v763
    %s766 = scalar_lea.vmem %s0, 72
    %v767 = vld [vmem:[%s766] sm:$0xff]
    %v768 = vld [vmem:[%s766 + $0x8] sm:$0xf]
    %v769 = vunpack.c.l.bf16 %v767
    %v770 = vunpack.c.h.bf16 %v767
    %v771 = vunpack.c.l.bf16 %v768
    %772 = vmatpush.bf16.msra.mxu0 %v167
    %773 = vmatpush.bf16.msra.mxu0 %v164
    %774 = vmatpush.bf16.msra.mxu0 %v161
    %775 = vmatpush.bf16.msra.mxu0 %v158
    %776 = vmatpush.bf16.msra.mxu0 %v155
    %777 = vmatpush.bf16.msra.mxu0 %v152
    %778 = vmatpush.bf16.msra.mxu0 %v149
    %779 = vmatpush.bf16.msra.mxu0 %v146
    %780 = vmatmul.bf16.gmra.mxu0 %v763
    %v781 = vpop.f32.mrf.mxu0
    %v782 = vadd.f32 0.0, %v781
    %v783 = vpop.f32.mrf.mxu0
    %784 = vdwg.mxu0
    %785 = vmatpush.bf16.msra.mxu0 %v168
    %786 = vmatpush.bf16.msra.mxu0 %v165
    %787 = vmatpush.bf16.msra.mxu0 %v162
    %788 = vmatpush.bf16.msra.mxu0 %v159
    %789 = vmatpush.bf16.msra.mxu0 %v156
    %790 = vmatpush.bf16.msra.mxu0 %v153
    %791 = vmatpush.bf16.msra.mxu0 %v150
    %792 = vmatpush.bf16.msra.mxu0 %v147
    %793 = vmatmul.bf16.gmra.mxu0 %v763
    %v794 = vpop.f32.mrf.mxu0
    %v795 = vadd.f32 0.0, %v794
    %v796 = vpop.f32.mrf.mxu0
    %797 = vdwg.mxu0
    %798 = vmatpush.bf16.msra.mxu0 %v169
    %799 = vmatpush.bf16.msra.mxu0 %v166
    %800 = vmatpush.bf16.msra.mxu0 %v163
    %801 = vmatpush.bf16.msra.mxu0 %v160
    %802 = vmatpush.bf16.msra.mxu0 %v157
    %803 = vmatpush.bf16.msra.mxu0 %v154
    %804 = vmatpush.bf16.msra.mxu0 %v151
    %805 = vmatpush.bf16.msra.mxu0 %v148
    %806 = vmatmul.bf16.gmra.mxu0 %v763
    %v807 = vpop.f32.mrf.mxu0
    %v808 = vadd.f32 0.0, %v807
    %v809 = vpop.f32.mrf.mxu0
    %810 = vdwg.mxu0
    %v811 = vadd.f32 %v769, %v782
    %v812 = vxor.u32 %v811, 2147483648
    %v813 = vmul.f32 %v812, 1.442695
    %v814 = vpow.pop %v813
    %v815 = vadd.f32 %v814, 1.0
    %v816 = vrcp.pop %v815
    %v817 = vmul.f32 %v815, %v816
    %v818 = vsub.f32 1.0, %v817
    %v819 = vmul.f32 %v816, %v818
    %v820 = vadd.f32 %v816, %v819
    %vm821 = vweird.f32 %v815
    %vm822 = vweird.f32 %v816
    %vm823 = vmor %vm821, %vm822
    %v824 = vsel %vm823, %v816, %v820
    %v825 = vand.u32 2147483647, %v815
    %vm826 = vcmp.eq.f32.partialorder %v825, 8.507059e+37
    %v827 = vand.u32 %v815, 2147483648
    %v828 = vor.u32 1.1754944e-38, %v827
    %v829 = vsel %vm826, %v828, %v824
    %v830 = vmul.f32 1.0, %v829
    %v831 = vadd.f32 %v770, %v795
    %v832 = vxor.u32 %v831, 2147483648
    %v833 = vmul.f32 %v832, 1.442695
    %v834 = vpow.pop %v833
    %v835 = vadd.f32 %v834, 1.0
    %v836 = vrcp.pop %v835
    %v837 = vmul.f32 %v835, %v836
    %v838 = vsub.f32 1.0, %v837
    %v839 = vmul.f32 %v836, %v838
    %v840 = vadd.f32 %v836, %v839
    %vm841 = vweird.f32 %v835
    %vm842 = vweird.f32 %v836
    %vm843 = vmor %vm841, %vm842
    %v844 = vsel %vm843, %v836, %v840
    %v845 = vand.u32 2147483647, %v835
    %vm846 = vcmp.eq.f32.partialorder %v845, 8.507059e+37
    %v847 = vand.u32 %v835, 2147483648
    %v848 = vor.u32 1.1754944e-38, %v847
    %v849 = vsel %vm846, %v848, %v844
    %v850 = vmul.f32 1.0, %v849
    %v851 = vadd.f32 %v808, %v274
    %v852 = vmul.f32 %v830, %v851
    %v853 = vadd.f32 %v771, %v852
    %v854 = vtanh.pop %v853
    %v855 = vsub.f32 1.0, %v850
    %v856 = vmul.f32 %v855, %v854
    %v857 = vmul.f32 %v850, %v762
    %v858 = vadd.f32 %v856, %v857
    %v859 = vpack.c.bf16 %v858, %v858
    %s860 = scalar_lea.vmem [#allocation3], 24
    %861 = vst [vmem:[%s860] sm:$0xf] %v859
    %s862 = scalar_lea.vmem %s0, 84
    %v863 = vld [vmem:[%s862] sm:$0xff]
    %v864 = vld [vmem:[%s862 + $0x8] sm:$0xf]
    %v865 = vunpack.c.l.bf16 %v863
    %v866 = vunpack.c.h.bf16 %v863
    %v867 = vunpack.c.l.bf16 %v864
    %868 = vmatpush.bf16.msra.mxu0 %v167
    %869 = vmatpush.bf16.msra.mxu0 %v164
    %870 = vmatpush.bf16.msra.mxu0 %v161
    %871 = vmatpush.bf16.msra.mxu0 %v158
    %872 = vmatpush.bf16.msra.mxu0 %v155
    %873 = vmatpush.bf16.msra.mxu0 %v152
    %874 = vmatpush.bf16.msra.mxu0 %v149
    %875 = vmatpush.bf16.msra.mxu0 %v146
    %876 = vmatmul.bf16.gmra.mxu0 %v859
    %v877 = vpop.f32.mrf.mxu0
    %v878 = vadd.f32 0.0, %v877
    %v879 = vpop.f32.mrf.mxu0
    %880 = vdwg.mxu0
    %881 = vmatpush.bf16.msra.mxu0 %v168
    %882 = vmatpush.bf16.msra.mxu0 %v165
    %883 = vmatpush.bf16.msra.mxu0 %v162
    %884 = vmatpush.bf16.msra.mxu0 %v159
    %885 = vmatpush.bf16.msra.mxu0 %v156
    %886 = vmatpush.bf16.msra.mxu0 %v153
    %887 = vmatpush.bf16.msra.mxu0 %v150
    %888 = vmatpush.bf16.msra.mxu0 %v147
    %889 = vmatmul.bf16.gmra.mxu0 %v859
    %v890 = vpop.f32.mrf.mxu0
    %v891 = vadd.f32 0.0, %v890
    %v892 = vpop.f32.mrf.mxu0
    %893 = vdwg.mxu0
    %894 = vmatpush.bf16.msra.mxu0 %v169
    %895 = vmatpush.bf16.msra.mxu0 %v166
    %896 = vmatpush.bf16.msra.mxu0 %v163
    %897 = vmatpush.bf16.msra.mxu0 %v160
    %898 = vmatpush.bf16.msra.mxu0 %v157
    %899 = vmatpush.bf16.msra.mxu0 %v154
    %900 = vmatpush.bf16.msra.mxu0 %v151
    %901 = vmatpush.bf16.msra.mxu0 %v148
    %902 = vmatmul.bf16.gmra.mxu0 %v859
    %v903 = vpop.f32.mrf.mxu0
    %v904 = vadd.f32 0.0, %v903
    %v905 = vpop.f32.mrf.mxu0
    %906 = vdwg.mxu0
    %v907 = vadd.f32 %v865, %v878
    %v908 = vxor.u32 %v907, 2147483648
    %v909 = vmul.f32 %v908, 1.442695
    %v910 = vpow.pop %v909
    %v911 = vadd.f32 %v910, 1.0
    %v912 = vrcp.pop %v911
    %v913 = vmul.f32 %v911, %v912
    %v914 = vsub.f32 1.0, %v913
    %v915 = vmul.f32 %v912, %v914
    %v916 = vadd.f32 %v912, %v915
    %vm917 = vweird.f32 %v911
    %vm918 = vweird.f32 %v912
    %vm919 = vmor %vm917, %vm918
    %v920 = vsel %vm919, %v912, %v916
    %v921 = vand.u32 2147483647, %v911
    %vm922 = vcmp.eq.f32.partialorder %v921, 8.507059e+37
    %v923 = vand.u32 %v911, 2147483648
    %v924 = vor.u32 1.1754944e-38, %v923
    %v925 = vsel %vm922, %v924, %v920
    %v926 = vmul.f32 1.0, %v925
    %v927 = vadd.f32 %v866, %v891
    %v928 = vxor.u32 %v927, 2147483648
    %v929 = vmul.f32 %v928, 1.442695
    %v930 = vpow.pop %v929
    %v931 = vadd.f32 %v930, 1.0
    %v932 = vrcp.pop %v931
    %v933 = vmul.f32 %v931, %v932
    %v934 = vsub.f32 1.0, %v933
    %v935 = vmul.f32 %v932, %v934
    %v936 = vadd.f32 %v932, %v935
    %vm937 = vweird.f32 %v931
    %vm938 = vweird.f32 %v932
    %vm939 = vmor %vm937, %vm938
    %v940 = vsel %vm939, %v932, %v936
    %v941 = vand.u32 2147483647, %v931
    %vm942 = vcmp.eq.f32.partialorder %v941, 8.507059e+37
    %v943 = vand.u32 %v931, 2147483648
    %v944 = vor.u32 1.1754944e-38, %v943
    %v945 = vsel %vm942, %v944, %v940
    %v946 = vmul.f32 1.0, %v945
    %v947 = vadd.f32 %v904, %v274
    %v948 = vmul.f32 %v926, %v947
    %v949 = vadd.f32 %v867, %v948
    %v950 = vtanh.pop %v949
    %v951 = vsub.f32 1.0, %v946
    %v952 = vmul.f32 %v951, %v950
    %v953 = vmul.f32 %v946, %v858
    %v954 = vadd.f32 %v952, %v953
    %v955 = vpack.c.bf16 %v954, %v954
    %s956 = scalar_lea.vmem [#allocation3], 28
    %957 = vst [vmem:[%s956] sm:$0xf] %v955
    %958 = vst [vmem:[#allocation2] sm:$0xff] %v954
    // Predicated region
    $region22: #{seq2seq_forward.3} parent=1 // pred_check
      %p959 = pneg %p20
    $region23: #{seq2seq_forward.3} parent=1 // pred_check_branch
      %961 = sbr.rel (%p959) target = $region25
    $region24: #{seq2seq_forward.3} parent=1 // pred_region
      %962 = vst [vmem:[%s5] sm:$0xff] %v954
    $region25: #{seq2seq_forward.3} parent=1 // pred_fallthru
      _
    // Predicated region
    $region26: #{seq2seq_forward.3} parent=1 // pred_check
      _
    $region27: #{seq2seq_forward.3} parent=1 // pred_check_branch
      %964 = sbr.rel (0) target = $region29
    $region28: #{seq2seq_forward.3} parent=1 // pred_region
      %966 = vsyncadd [#allocation4], 0
      %s967 = sshll.u32 [#allocation3], 4
      %s968 = int_to_ptr.vmem [resolvable:$true] %s967
      %s969 = sshll.u32 %s4, 4
      %s970 = int_to_ptr.hbm [resolvable:$true] %s969
      %975 = dma.vmem_to_hbm [thread:$0]  %s968, 512, %s970, [#allocation4], 64, 64, 4
    $region29: #{seq2seq_forward.3} parent=1 // pred_fallthru
      _
    // Predicated region
    $region30: #{seq2seq_forward.3} parent=1 // pred_check
      _
    $region31: #{seq2seq_forward.3} parent=1 // pred_check_branch
      %977 = sbr.rel (0) target = $region33
    $region32: #{seq2seq_forward.3} parent=1 // pred_region
      _
    $region33: #{seq2seq_forward.3} parent=1 // pred_fallthru
      _
    // Predicated region
    $region34: #{seq2seq_forward.3} parent=1 // pred_check
      _
    $region35: #{seq2seq_forward.3} parent=1 // pred_check_branch
      %979 = sbr.rel (0) target = $region37
    $region36: #{seq2seq_forward.3} parent=1 // pred_region
      %981 = dma.done [#allocation4], 512
    $region37: #{seq2seq_forward.3} parent=1 // pred_fallthru
      _
    // Predicated region
    $region38: #{seq2seq_forward.3} parent=1 // pred_check
      _
    $region39: #{seq2seq_forward.3} parent=1 // pred_check_branch
      %983 = sbr.rel (0) target = $region41
    $region40: #{seq2seq_forward.3} parent=1 // pred_region
      _
    $region41: #{seq2seq_forward.3} parent=1 // pred_fallthru
      _
    %984 = vsyncpa [#allocation4], 1

// kernel: seq2seq_forward.4
$region0: #{seq2seq_forward.4}
  #allocation0 [shape = 'u32[]', space=smem, size = 0x4, offset = 0x4, fixed_abs, tag = 'smem constant byte address 0x4 - core index']
  #allocation1 [shape = 'u32[72,128]{1,0:T(1,128)}', space=vmem, size = 0x9000, scoped, tag = 'internal scratch']
  #allocation2 [shape = 'f32[8,128]{1,0:T(8,128)}', space=vmem, size = 0x1000, scoped, tag = 'scratch operand']
  %s0 = inlined_call_operand.vmem [shape: bf16[8,8,384], index: 0, kind: input, shape index: {}]
  %s1 = inlined_call_operand.vmem [shape: f32[8,128], index: 1, kind: input, shape index: {}]
  %s2 = inlined_call_operand.vmem [shape: bf16[128,384], index: 2, kind: input, shape index: {}]
  %s3 = inlined_call_operand.vmem [shape: f32[1,128], index: 3, kind: input, shape index: {}]
  %s4 = inlined_call_operand.vmem [shape: bf16[8,8,128], index: 4, kind: output, shape index: {0}]
  %s5 = inlined_call_operand.hbm [shape: f32[8,128], index: 5, kind: output, shape index: {1}]
  %6 = xla_tuple %s4, %s5
  %s7 = sld [smem:[#allocation0]]
  $region42: #{seq2seq_forward.4} parent=0
    _
  %s9 = ssub.s32 1, %s7
  %s10 = scalar_select 0, %s9, %s7
  $region1: #{seq2seq_forward.4} parent=0
    #allocation3 [shape = 'u8[4096]{0}', space=vmem, size = 0x1000, scoped, tag = 'output window, operand 1, single buffered']
    #allocation4 [shape = 's32[1]{0}', space=sflag, size = 0x4, scoped, tag = 'scoped memory for seq2seq_forward.4']
    %11 = vsyncpa [#allocation4], 0
    // Predicated region
    $region2: #{seq2seq_forward.4} parent=1 // pred_check
      _
    $region3: #{seq2seq_forward.4} parent=1 // pred_check_branch
      %13 = sbr.rel (0) target = $region5
    $region4: #{seq2seq_forward.4} parent=1 // pred_region
      _
    $region5: #{seq2seq_forward.4} parent=1 // pred_fallthru
      _
    // Predicated region
    $region6: #{seq2seq_forward.4} parent=1 // pred_check
      _
    $region7: #{seq2seq_forward.4} parent=1 // pred_check_branch
      %15 = sbr.rel (0) target = $region9
    $region8: #{seq2seq_forward.4} parent=1 // pred_region
      _
    $region9: #{seq2seq_forward.4} parent=1 // pred_fallthru
      _
    // Predicated region
    $region10: #{seq2seq_forward.4} parent=1 // pred_check
      _
    $region11: #{seq2seq_forward.4} parent=1 // pred_check_branch
      %17 = sbr.rel (0) target = $region13
    $region12: #{seq2seq_forward.4} parent=1 // pred_region
      _
    $region13: #{seq2seq_forward.4} parent=1 // pred_fallthru
      _
    // Predicated region
    $region14: #{seq2seq_forward.4} parent=1 // pred_check
      _
    $region15: #{seq2seq_forward.4} parent=1 // pred_check_branch
      %19 = sbr.rel (0) target = $region17
    $region16: #{seq2seq_forward.4} parent=1 // pred_region
      _
    $region17: #{seq2seq_forward.4} parent=1 // pred_fallthru
      _
    %p20 = scmp.eq.s32.totalorder 0, 0
    // Predicated region
    $region18: #{seq2seq_forward.4} parent=1 // pred_check
      %p21 = pneg %p20
    $region19: #{seq2seq_forward.4} parent=1 // pred_check_branch
      %23 = sbr.rel (%p21) target = $region21
    $region20: #{seq2seq_forward.4} parent=1 // pred_region
      %v24 = vld [vmem:[%s1] sm:$0xff]
      %25 = vst [vmem:[#allocation2] sm:$0xff] %v24
    $region21: #{seq2seq_forward.4} parent=1 // pred_fallthru
      _
    %v26 = vld [vmem:[%s2] sm:$0xff]
    %v27 = vld [vmem:[%s2 + $0x8] sm:$0xf]
    %v28 = vld [vmem:[%s2 + $0xc] sm:$0xff]
    %v29 = vld [vmem:[%s2 + $0x14] sm:$0xf]
    %v30 = vld [vmem:[%s2 + $0x18] sm:$0xff]
    %v31 = vld [vmem:[%s2 + $0x20] sm:$0xf]
    %v32 = vld [vmem:[%s2 + $0x24] sm:$0xff]
    %v33 = vld [vmem:[%s2 + $0x2c] sm:$0xf]
    %v34 = vld [vmem:[%s2 + $0x30] sm:$0xff]
    %v35 = vld [vmem:[%s2 + $0x38] sm:$0xf]
    %v36 = vld [vmem:[%s2 + $0x3c] sm:$0xff]
    %v37 = vld [vmem:[%s2 + $0x44] sm:$0xf]
    %v38 = vld [vmem:[%s2 + $0x48] sm:$0xff]
    %v39 = vld [vmem:[%s2 + $0x50] sm:$0xf]
    %v40 = vld [vmem:[%s2 + $0x54] sm:$0xff]
    %v41 = vld [vmem:[%s2 + $0x5c] sm:$0xf]
    %v42 = vld [vmem:[%s2 + $0x60] sm:$0xff]
    %v43 = vld [vmem:[%s2 + $0x68] sm:$0xf]
    %v44 = vld [vmem:[%s2 + $0x6c] sm:$0xff]
    %v45 = vld [vmem:[%s2 + $0x74] sm:$0xf]
    %v46 = vld [vmem:[%s2 + $0x78] sm:$0xff]
    %v47 = vld [vmem:[%s2 + $0x80] sm:$0xf]
    %v48 = vld [vmem:[%s2 + $0x84] sm:$0xff]
    %v49 = vld [vmem:[%s2 + $0x8c] sm:$0xf]
    %v50 = vld [vmem:[%s2 + $0x90] sm:$0xff]
    %v51 = vld [vmem:[%s2 + $0x98] sm:$0xf]
    %v52 = vld [vmem:[%s2 + $0x9c] sm:$0xff]
    %v53 = vld [vmem:[%s2 + $0xa4] sm:$0xf]
    %v54 = vld [vmem:[%s2 + $0xa8] sm:$0xff]
    %v55 = vld [vmem:[%s2 + $0xb0] sm:$0xf]
    %v56 = vld [vmem:[%s2 + $0xb4] sm:$0xff]
    %v57 = vld [vmem:[%s2 + $0xbc] sm:$0xf]
    %v58 = vld [vmem:[%s3] sm:$0x1]
    %v59 = vld [vmem:[#allocation2] sm:$0xff]
    %v60 = vld [vmem:[%s0] sm:$0xff]
    %v61 = vld [vmem:[%s0 + $0x8] sm:$0xf]
    %v62 = vunpack.c.l.bf16 %v60
    %v63 = vunpack.c.h.bf16 %v60
    %v64 = vunpack.c.l.bf16 %v61
    %v65 = vpack.c.bf16 %v59, %v59
    %v98 = vunpack.c.l.b16 %v26
    %v99 = vunpack.c.h.b16 %v26
    %v100 = vunpack.c.l.b16 %v27
    %v101 = vunpack.c.l.b16 %v28
    %v102 = vunpack.c.h.b16 %v28
    %v103 = vunpack.c.l.b16 %v29
    %v104 = vunpack.c.l.b16 %v30
    %v105 = vunpack.c.h.b16 %v30
    %v106 = vunpack.c.l.b16 %v31
    %v107 = vunpack.c.l.b16 %v32
    %v108 = vunpack.c.h.b16 %v32
    %v109 = vunpack.c.l.b16 %v33
    %v110 = vunpack.c.l.b16 %v34
    %v111 = vunpack.c.h.b16 %v34
    %v112 = vunpack.c.l.b16 %v35
    %v113 = vunpack.c.l.b16 %v36
    %v114 = vunpack.c.h.b16 %v36
    %v115 = vunpack.c.l.b16 %v37
    %v116 = vunpack.c.l.b16 %v38
    %v117 = vunpack.c.h.b16 %v38
    %v118 = vunpack.c.l.b16 %v39
    %v119 = vunpack.c.l.b16 %v40
    %v120 = vunpack.c.h.b16 %v40
    %v121 = vunpack.c.l.b16 %v41
    %v122 = vunpack.c.l.b16 %v42
    %v123 = vunpack.c.h.b16 %v42
    %v124 = vunpack.c.l.b16 %v43
    %v125 = vunpack.c.l.b16 %v44
    %v126 = vunpack.c.h.b16 %v44
    %v127 = vunpack.c.l.b16 %v45
    %v128 = vunpack.c.l.b16 %v46
    %v129 = vunpack.c.h.b16 %v46
    %v130 = vunpack.c.l.b16 %v47
    %v131 = vunpack.c.l.b16 %v48
    %v132 = vunpack.c.h.b16 %v48
    %v133 = vunpack.c.l.b16 %v49
    %v134 = vunpack.c.l.b16 %v50
    %v135 = vunpack.c.h.b16 %v50
    %v136 = vunpack.c.l.b16 %v51
    %v137 = vunpack.c.l.b16 %v52
    %v138 = vunpack.c.h.b16 %v52
    %v139 = vunpack.c.l.b16 %v53
    %v140 = vunpack.c.l.b16 %v54
    %v141 = vunpack.c.h.b16 %v54
    %v142 = vunpack.c.l.b16 %v55
    %v143 = vunpack.c.l.b16 %v56
    %v144 = vunpack.c.h.b16 %v56
    %v145 = vunpack.c.l.b16 %v57
    %v146 = vpack.c.b16 %v101, %v98
    %v147 = vpack.c.b16 %v102, %v99
    %v148 = vpack.c.b16 %v103, %v100
    %v149 = vpack.c.b16 %v107, %v104
    %v150 = vpack.c.b16 %v108, %v105
    %v151 = vpack.c.b16 %v109, %v106
    %v152 = vpack.c.b16 %v113, %v110
    %v153 = vpack.c.b16 %v114, %v111
    %v154 = vpack.c.b16 %v115, %v112
    %v155 = vpack.c.b16 %v119, %v116
    %v156 = vpack.c.b16 %v120, %v117
    %v157 = vpack.c.b16 %v121, %v118
    %v158 = vpack.c.b16 %v125, %v122
    %v159 = vpack.c.b16 %v126, %v123
    %v160 = vpack.c.b16 %v127, %v124
    %v161 = vpack.c.b16 %v131, %v128
    %v162 = vpack.c.b16 %v132, %v129
    %v163 = vpack.c.b16 %v133, %v130
    %v164 = vpack.c.b16 %v137, %v134
    %v165 = vpack.c.b16 %v138, %v135
    %v166 = vpack.c.b16 %v139, %v136
    %v167 = vpack.c.b16 %v143, %v140
    %v168 = vpack.c.b16 %v144, %v141
    %v169 = vpack.c.b16 %v145, %v142
    %194 = vmatpush.bf16.msra.mxu0 %v167
    %195 = vmatpush.bf16.msra.mxu0 %v164
    %196 = vmatpush.bf16.msra.mxu0 %v161
    %197 = vmatpush.bf16.msra.mxu0 %v158
    %198 = vmatpush.bf16.msra.mxu0 %v155
    %199 = vmatpush.bf16.msra.mxu0 %v152
    %200 = vmatpush.bf16.msra.mxu0 %v149
    %201 = vmatpush.bf16.msra.mxu0 %v146
    %202 = vmatmul.bf16.gmra.mxu0 %v65
    %v203 = vpop.f32.mrf.mxu0
    %v204 = vadd.f32 0.0, %v203
    %v205 = vpop.f32.mrf.mxu0
    %206 = vdwg.mxu0
    %207 = vmatpush.bf16.msra.mxu0 %v168
    %208 = vmatpush.bf16.msra.mxu0 %v165
    %209 = vmatpush.bf16.msra.mxu0 %v162
    %210 = vmatpush.bf16.msra.mxu0 %v159
    %211 = vmatpush.bf16.msra.mxu0 %v156
    %212 = vmatpush.bf16.msra.mxu0 %v153
    %213 = vmatpush.bf16.msra.mxu0 %v150
    %214 = vmatpush.bf16.msra.mxu0 %v147
    %215 = vmatmul.bf16.gmra.mxu0 %v65
    %v216 = vpop.f32.mrf.mxu0
    %v217 = vadd.f32 0.0, %v216
    %v218 = vpop.f32.mrf.mxu0
    %219 = vdwg.mxu0
    %220 = vmatpush.bf16.msra.mxu0 %v169
    %221 = vmatpush.bf16.msra.mxu0 %v166
    %222 = vmatpush.bf16.msra.mxu0 %v163
    %223 = vmatpush.bf16.msra.mxu0 %v160
    %224 = vmatpush.bf16.msra.mxu0 %v157
    %225 = vmatpush.bf16.msra.mxu0 %v154
    %226 = vmatpush.bf16.msra.mxu0 %v151
    %227 = vmatpush.bf16.msra.mxu0 %v148
    %228 = vmatmul.bf16.gmra.mxu0 %v65
    %v229 = vpop.f32.mrf.mxu0
    %v230 = vadd.f32 0.0, %v229
    %v231 = vpop.f32.mrf.mxu0
    %232 = vdwg.mxu0
    %v233 = vadd.f32 %v62, %v204
    %v234 = vxor.u32 %v233, 2147483648
    %v235 = vmul.f32 %v234, 1.442695
    %v236 = vpow.pop %v235
    %v237 = vadd.f32 %v236, 1.0
    %v238 = vrcp.pop %v237
    %v239 = vmul.f32 %v237, %v238
    %v240 = vsub.f32 1.0, %v239
    %v241 = vmul.f32 %v238, %v240
    %v242 = vadd.f32 %v238, %v241
    %vm243 = vweird.f32 %v237
    %vm244 = vweird.f32 %v238
    %vm245 = vmor %vm243, %vm244
    %v246 = vsel %vm245, %v238, %v242
    %v247 = vand.u32 2147483647, %v237
    %vm248 = vcmp.eq.f32.partialorder %v247, 8.507059e+37
    %v249 = vand.u32 %v237, 2147483648
    %v250 = vor.u32 1.1754944e-38, %v249
    %v251 = vsel %vm248, %v250, %v246
    %v252 = vmul.f32 1.0, %v251
    %v253 = vadd.f32 %v63, %v217
    %v254 = vxor.u32 %v253, 2147483648
    %v255 = vmul.f32 %v254, 1.442695
    %v256 = vpow.pop %v255
    %v257 = vadd.f32 %v256, 1.0
    %v258 = vrcp.pop %v257
    %v259 = vmul.f32 %v257, %v258
    %v260 = vsub.f32 1.0, %v259
    %v261 = vmul.f32 %v258, %v260
    %v262 = vadd.f32 %v258, %v261
    %vm263 = vweird.f32 %v257
    %vm264 = vweird.f32 %v258
    %vm265 = vmor %vm263, %vm264
    %v266 = vsel %vm265, %v258, %v262
    %v267 = vand.u32 2147483647, %v257
    %vm268 = vcmp.eq.f32.partialorder %v267, 8.507059e+37
    %v269 = vand.u32 %v257, 2147483648
    %v270 = vor.u32 1.1754944e-38, %v269
    %v271 = vsel %vm268, %v270, %v266
    %v272 = vmul.f32 1.0, %v271
    %v274 = vperm.slane %v58, 0
    %v276 = vadd.f32 %v230, %v274
    %v277 = vmul.f32 %v252, %v276
    %v278 = vadd.f32 %v64, %v277
    %v279 = vtanh.pop %v278
    %v280 = vsub.f32 1.0, %v272
    %v281 = vmul.f32 %v280, %v279
    %v282 = vmul.f32 %v272, %v59
    %v283 = vadd.f32 %v281, %v282
    %v284 = vpack.c.bf16 %v283, %v283
    %285 = vst [vmem:[%s4] sm:$0xf] %v284
    %s286 = scalar_lea.vmem %s0, 12
    %v287 = vld [vmem:[%s286] sm:$0xff]
    %v288 = vld [vmem:[%s286 + $0x8] sm:$0xf]
    %v289 = vunpack.c.l.bf16 %v287
    %v290 = vunpack.c.h.bf16 %v287
    %v291 = vunpack.c.l.bf16 %v288
    %292 = vmatpush.bf16.msra.mxu0 %v167
    %293 = vmatpush.bf16.msra.mxu0 %v164
    %294 = vmatpush.bf16.msra.mxu0 %v161
    %295 = vmatpush.bf16.msra.mxu0 %v158
    %296 = vmatpush.bf16.msra.mxu0 %v155
    %297 = vmatpush.bf16.msra.mxu0 %v152
    %298 = vmatpush.bf16.msra.mxu0 %v149
    %299 = vmatpush.bf16.msra.mxu0 %v146
    %300 = vmatmul.bf16.gmra.mxu0 %v284
    %v301 = vpop.f32.mrf.mxu0
    %v302 = vadd.f32 0.0, %v301
    %v303 = vpop.f32.mrf.mxu0
    %304 = vdwg.mxu0
    %305 = vmatpush.bf16.msra.mxu0 %v168
    %306 = vmatpush.bf16.msra.mxu0 %v165
    %307 = vmatpush.bf16.msra.mxu0 %v162
    %308 = vmatpush.bf16.msra.mxu0 %v159
    %309 = vmatpush.bf16.msra.mxu0 %v156
    %310 = vmatpush.bf16.msra.mxu0 %v153
    %311 = vmatpush.bf16.msra.mxu0 %v150
    %312 = vmatpush.bf16.msra.mxu0 %v147
    %313 = vmatmul.bf16.gmra.mxu0 %v284
    %v314 = vpop.f32.mrf.mxu0
    %v315 = vadd.f32 0.0, %v314
    %v316 = vpop.f32.mrf.mxu0
    %317 = vdwg.mxu0
    %318 = vmatpush.bf16.msra.mxu0 %v169
    %319 = vmatpush.bf16.msra.mxu0 %v166
    %320 = vmatpush.bf16.msra.mxu0 %v163
    %321 = vmatpush.bf16.msra.mxu0 %v160
    %322 = vmatpush.bf16.msra.mxu0 %v157
    %323 = vmatpush.bf16.msra.mxu0 %v154
    %324 = vmatpush.bf16.msra.mxu0 %v151
    %325 = vmatpush.bf16.msra.mxu0 %v148
    %326 = vmatmul.bf16.gmra.mxu0 %v284
    %v327 = vpop.f32.mrf.mxu0
    %v328 = vadd.f32 0.0, %v327
    %v329 = vpop.f32.mrf.mxu0
    %330 = vdwg.mxu0
    %v331 = vadd.f32 %v289, %v302
    %v332 = vxor.u32 %v331, 2147483648
    %v333 = vmul.f32 %v332, 1.442695
    %v334 = vpow.pop %v333
    %v335 = vadd.f32 %v334, 1.0
    %v336 = vrcp.pop %v335
    %v337 = vmul.f32 %v335, %v336
    %v338 = vsub.f32 1.0, %v337
    %v339 = vmul.f32 %v336, %v338
    %v340 = vadd.f32 %v336, %v339
    %vm341 = vweird.f32 %v335
    %vm342 = vweird.f32 %v336
    %vm343 = vmor %vm341, %vm342
    %v344 = vsel %vm343, %v336, %v340
    %v345 = vand.u32 2147483647, %v335
    %vm346 = vcmp.eq.f32.partialorder %v345, 8.507059e+37
    %v347 = vand.u32 %v335, 2147483648
    %v348 = vor.u32 1.1754944e-38, %v347
    %v349 = vsel %vm346, %v348, %v344
    %v350 = vmul.f32 1.0, %v349
    %v351 = vadd.f32 %v290, %v315
    %v352 = vxor.u32 %v351, 2147483648
    %v353 = vmul.f32 %v352, 1.442695
    %v354 = vpow.pop %v353
    %v355 = vadd.f32 %v354, 1.0
    %v356 = vrcp.pop %v355
    %v357 = vmul.f32 %v355, %v356
    %v358 = vsub.f32 1.0, %v357
    %v359 = vmul.f32 %v356, %v358
    %v360 = vadd.f32 %v356, %v359
    %vm361 = vweird.f32 %v355
    %vm362 = vweird.f32 %v356
    %vm363 = vmor %vm361, %vm362
    %v364 = vsel %vm363, %v356, %v360
    %v365 = vand.u32 2147483647, %v355
    %vm366 = vcmp.eq.f32.partialorder %v365, 8.507059e+37
    %v367 = vand.u32 %v355, 2147483648
    %v368 = vor.u32 1.1754944e-38, %v367
    %v369 = vsel %vm366, %v368, %v364
    %v370 = vmul.f32 1.0, %v369
    %v371 = vadd.f32 %v328, %v274
    %v372 = vmul.f32 %v350, %v371
    %v373 = vadd.f32 %v291, %v372
    %v374 = vtanh.pop %v373
    %v375 = vsub.f32 1.0, %v370
    %v376 = vmul.f32 %v375, %v374
    %v377 = vmul.f32 %v370, %v283
    %v378 = vadd.f32 %v376, %v377
    %v379 = vpack.c.bf16 %v378, %v378
    %s380 = scalar_lea.vmem %s4, 4
    %381 = vst [vmem:[%s380] sm:$0xf] %v379
    %s382 = scalar_lea.vmem %s0, 24
    %v383 = vld [vmem:[%s382] sm:$0xff]
    %v384 = vld [vmem:[%s382 + $0x8] sm:$0xf]
    %v385 = vunpack.c.l.bf16 %v383
    %v386 = vunpack.c.h.bf16 %v383
    %v387 = vunpack.c.l.bf16 %v384
    %388 = vmatpush.bf16.msra.mxu0 %v167
    %389 = vmatpush.bf16.msra.mxu0 %v164
    %390 = vmatpush.bf16.msra.mxu0 %v161
    %391 = vmatpush.bf16.msra.mxu0 %v158
    %392 = vmatpush.bf16.msra.mxu0 %v155
    %393 = vmatpush.bf16.msra.mxu0 %v152
    %394 = vmatpush.bf16.msra.mxu0 %v149
    %395 = vmatpush.bf16.msra.mxu0 %v146
    %396 = vmatmul.bf16.gmra.mxu0 %v379
    %v397 = vpop.f32.mrf.mxu0
    %v398 = vadd.f32 0.0, %v397
    %v399 = vpop.f32.mrf.mxu0
    %400 = vdwg.mxu0
    %401 = vmatpush.bf16.msra.mxu0 %v168
    %402 = vmatpush.bf16.msra.mxu0 %v165
    %403 = vmatpush.bf16.msra.mxu0 %v162
    %404 = vmatpush.bf16.msra.mxu0 %v159
    %405 = vmatpush.bf16.msra.mxu0 %v156
    %406 = vmatpush.bf16.msra.mxu0 %v153
    %407 = vmatpush.bf16.msra.mxu0 %v150
    %408 = vmatpush.bf16.msra.mxu0 %v147
    %409 = vmatmul.bf16.gmra.mxu0 %v379
    %v410 = vpop.f32.mrf.mxu0
    %v411 = vadd.f32 0.0, %v410
    %v412 = vpop.f32.mrf.mxu0
    %413 = vdwg.mxu0
    %414 = vmatpush.bf16.msra.mxu0 %v169
    %415 = vmatpush.bf16.msra.mxu0 %v166
    %416 = vmatpush.bf16.msra.mxu0 %v163
    %417 = vmatpush.bf16.msra.mxu0 %v160
    %418 = vmatpush.bf16.msra.mxu0 %v157
    %419 = vmatpush.bf16.msra.mxu0 %v154
    %420 = vmatpush.bf16.msra.mxu0 %v151
    %421 = vmatpush.bf16.msra.mxu0 %v148
    %422 = vmatmul.bf16.gmra.mxu0 %v379
    %v423 = vpop.f32.mrf.mxu0
    %v424 = vadd.f32 0.0, %v423
    %v425 = vpop.f32.mrf.mxu0
    %426 = vdwg.mxu0
    %v427 = vadd.f32 %v385, %v398
    %v428 = vxor.u32 %v427, 2147483648
    %v429 = vmul.f32 %v428, 1.442695
    %v430 = vpow.pop %v429
    %v431 = vadd.f32 %v430, 1.0
    %v432 = vrcp.pop %v431
    %v433 = vmul.f32 %v431, %v432
    %v434 = vsub.f32 1.0, %v433
    %v435 = vmul.f32 %v432, %v434
    %v436 = vadd.f32 %v432, %v435
    %vm437 = vweird.f32 %v431
    %vm438 = vweird.f32 %v432
    %vm439 = vmor %vm437, %vm438
    %v440 = vsel %vm439, %v432, %v436
    %v441 = vand.u32 2147483647, %v431
    %vm442 = vcmp.eq.f32.partialorder %v441, 8.507059e+37
    %v443 = vand.u32 %v431, 2147483648
    %v444 = vor.u32 1.1754944e-38, %v443
    %v445 = vsel %vm442, %v444, %v440
    %v446 = vmul.f32 1.0, %v445
    %v447 = vadd.f32 %v386, %v411
    %v448 = vxor.u32 %v447, 2147483648
    %v449 = vmul.f32 %v448, 1.442695
    %v450 = vpow.pop %v449
    %v451 = vadd.f32 %v450, 1.0
    %v452 = vrcp.pop %v451
    %v453 = vmul.f32 %v451, %v452
    %v454 = vsub.f32 1.0, %v453
    %v455 = vmul.f32 %v452, %v454
    %v456 = vadd.f32 %v452, %v455
    %vm457 = vweird.f32 %v451
    %vm458 = vweird.f32 %v452
    %vm459 = vmor %vm457, %vm458
    %v460 = vsel %vm459, %v452, %v456
    %v461 = vand.u32 2147483647, %v451
    %vm462 = vcmp.eq.f32.partialorder %v461, 8.507059e+37
    %v463 = vand.u32 %v451, 2147483648
    %v464 = vor.u32 1.1754944e-38, %v463
    %v465 = vsel %vm462, %v464, %v460
    %v466 = vmul.f32 1.0, %v465
    %v467 = vadd.f32 %v424, %v274
    %v468 = vmul.f32 %v446, %v467
    %v469 = vadd.f32 %v387, %v468
    %v470 = vtanh.pop %v469
    %v471 = vsub.f32 1.0, %v466
    %v472 = vmul.f32 %v471, %v470
    %v473 = vmul.f32 %v466, %v378
    %v474 = vadd.f32 %v472, %v473
    %v475 = vpack.c.bf16 %v474, %v474
    %s476 = scalar_lea.vmem %s4, 8
    %477 = vst [vmem:[%s476] sm:$0xf] %v475
    %s478 = scalar_lea.vmem %s0, 36
    %v479 = vld [vmem:[%s478] sm:$0xff]
    %v480 = vld [vmem:[%s478 + $0x8] sm:$0xf]
    %v481 = vunpack.c.l.bf16 %v479
    %v482 = vunpack.c.h.bf16 %v479
    %v483 = vunpack.c.l.bf16 %v480
    %484 = vmatpush.bf16.msra.mxu0 %v167
    %485 = vmatpush.bf16.msra.mxu0 %v164
    %486 = vmatpush.bf16.msra.mxu0 %v161
    %487 = vmatpush.bf16.msra.mxu0 %v158
    %488 = vmatpush.bf16.msra.mxu0 %v155
    %489 = vmatpush.bf16.msra.mxu0 %v152
    %490 = vmatpush.bf16.msra.mxu0 %v149
    %491 = vmatpush.bf16.msra.mxu0 %v146
    %492 = vmatmul.bf16.gmra.mxu0 %v475
    %v493 = vpop.f32.mrf.mxu0
    %v494 = vadd.f32 0.0, %v493
    %v495 = vpop.f32.mrf.mxu0
    %496 = vdwg.mxu0
    %497 = vmatpush.bf16.msra.mxu0 %v168
    %498 = vmatpush.bf16.msra.mxu0 %v165
    %499 = vmatpush.bf16.msra.mxu0 %v162
    %500 = vmatpush.bf16.msra.mxu0 %v159
    %501 = vmatpush.bf16.msra.mxu0 %v156
    %502 = vmatpush.bf16.msra.mxu0 %v153
    %503 = vmatpush.bf16.msra.mxu0 %v150
    %504 = vmatpush.bf16.msra.mxu0 %v147
    %505 = vmatmul.bf16.gmra.mxu0 %v475
    %v506 = vpop.f32.mrf.mxu0
    %v507 = vadd.f32 0.0, %v506
    %v508 = vpop.f32.mrf.mxu0
    %509 = vdwg.mxu0
    %510 = vmatpush.bf16.msra.mxu0 %v169
    %511 = vmatpush.bf16.msra.mxu0 %v166
    %512 = vmatpush.bf16.msra.mxu0 %v163
    %513 = vmatpush.bf16.msra.mxu0 %v160
    %514 = vmatpush.bf16.msra.mxu0 %v157
    %515 = vmatpush.bf16.msra.mxu0 %v154
    %516 = vmatpush.bf16.msra.mxu0 %v151
    %517 = vmatpush.bf16.msra.mxu0 %v148
    %518 = vmatmul.bf16.gmra.mxu0 %v475
    %v519 = vpop.f32.mrf.mxu0
    %v520 = vadd.f32 0.0, %v519
    %v521 = vpop.f32.mrf.mxu0
    %522 = vdwg.mxu0
    %v523 = vadd.f32 %v481, %v494
    %v524 = vxor.u32 %v523, 2147483648
    %v525 = vmul.f32 %v524, 1.442695
    %v526 = vpow.pop %v525
    %v527 = vadd.f32 %v526, 1.0
    %v528 = vrcp.pop %v527
    %v529 = vmul.f32 %v527, %v528
    %v530 = vsub.f32 1.0, %v529
    %v531 = vmul.f32 %v528, %v530
    %v532 = vadd.f32 %v528, %v531
    %vm533 = vweird.f32 %v527
    %vm534 = vweird.f32 %v528
    %vm535 = vmor %vm533, %vm534
    %v536 = vsel %vm535, %v528, %v532
    %v537 = vand.u32 2147483647, %v527
    %vm538 = vcmp.eq.f32.partialorder %v537, 8.507059e+37
    %v539 = vand.u32 %v527, 2147483648
    %v540 = vor.u32 1.1754944e-38, %v539
    %v541 = vsel %vm538, %v540, %v536
    %v542 = vmul.f32 1.0, %v541
    %v543 = vadd.f32 %v482, %v507
    %v544 = vxor.u32 %v543, 2147483648
    %v545 = vmul.f32 %v544, 1.442695
    %v546 = vpow.pop %v545
    %v547 = vadd.f32 %v546, 1.0
    %v548 = vrcp.pop %v547
    %v549 = vmul.f32 %v547, %v548
    %v550 = vsub.f32 1.0, %v549
    %v551 = vmul.f32 %v548, %v550
    %v552 = vadd.f32 %v548, %v551
    %vm553 = vweird.f32 %v547
    %vm554 = vweird.f32 %v548
    %vm555 = vmor %vm553, %vm554
    %v556 = vsel %vm555, %v548, %v552
    %v557 = vand.u32 2147483647, %v547
    %vm558 = vcmp.eq.f32.partialorder %v557, 8.507059e+37
    %v559 = vand.u32 %v547, 2147483648
    %v560 = vor.u32 1.1754944e-38, %v559
    %v561 = vsel %vm558, %v560, %v556
    %v562 = vmul.f32 1.0, %v561
    %v563 = vadd.f32 %v520, %v274
    %v564 = vmul.f32 %v542, %v563
    %v565 = vadd.f32 %v483, %v564
    %v566 = vtanh.pop %v565
    %v567 = vsub.f32 1.0, %v562
    %v568 = vmul.f32 %v567, %v566
    %v569 = vmul.f32 %v562, %v474
    %v570 = vadd.f32 %v568, %v569
    %v571 = vpack.c.bf16 %v570, %v570
    %s572 = scalar_lea.vmem %s4, 12
    %573 = vst [vmem:[%s572] sm:$0xf] %v571
    %s574 = scalar_lea.vmem %s0, 48
    %v575 = vld [vmem:[%s574] sm:$0xff]
    %v576 = vld [vmem:[%s574 + $0x8] sm:$0xf]
    %v577 = vunpack.c.l.bf16 %v575
    %v578 = vunpack.c.h.bf16 %v575
    %v579 = vunpack.c.l.bf16 %v576
    %580 = vmatpush.bf16.msra.mxu0 %v167
    %581 = vmatpush.bf16.msra.mxu0 %v164
    %582 = vmatpush.bf16.msra.mxu0 %v161
    %583 = vmatpush.bf16.msra.mxu0 %v158
    %584 = vmatpush.bf16.msra.mxu0 %v155
    %585 = vmatpush.bf16.msra.mxu0 %v152
    %586 = vmatpush.bf16.msra.mxu0 %v149
    %587 = vmatpush.bf16.msra.mxu0 %v146
    %588 = vmatmul.bf16.gmra.mxu0 %v571
    %v589 = vpop.f32.mrf.mxu0
    %v590 = vadd.f32 0.0, %v589
    %v591 = vpop.f32.mrf.mxu0
    %592 = vdwg.mxu0
    %593 = vmatpush.bf16.msra.mxu0 %v168
    %594 = vmatpush.bf16.msra.mxu0 %v165
    %595 = vmatpush.bf16.msra.mxu0 %v162
    %596 = vmatpush.bf16.msra.mxu0 %v159
    %597 = vmatpush.bf16.msra.mxu0 %v156
    %598 = vmatpush.bf16.msra.mxu0 %v153
    %599 = vmatpush.bf16.msra.mxu0 %v150
    %600 = vmatpush.bf16.msra.mxu0 %v147
    %601 = vmatmul.bf16.gmra.mxu0 %v571
    %v602 = vpop.f32.mrf.mxu0
    %v603 = vadd.f32 0.0, %v602
    %v604 = vpop.f32.mrf.mxu0
    %605 = vdwg.mxu0
    %606 = vmatpush.bf16.msra.mxu0 %v169
    %607 = vmatpush.bf16.msra.mxu0 %v166
    %608 = vmatpush.bf16.msra.mxu0 %v163
    %609 = vmatpush.bf16.msra.mxu0 %v160
    %610 = vmatpush.bf16.msra.mxu0 %v157
    %611 = vmatpush.bf16.msra.mxu0 %v154
    %612 = vmatpush.bf16.msra.mxu0 %v151
    %613 = vmatpush.bf16.msra.mxu0 %v148
    %614 = vmatmul.bf16.gmra.mxu0 %v571
    %v615 = vpop.f32.mrf.mxu0
    %v616 = vadd.f32 0.0, %v615
    %v617 = vpop.f32.mrf.mxu0
    %618 = vdwg.mxu0
    %v619 = vadd.f32 %v577, %v590
    %v620 = vxor.u32 %v619, 2147483648
    %v621 = vmul.f32 %v620, 1.442695
    %v622 = vpow.pop %v621
    %v623 = vadd.f32 %v622, 1.0
    %v624 = vrcp.pop %v623
    %v625 = vmul.f32 %v623, %v624
    %v626 = vsub.f32 1.0, %v625
    %v627 = vmul.f32 %v624, %v626
    %v628 = vadd.f32 %v624, %v627
    %vm629 = vweird.f32 %v623
    %vm630 = vweird.f32 %v624
    %vm631 = vmor %vm629, %vm630
    %v632 = vsel %vm631, %v624, %v628
    %v633 = vand.u32 2147483647, %v623
    %vm634 = vcmp.eq.f32.partialorder %v633, 8.507059e+37
    %v635 = vand.u32 %v623, 2147483648
    %v636 = vor.u32 1.1754944e-38, %v635
    %v637 = vsel %vm634, %v636, %v632
    %v638 = vmul.f32 1.0, %v637
    %v639 = vadd.f32 %v578, %v603
    %v640 = vxor.u32 %v639, 2147483648
    %v641 = vmul.f32 %v640, 1.442695
    %v642 = vpow.pop %v641
    %v643 = vadd.f32 %v642, 1.0
    %v644 = vrcp.pop %v643
    %v645 = vmul.f32 %v643, %v644
    %v646 = vsub.f32 1.0, %v645
    %v647 = vmul.f32 %v644, %v646
    %v648 = vadd.f32 %v644, %v647
    %vm649 = vweird.f32 %v643
    %vm650 = vweird.f32 %v644
    %vm651 = vmor %vm649, %vm650
    %v652 = vsel %vm651, %v644, %v648
    %v653 = vand.u32 2147483647, %v643
    %vm654 = vcmp.eq.f32.partialorder %v653, 8.507059e+37
    %v655 = vand.u32 %v643, 2147483648
    %v656 = vor.u32 1.1754944e-38, %v655
    %v657 = vsel %vm654, %v656, %v652
    %v658 = vmul.f32 1.0, %v657
    %v659 = vadd.f32 %v616, %v274
    %v660 = vmul.f32 %v638, %v659
    %v661 = vadd.f32 %v579, %v660
    %v662 = vtanh.pop %v661
    %v663 = vsub.f32 1.0, %v658
    %v664 = vmul.f32 %v663, %v662
    %v665 = vmul.f32 %v658, %v570
    %v666 = vadd.f32 %v664, %v665
    %v667 = vpack.c.bf16 %v666, %v666
    %s668 = scalar_lea.vmem %s4, 16
    %669 = vst [vmem:[%s668] sm:$0xf] %v667
    %s670 = scalar_lea.vmem %s0, 60
    %v671 = vld [vmem:[%s670] sm:$0xff]
    %v672 = vld [vmem:[%s670 + $0x8] sm:$0xf]
    %v673 = vunpack.c.l.bf16 %v671
    %v674 = vunpack.c.h.bf16 %v671
    %v675 = vunpack.c.l.bf16 %v672
    %676 = vmatpush.bf16.msra.mxu0 %v167
    %677 = vmatpush.bf16.msra.mxu0 %v164
    %678 = vmatpush.bf16.msra.mxu0 %v161
    %679 = vmatpush.bf16.msra.mxu0 %v158
    %680 = vmatpush.bf16.msra.mxu0 %v155
    %681 = vmatpush.bf16.msra.mxu0 %v152
    %682 = vmatpush.bf16.msra.mxu0 %v149
    %683 = vmatpush.bf16.msra.mxu0 %v146
    %684 = vmatmul.bf16.gmra.mxu0 %v667
    %v685 = vpop.f32.mrf.mxu0
    %v686 = vadd.f32 0.0, %v685
    %v687 = vpop.f32.mrf.mxu0
    %688 = vdwg.mxu0
    %689 = vmatpush.bf16.msra.mxu0 %v168
    %690 = vmatpush.bf16.msra.mxu0 %v165
    %691 = vmatpush.bf16.msra.mxu0 %v162
    %692 = vmatpush.bf16.msra.mxu0 %v159
    %693 = vmatpush.bf16.msra.mxu0 %v156
    %694 = vmatpush.bf16.msra.mxu0 %v153
    %695 = vmatpush.bf16.msra.mxu0 %v150
    %696 = vmatpush.bf16.msra.mxu0 %v147
    %697 = vmatmul.bf16.gmra.mxu0 %v667
    %v698 = vpop.f32.mrf.mxu0
    %v699 = vadd.f32 0.0, %v698
    %v700 = vpop.f32.mrf.mxu0
    %701 = vdwg.mxu0
    %702 = vmatpush.bf16.msra.mxu0 %v169
    %703 = vmatpush.bf16.msra.mxu0 %v166
    %704 = vmatpush.bf16.msra.mxu0 %v163
    %705 = vmatpush.bf16.msra.mxu0 %v160
    %706 = vmatpush.bf16.msra.mxu0 %v157
    %707 = vmatpush.bf16.msra.mxu0 %v154
    %708 = vmatpush.bf16.msra.mxu0 %v151
    %709 = vmatpush.bf16.msra.mxu0 %v148
    %710 = vmatmul.bf16.gmra.mxu0 %v667
    %v711 = vpop.f32.mrf.mxu0
    %v712 = vadd.f32 0.0, %v711
    %v713 = vpop.f32.mrf.mxu0
    %714 = vdwg.mxu0
    %v715 = vadd.f32 %v673, %v686
    %v716 = vxor.u32 %v715, 2147483648
    %v717 = vmul.f32 %v716, 1.442695
    %v718 = vpow.pop %v717
    %v719 = vadd.f32 %v718, 1.0
    %v720 = vrcp.pop %v719
    %v721 = vmul.f32 %v719, %v720
    %v722 = vsub.f32 1.0, %v721
    %v723 = vmul.f32 %v720, %v722
    %v724 = vadd.f32 %v720, %v723
    %vm725 = vweird.f32 %v719
    %vm726 = vweird.f32 %v720
    %vm727 = vmor %vm725, %vm726
    %v728 = vsel %vm727, %v720, %v724
    %v729 = vand.u32 2147483647, %v719
    %vm730 = vcmp.eq.f32.partialorder %v729, 8.507059e+37
    %v731 = vand.u32 %v719, 2147483648
    %v732 = vor.u32 1.1754944e-38, %v731
    %v733 = vsel %vm730, %v732, %v728
    %v734 = vmul.f32 1.0, %v733
    %v735 = vadd.f32 %v674, %v699
    %v736 = vxor.u32 %v735, 2147483648
    %v737 = vmul.f32 %v736, 1.442695
    %v738 = vpow.pop %v737
    %v739 = vadd.f32 %v738, 1.0
    %v740 = vrcp.pop %v739
    %v741 = vmul.f32 %v739, %v740
    %v742 = vsub.f32 1.0, %v741
    %v743 = vmul.f32 %v740, %v742
    %v744 = vadd.f32 %v740, %v743
    %vm745 = vweird.f32 %v739
    %vm746 = vweird.f32 %v740
    %vm747 = vmor %vm745, %vm746
    %v748 = vsel %vm747, %v740, %v744
    %v749 = vand.u32 2147483647, %v739
    %vm750 = vcmp.eq.f32.partialorder %v749, 8.507059e+37
    %v751 = vand.u32 %v739, 2147483648
    %v752 = vor.u32 1.1754944e-38, %v751
    %v753 = vsel %vm750, %v752, %v748
    %v754 = vmul.f32 1.0, %v753
    %v755 = vadd.f32 %v712, %v274
    %v756 = vmul.f32 %v734, %v755
    %v757 = vadd.f32 %v675, %v756
    %v758 = vtanh.pop %v757
    %v759 = vsub.f32 1.0, %v754
    %v760 = vmul.f32 %v759, %v758
    %v761 = vmul.f32 %v754, %v666
    %v762 = vadd.f32 %v760, %v761
    %v763 = vpack.c.bf16 %v762, %v762
    %s764 = scalar_lea.vmem %s4, 20
    %765 = vst [vmem:[%s764] sm:$0xf] %v763
    %s766 = scalar_lea.vmem %s0, 72
    %v767 = vld [vmem:[%s766] sm:$0xff]
    %v768 = vld [vmem:[%s766 + $0x8] sm:$0xf]
    %v769 = vunpack.c.l.bf16 %v767
    %v770 = vunpack.c.h.bf16 %v767
    %v771 = vunpack.c.l.bf16 %v768
    %772 = vmatpush.bf16.msra.mxu0 %v167
    %773 = vmatpush.bf16.msra.mxu0 %v164
    %774 = vmatpush.bf16.msra.mxu0 %v161
    %775 = vmatpush.bf16.msra.mxu0 %v158
    %776 = vmatpush.bf16.msra.mxu0 %v155
    %777 = vmatpush.bf16.msra.mxu0 %v152
    %778 = vmatpush.bf16.msra.mxu0 %v149
    %779 = vmatpush.bf16.msra.mxu0 %v146
    %780 = vmatmul.bf16.gmra.mxu0 %v763
    %v781 = vpop.f32.mrf.mxu0
    %v782 = vadd.f32 0.0, %v781
    %v783 = vpop.f32.mrf.mxu0
    %784 = vdwg.mxu0
    %785 = vmatpush.bf16.msra.mxu0 %v168
    %786 = vmatpush.bf16.msra.mxu0 %v165
    %787 = vmatpush.bf16.msra.mxu0 %v162
    %788 = vmatpush.bf16.msra.mxu0 %v159
    %789 = vmatpush.bf16.msra.mxu0 %v156
    %790 = vmatpush.bf16.msra.mxu0 %v153
    %791 = vmatpush.bf16.msra.mxu0 %v150
    %792 = vmatpush.bf16.msra.mxu0 %v147
    %793 = vmatmul.bf16.gmra.mxu0 %v763
    %v794 = vpop.f32.mrf.mxu0
    %v795 = vadd.f32 0.0, %v794
    %v796 = vpop.f32.mrf.mxu0
    %797 = vdwg.mxu0
    %798 = vmatpush.bf16.msra.mxu0 %v169
    %799 = vmatpush.bf16.msra.mxu0 %v166
    %800 = vmatpush.bf16.msra.mxu0 %v163
    %801 = vmatpush.bf16.msra.mxu0 %v160
    %802 = vmatpush.bf16.msra.mxu0 %v157
    %803 = vmatpush.bf16.msra.mxu0 %v154
    %804 = vmatpush.bf16.msra.mxu0 %v151
    %805 = vmatpush.bf16.msra.mxu0 %v148
    %806 = vmatmul.bf16.gmra.mxu0 %v763
    %v807 = vpop.f32.mrf.mxu0
    %v808 = vadd.f32 0.0, %v807
    %v809 = vpop.f32.mrf.mxu0
    %810 = vdwg.mxu0
    %v811 = vadd.f32 %v769, %v782
    %v812 = vxor.u32 %v811, 2147483648
    %v813 = vmul.f32 %v812, 1.442695
    %v814 = vpow.pop %v813
    %v815 = vadd.f32 %v814, 1.0
    %v816 = vrcp.pop %v815
    %v817 = vmul.f32 %v815, %v816
    %v818 = vsub.f32 1.0, %v817
    %v819 = vmul.f32 %v816, %v818
    %v820 = vadd.f32 %v816, %v819
    %vm821 = vweird.f32 %v815
    %vm822 = vweird.f32 %v816
    %vm823 = vmor %vm821, %vm822
    %v824 = vsel %vm823, %v816, %v820
    %v825 = vand.u32 2147483647, %v815
    %vm826 = vcmp.eq.f32.partialorder %v825, 8.507059e+37
    %v827 = vand.u32 %v815, 2147483648
    %v828 = vor.u32 1.1754944e-38, %v827
    %v829 = vsel %vm826, %v828, %v824
    %v830 = vmul.f32 1.0, %v829
    %v831 = vadd.f32 %v770, %v795
    %v832 = vxor.u32 %v831, 2147483648
    %v833 = vmul.f32 %v832, 1.442695
    %v834 = vpow.pop %v833
    %v835 = vadd.f32 %v834, 1.0
    %v836 = vrcp.pop %v835
    %v837 = vmul.f32 %v835, %v836
    %v838 = vsub.f32 1.0, %v837
    %v839 = vmul.f32 %v836, %v838
    %v840 = vadd.f32 %v836, %v839
    %vm841 = vweird.f32 %v835
    %vm842 = vweird.f32 %v836
    %vm843 = vmor %vm841, %vm842
    %v844 = vsel %vm843, %v836, %v840
    %v845 = vand.u32 2147483647, %v835
    %vm846 = vcmp.eq.f32.partialorder %v845, 8.507059e+37
    %v847 = vand.u32 %v835, 2147483648
    %v848 = vor.u32 1.1754944e-38, %v847
    %v849 = vsel %vm846, %v848, %v844
    %v850 = vmul.f32 1.0, %v849
    %v851 = vadd.f32 %v808, %v274
    %v852 = vmul.f32 %v830, %v851
    %v853 = vadd.f32 %v771, %v852
    %v854 = vtanh.pop %v853
    %v855 = vsub.f32 1.0, %v850
    %v856 = vmul.f32 %v855, %v854
    %v857 = vmul.f32 %v850, %v762
    %v858 = vadd.f32 %v856, %v857
    %v859 = vpack.c.bf16 %v858, %v858
    %s860 = scalar_lea.vmem %s4, 24
    %861 = vst [vmem:[%s860] sm:$0xf] %v859
    %s862 = scalar_lea.vmem %s0, 84
    %v863 = vld [vmem:[%s862] sm:$0xff]
    %v864 = vld [vmem:[%s862 + $0x8] sm:$0xf]
    %v865 = vunpack.c.l.bf16 %v863
    %v866 = vunpack.c.h.bf16 %v863
    %v867 = vunpack.c.l.bf16 %v864
    %868 = vmatpush.bf16.msra.mxu0 %v167
    %869 = vmatpush.bf16.msra.mxu0 %v164
    %870 = vmatpush.bf16.msra.mxu0 %v161
    %871 = vmatpush.bf16.msra.mxu0 %v158
    %872 = vmatpush.bf16.msra.mxu0 %v155
    %873 = vmatpush.bf16.msra.mxu0 %v152
    %874 = vmatpush.bf16.msra.mxu0 %v149
    %875 = vmatpush.bf16.msra.mxu0 %v146
    %876 = vmatmul.bf16.gmra.mxu0 %v859
    %v877 = vpop.f32.mrf.mxu0
    %v878 = vadd.f32 0.0, %v877
    %v879 = vpop.f32.mrf.mxu0
    %880 = vdwg.mxu0
    %881 = vmatpush.bf16.msra.mxu0 %v168
    %882 = vmatpush.bf16.msra.mxu0 %v165
    %883 = vmatpush.bf16.msra.mxu0 %v162
    %884 = vmatpush.bf16.msra.mxu0 %v159
    %885 = vmatpush.bf16.msra.mxu0 %v156
    %886 = vmatpush.bf16.msra.mxu0 %v153
    %887 = vmatpush.bf16.msra.mxu0 %v150
    %888 = vmatpush.bf16.msra.mxu0 %v147
    %889 = vmatmul.bf16.gmra.mxu0 %v859
    %v890 = vpop.f32.mrf.mxu0
    %v891 = vadd.f32 0.0, %v890
    %v892 = vpop.f32.mrf.mxu0
    %893 = vdwg.mxu0
    %894 = vmatpush.bf16.msra.mxu0 %v169
    %895 = vmatpush.bf16.msra.mxu0 %v166
    %896 = vmatpush.bf16.msra.mxu0 %v163
    %897 = vmatpush.bf16.msra.mxu0 %v160
    %898 = vmatpush.bf16.msra.mxu0 %v157
    %899 = vmatpush.bf16.msra.mxu0 %v154
    %900 = vmatpush.bf16.msra.mxu0 %v151
    %901 = vmatpush.bf16.msra.mxu0 %v148
    %902 = vmatmul.bf16.gmra.mxu0 %v859
    %v903 = vpop.f32.mrf.mxu0
    %v904 = vadd.f32 0.0, %v903
    %v905 = vpop.f32.mrf.mxu0
    %906 = vdwg.mxu0
    %v907 = vadd.f32 %v865, %v878
    %v908 = vxor.u32 %v907, 2147483648
    %v909 = vmul.f32 %v908, 1.442695
    %v910 = vpow.pop %v909
    %v911 = vadd.f32 %v910, 1.0
    %v912 = vrcp.pop %v911
    %v913 = vmul.f32 %v911, %v912
    %v914 = vsub.f32 1.0, %v913
    %v915 = vmul.f32 %v912, %v914
    %v916 = vadd.f32 %v912, %v915
    %vm917 = vweird.f32 %v911
    %vm918 = vweird.f32 %v912
    %vm919 = vmor %vm917, %vm918
    %v920 = vsel %vm919, %v912, %v916
    %v921 = vand.u32 2147483647, %v911
    %vm922 = vcmp.eq.f32.partialorder %v921, 8.507059e+37
    %v923 = vand.u32 %v911, 2147483648
    %v924 = vor.u32 1.1754944e-38, %v923
    %v925 = vsel %vm922, %v924, %v920
    %v926 = vmul.f32 1.0, %v925
    %v927 = vadd.f32 %v866, %v891
    %v928 = vxor.u32 %v927, 2147483648
    %v929 = vmul.f32 %v928, 1.442695
    %v930 = vpow.pop %v929
    %v931 = vadd.f32 %v930, 1.0
    %v932 = vrcp.pop %v931
    %v933 = vmul.f32 %v931, %v932
    %v934 = vsub.f32 1.0, %v933
    %v935 = vmul.f32 %v932, %v934
    %v936 = vadd.f32 %v932, %v935
    %vm937 = vweird.f32 %v931
    %vm938 = vweird.f32 %v932
    %vm939 = vmor %vm937, %vm938
    %v940 = vsel %vm939, %v932, %v936
    %v941 = vand.u32 2147483647, %v931
    %vm942 = vcmp.eq.f32.partialorder %v941, 8.507059e+37
    %v943 = vand.u32 %v931, 2147483648
    %v944 = vor.u32 1.1754944e-38, %v943
    %v945 = vsel %vm942, %v944, %v940
    %v946 = vmul.f32 1.0, %v945
    %v947 = vadd.f32 %v904, %v274
    %v948 = vmul.f32 %v926, %v947
    %v949 = vadd.f32 %v867, %v948
    %v950 = vtanh.pop %v949
    %v951 = vsub.f32 1.0, %v946
    %v952 = vmul.f32 %v951, %v950
    %v953 = vmul.f32 %v946, %v858
    %v954 = vadd.f32 %v952, %v953
    %v955 = vpack.c.bf16 %v954, %v954
    %s956 = scalar_lea.vmem %s4, 28
    %957 = vst [vmem:[%s956] sm:$0xf] %v955
    %958 = vst [vmem:[#allocation2] sm:$0xff] %v954
    // Predicated region
    $region22: #{seq2seq_forward.4} parent=1 // pred_check
      %p959 = pneg %p20
    $region23: #{seq2seq_forward.4} parent=1 // pred_check_branch
      %961 = sbr.rel (%p959) target = $region25
    $region24: #{seq2seq_forward.4} parent=1 // pred_region
      %962 = vst [vmem:[#allocation3] sm:$0xff] %v954
    $region25: #{seq2seq_forward.4} parent=1 // pred_fallthru
      _
    // Predicated region
    $region26: #{seq2seq_forward.4} parent=1 // pred_check
      _
    $region27: #{seq2seq_forward.4} parent=1 // pred_check_branch
      %964 = sbr.rel (0) target = $region29
    $region28: #{seq2seq_forward.4} parent=1 // pred_region
      _
    $region29: #{seq2seq_forward.4} parent=1 // pred_fallthru
      _
    // Predicated region
    $region30: #{seq2seq_forward.4} parent=1 // pred_check
      _
    $region31: #{seq2seq_forward.4} parent=1 // pred_check_branch
      %966 = sbr.rel (0) target = $region33
    $region32: #{seq2seq_forward.4} parent=1 // pred_region
      %968 = vsyncadd [#allocation4], 0
      %s970 = sshll.u32 [#allocation3], 4
      %s971 = int_to_ptr.vmem [resolvable:$true] %s970
      %s972 = sshll.u32 %s5, 4
      %s973 = int_to_ptr.hbm [resolvable:$true] %s972
      %975 = dma.vmem_to_hbm [thread:$0]  %s971, 128, %s973, [#allocation4]
    $region33: #{seq2seq_forward.4} parent=1 // pred_fallthru
      _
    // Predicated region
    $region34: #{seq2seq_forward.4} parent=1 // pred_check
      _
    $region35: #{seq2seq_forward.4} parent=1 // pred_check_branch
      %977 = sbr.rel (0) target = $region37
    $region36: #{seq2seq_forward.4} parent=1 // pred_region
      _
    $region37: #{seq2seq_forward.4} parent=1 // pred_fallthru
      _
    // Predicated region
    $region38: #{seq2seq_forward.4} parent=1 // pred_check
      _
    $region39: #{seq2seq_forward.4} parent=1 // pred_check_branch
      %979 = sbr.rel (0) target = $region41
    $region40: #{seq2seq_forward.4} parent=1 // pred_region
      %981 = dma.done [#allocation4], 128
    $region41: #{seq2seq_forward.4} parent=1 // pred_fallthru
      _
    %982 = vsyncpa [#allocation4], 1

// kernel: seq2seq_forward.5
$region0: #{seq2seq_forward.5}
  #allocation0 [shape = 'u32[]', space=smem, size = 0x4, offset = 0x4, fixed_abs, tag = 'smem constant byte address 0x4 - core index']
  #allocation1 [shape = 'u32[72,128]{1,0:T(1,128)}', space=vmem, size = 0x9000, scoped, tag = 'internal scratch']
  %s0 = inlined_call_operand.vmem [shape: bf16[64,128], index: 0, kind: input, shape index: {}]
  %s1 = inlined_call_operand.vmem [shape: bf16[128,384], index: 1, kind: input, shape index: {}]
  %s2 = inlined_call_operand.vmem [shape: f32[1,384], index: 2, kind: input, shape index: {}]
  %s3 = inlined_call_operand.vmem [shape: f32[64,384], index: 3, kind: output, shape index: {}]
  %s4 = sld [smem:[#allocation0]]
  $region22: #{seq2seq_forward.5} parent=0
    _
  %s6 = ssub.s32 1, %s4
  %s7 = scalar_select 0, %s6, %s4
  // Predicated region
  $region2: #{seq2seq_forward.5} parent=0 // pred_check
    _
  $region3: #{seq2seq_forward.5} parent=0 // pred_check_branch
    %9 = sbr.rel (0) target = $region5
  $region4: #{seq2seq_forward.5} parent=0 // pred_region
    _
  $region5: #{seq2seq_forward.5} parent=0 // pred_fallthru
    _
  // Predicated region
  $region6: #{seq2seq_forward.5} parent=0 // pred_check
    _
  $region7: #{seq2seq_forward.5} parent=0 // pred_check_branch
    %11 = sbr.rel (0) target = $region9
  $region8: #{seq2seq_forward.5} parent=0 // pred_region
    _
  $region9: #{seq2seq_forward.5} parent=0 // pred_fallthru
    _
  // Predicated region
  $region10: #{seq2seq_forward.5} parent=0 // pred_check
    _
  $region11: #{seq2seq_forward.5} parent=0 // pred_check_branch
    %13 = sbr.rel (0) target = $region13
  $region12: #{seq2seq_forward.5} parent=0 // pred_region
    _
  $region13: #{seq2seq_forward.5} parent=0 // pred_fallthru
    _
  %v14 = vld [vmem:[%s0] sm:$0xf]
  %v15 = vld [vmem:[%s0 + $0x4] sm:$0xf]
  %v16 = vld [vmem:[%s0 + $0x8] sm:$0xf]
  %v17 = vld [vmem:[%s0 + $0xc] sm:$0xf]
  %v18 = vld [vmem:[%s0 + $0x10] sm:$0xf]
  %v19 = vld [vmem:[%s0 + $0x14] sm:$0xf]
  %v20 = vld [vmem:[%s0 + $0x18] sm:$0xf]
  %v21 = vld [vmem:[%s0 + $0x1c] sm:$0xf]
  %v22 = vld [vmem:[%s1] sm:$0xff]
  %v23 = vld [vmem:[%s1 + $0x8] sm:$0xf]
  %v24 = vld [vmem:[%s1 + $0xc] sm:$0xff]
  %v25 = vld [vmem:[%s1 + $0x14] sm:$0xf]
  %v26 = vld [vmem:[%s1 + $0x18] sm:$0xff]
  %v27 = vld [vmem:[%s1 + $0x20] sm:$0xf]
  %v28 = vld [vmem:[%s1 + $0x24] sm:$0xff]
  %v29 = vld [vmem:[%s1 + $0x2c] sm:$0xf]
  %v30 = vld [vmem:[%s1 + $0x30] sm:$0xff]
  %v31 = vld [vmem:[%s1 + $0x38] sm:$0xf]
  %v32 = vld [vmem:[%s1 + $0x3c] sm:$0xff]
  %v33 = vld [vmem:[%s1 + $0x44] sm:$0xf]
  %v34 = vld [vmem:[%s1 + $0x48] sm:$0xff]
  %v35 = vld [vmem:[%s1 + $0x50] sm:$0xf]
  %v36 = vld [vmem:[%s1 + $0x54] sm:$0xff]
  %v37 = vld [vmem:[%s1 + $0x5c] sm:$0xf]
  %v38 = vld [vmem:[%s1 + $0x60] sm:$0xff]
  %v39 = vld [vmem:[%s1 + $0x68] sm:$0xf]
  %v40 = vld [vmem:[%s1 + $0x6c] sm:$0xff]
  %v41 = vld [vmem:[%s1 + $0x74] sm:$0xf]
  %v42 = vld [vmem:[%s1 + $0x78] sm:$0xff]
  %v43 = vld [vmem:[%s1 + $0x80] sm:$0xf]
  %v44 = vld [vmem:[%s1 + $0x84] sm:$0xff]
  %v45 = vld [vmem:[%s1 + $0x8c] sm:$0xf]
  %v46 = vld [vmem:[%s1 + $0x90] sm:$0xff]
  %v47 = vld [vmem:[%s1 + $0x98] sm:$0xf]
  %v48 = vld [vmem:[%s1 + $0x9c] sm:$0xff]
  %v49 = vld [vmem:[%s1 + $0xa4] sm:$0xf]
  %v50 = vld [vmem:[%s1 + $0xa8] sm:$0xff]
  %v51 = vld [vmem:[%s1 + $0xb0] sm:$0xf]
  %v52 = vld [vmem:[%s1 + $0xb4] sm:$0xff]
  %v53 = vld [vmem:[%s1 + $0xbc] sm:$0xf]
  %v54 = vld [vmem:[%s2] sm:$0x7]
  %v56 = vperm.slane %v54, 0
  %v57 = vperm.slane %v54, 1
  %v58 = vperm.slane %v54, 2
  %v70 = vunpack.c.l.b16 %v14
  %v71 = vunpack.c.l.b16 %v15
  %v72 = vunpack.c.l.b16 %v16
  %v73 = vunpack.c.l.b16 %v17
  %v74 = vunpack.c.l.b16 %v18
  %v75 = vunpack.c.l.b16 %v19
  %v76 = vunpack.c.l.b16 %v20
  %v77 = vunpack.c.l.b16 %v21
  %v78 = vpack.c.b16 %v71, %v70
  %v79 = vpack.c.b16 %v73, %v72
  %v80 = vpack.c.b16 %v75, %v74
  %v81 = vpack.c.b16 %v77, %v76
  %v118 = vunpack.c.l.b16 %v22
  %v119 = vunpack.c.h.b16 %v22
  %v120 = vunpack.c.l.b16 %v23
  %v121 = vunpack.c.l.b16 %v24
  %v122 = vunpack.c.h.b16 %v24
  %v123 = vunpack.c.l.b16 %v25
  %v124 = vunpack.c.l.b16 %v26
  %v125 = vunpack.c.h.b16 %v26
  %v126 = vunpack.c.l.b16 %v27
  %v127 = vunpack.c.l.b16 %v28
  %v128 = vunpack.c.h.b16 %v28
  %v129 = vunpack.c.l.b16 %v29
  %v130 = vunpack.c.l.b16 %v30
  %v131 = vunpack.c.h.b16 %v30
  %v132 = vunpack.c.l.b16 %v31
  %v133 = vunpack.c.l.b16 %v32
  %v134 = vunpack.c.h.b16 %v32
  %v135 = vunpack.c.l.b16 %v33
  %v136 = vunpack.c.l.b16 %v34
  %v137 = vunpack.c.h.b16 %v34
  %v138 = vunpack.c.l.b16 %v35
  %v139 = vunpack.c.l.b16 %v36
  %v140 = vunpack.c.h.b16 %v36
  %v141 = vunpack.c.l.b16 %v37
  %v142 = vunpack.c.l.b16 %v38
  %v143 = vunpack.c.h.b16 %v38
  %v144 = vunpack.c.l.b16 %v39
  %v145 = vunpack.c.l.b16 %v40
  %v146 = vunpack.c.h.b16 %v40
  %v147 = vunpack.c.l.b16 %v41
  %v148 = vunpack.c.l.b16 %v42
  %v149 = vunpack.c.h.b16 %v42
  %v150 = vunpack.c.l.b16 %v43
  %v151 = vunpack.c.l.b16 %v44
  %v152 = vunpack.c.h.b16 %v44
  %v153 = vunpack.c.l.b16 %v45
  %v154 = vunpack.c.l.b16 %v46
  %v155 = vunpack.c.h.b16 %v46
  %v156 = vunpack.c.l.b16 %v47
  %v157 = vunpack.c.l.b16 %v48
  %v158 = vunpack.c.h.b16 %v48
  %v159 = vunpack.c.l.b16 %v49
  %v160 = vunpack.c.l.b16 %v50
  %v161 = vunpack.c.h.b16 %v50
  %v162 = vunpack.c.l.b16 %v51
  %v163 = vunpack.c.l.b16 %v52
  %v164 = vunpack.c.h.b16 %v52
  %v165 = vunpack.c.l.b16 %v53
  %v166 = vpack.c.b16 %v121, %v118
  %v167 = vpack.c.b16 %v122, %v119
  %v168 = vpack.c.b16 %v123, %v120
  %v169 = vpack.c.b16 %v127, %v124
  %v170 = vpack.c.b16 %v128, %v125
  %v171 = vpack.c.b16 %v129, %v126
  %v172 = vpack.c.b16 %v133, %v130
  %v173 = vpack.c.b16 %v134, %v131
  %v174 = vpack.c.b16 %v135, %v132
  %v175 = vpack.c.b16 %v139, %v136
  %v176 = vpack.c.b16 %v140, %v137
  %v177 = vpack.c.b16 %v141, %v138
  %v178 = vpack.c.b16 %v145, %v142
  %v179 = vpack.c.b16 %v146, %v143
  %v180 = vpack.c.b16 %v147, %v144
  %v181 = vpack.c.b16 %v151, %v148
  %v182 = vpack.c.b16 %v152, %v149
  %v183 = vpack.c.b16 %v153, %v150
  %v184 = vpack.c.b16 %v157, %v154
  %v185 = vpack.c.b16 %v158, %v155
  %v186 = vpack.c.b16 %v159, %v156
  %v187 = vpack.c.b16 %v163, %v160
  %v188 = vpack.c.b16 %v164, %v161
  %v189 = vpack.c.b16 %v165, %v162
  %214 = vmatpush.bf16.msra.mxu0 %v187
  %215 = vmatpush.bf16.msra.mxu0 %v184
  %216 = vmatpush.bf16.msra.mxu0 %v181
  %217 = vmatpush.bf16.msra.mxu0 %v178
  %218 = vmatpush.bf16.msra.mxu0 %v175
  %219 = vmatpush.bf16.msra.mxu0 %v172
  %220 = vmatpush.bf16.msra.mxu0 %v169
  %221 = vmatpush.bf16.msra.mxu0 %v166
  %222 = vmatmul.bf16.gmra.mxu0 %v78
  %v223 = vpop.f32.mrf.mxu0
  %v224 = vadd.f32 %v56, %v223
  %v225 = vpop.f32.mrf.mxu0
  %v226 = vadd.f32 %v56, %v225
  %227 = vmatmul.bf16.gmra.mxu0 %v79
  %v228 = vpop.f32.mrf.mxu0
  %v229 = vadd.f32 %v56, %v228
  %v230 = vpop.f32.mrf.mxu0
  %v231 = vadd.f32 %v56, %v230
  %232 = vmatmul.bf16.gmra.mxu0 %v80
  %v233 = vpop.f32.mrf.mxu0
  %v234 = vadd.f32 %v56, %v233
  %v235 = vpop.f32.mrf.mxu0
  %v236 = vadd.f32 %v56, %v235
  %237 = vmatmul.bf16.gmra.mxu0 %v81
  %v238 = vpop.f32.mrf.mxu0
  %v239 = vadd.f32 %v56, %v238
  %v240 = vpop.f32.mrf.mxu0
  %v241 = vadd.f32 %v56, %v240
  %242 = vdwg.mxu0
  %243 = vmatpush.bf16.msra.mxu0 %v188
  %244 = vmatpush.bf16.msra.mxu0 %v185
  %245 = vmatpush.bf16.msra.mxu0 %v182
  %246 = vmatpush.bf16.msra.mxu0 %v179
  %247 = vmatpush.bf16.msra.mxu0 %v176
  %248 = vmatpush.bf16.msra.mxu0 %v173
  %249 = vmatpush.bf16.msra.mxu0 %v170
  %250 = vmatpush.bf16.msra.mxu0 %v167
  %251 = vmatmul.bf16.gmra.mxu0 %v78
  %v252 = vpop.f32.mrf.mxu0
  %v253 = vadd.f32 %v57, %v252
  %v254 = vpop.f32.mrf.mxu0
  %v255 = vadd.f32 %v57, %v254
  %256 = vmatmul.bf16.gmra.mxu0 %v79
  %v257 = vpop.f32.mrf.mxu0
  %v258 = vadd.f32 %v57, %v257
  %v259 = vpop.f32.mrf.mxu0
  %v260 = vadd.f32 %v57, %v259
  %261 = vmatmul.bf16.gmra.mxu0 %v80
  %v262 = vpop.f32.mrf.mxu0
  %v263 = vadd.f32 %v57, %v262
  %v264 = vpop.f32.mrf.mxu0
  %v265 = vadd.f32 %v57, %v264
  %266 = vmatmul.bf16.gmra.mxu0 %v81
  %v267 = vpop.f32.mrf.mxu0
  %v268 = vadd.f32 %v57, %v267
  %v269 = vpop.f32.mrf.mxu0
  %v270 = vadd.f32 %v57, %v269
  %271 = vdwg.mxu0
  %272 = vmatpush.bf16.msra.mxu0 %v189
  %273 = vmatpush.bf16.msra.mxu0 %v186
  %274 = vmatpush.bf16.msra.mxu0 %v183
  %275 = vmatpush.bf16.msra.mxu0 %v180
  %276 = vmatpush.bf16.msra.mxu0 %v177
  %277 = vmatpush.bf16.msra.mxu0 %v174
  %278 = vmatpush.bf16.msra.mxu0 %v171
  %279 = vmatpush.bf16.msra.mxu0 %v168
  %280 = vmatmul.bf16.gmra.mxu0 %v78
  %v281 = vpop.f32.mrf.mxu0
  %v282 = vadd.f32 %v58, %v281
  %v283 = vpop.f32.mrf.mxu0
  %v284 = vadd.f32 %v58, %v283
  %285 = vmatmul.bf16.gmra.mxu0 %v79
  %v286 = vpop.f32.mrf.mxu0
  %v287 = vadd.f32 %v58, %v286
  %v288 = vpop.f32.mrf.mxu0
  %v289 = vadd.f32 %v58, %v288
  %290 = vmatmul.bf16.gmra.mxu0 %v80
  %v291 = vpop.f32.mrf.mxu0
  %v292 = vadd.f32 %v58, %v291
  %v293 = vpop.f32.mrf.mxu0
  %v294 = vadd.f32 %v58, %v293
  %295 = vmatmul.bf16.gmra.mxu0 %v81
  %v296 = vpop.f32.mrf.mxu0
  %v297 = vadd.f32 %v58, %v296
  %v298 = vpop.f32.mrf.mxu0
  %v299 = vadd.f32 %v58, %v298
  %300 = vdwg.mxu0
  %v301 = vmax.f32 %v224, %v253
  %v302 = vmax.f32 %v301, %v282
  %303 = vmax.xlane.f32.xlu0 %v302
  %v304 = vpop.xlane.xlu0 %303
  %v305 = vmax.f32 %v226, %v255
  %v306 = vmax.f32 %v305, %v284
  %307 = vmax.xlane.f32.xlu0 %v306
  %v308 = vpop.xlane.xlu0 %307
  %v309 = vmax.f32 %v229, %v258
  %v310 = vmax.f32 %v309, %v287
  %311 = vmax.xlane.f32.xlu0 %v310
  %v312 = vpop.xlane.xlu0 %311
  %v313 = vmax.f32 %v231, %v260
  %v314 = vmax.f32 %v313, %v289
  %315 = vmax.xlane.f32.xlu0 %v314
  %v316 = vpop.xlane.xlu0 %315
  %v317 = vmax.f32 %v234, %v263
  %v318 = vmax.f32 %v317, %v292
  %319 = vmax.xlane.f32.xlu0 %v318
  %v320 = vpop.xlane.xlu0 %319
  %v321 = vmax.f32 %v236, %v265
  %v322 = vmax.f32 %v321, %v294
  %323 = vmax.xlane.f32.xlu0 %v322
  %v324 = vpop.xlane.xlu0 %323
  %v325 = vmax.f32 %v239, %v268
  %v326 = vmax.f32 %v325, %v297
  %327 = vmax.xlane.f32.xlu0 %v326
  %v328 = vpop.xlane.xlu0 %327
  %v329 = vmax.f32 %v241, %v270
  %v330 = vmax.f32 %v329, %v299
  %331 = vmax.xlane.f32.xlu0 %v330
  %v332 = vpop.xlane.xlu0 %331
  %v333 = vsub.f32 %v224, %v304
  %v334 = vsub.f32 %v253, %v304
  %v335 = vsub.f32 %v282, %v304
  %v336 = vsub.f32 %v226, %v308
  %v337 = vsub.f32 %v255, %v308
  %v338 = vsub.f32 %v284, %v308
  %v339 = vsub.f32 %v229, %v312
  %v340 = vsub.f32 %v258, %v312
  %v341 = vsub.f32 %v287, %v312
  %v342 = vsub.f32 %v231, %v316
  %v343 = vsub.f32 %v260, %v316
  %v344 = vsub.f32 %v289, %v316
  %v345 = vsub.f32 %v234, %v320
  %v346 = vsub.f32 %v263, %v320
  %v347 = vsub.f32 %v292, %v320
  %v348 = vsub.f32 %v236, %v324
  %v349 = vsub.f32 %v265, %v324
  %v350 = vsub.f32 %v294, %v324
  %v351 = vsub.f32 %v239, %v328
  %v352 = vsub.f32 %v268, %v328
  %v353 = vsub.f32 %v297, %v328
  %v354 = vsub.f32 %v241, %v332
  %v355 = vsub.f32 %v270, %v332
  %v356 = vsub.f32 %v299, %v332
  %v357 = vmul.f32 %v333, 1.442695
  %v358 = vpow.pop %v357
  %v359 = vmul.f32 %v334, 1.442695
  %v360 = vpow.pop %v359
  %v361 = vmul.f32 %v335, 1.442695
  %v362 = vpow.pop %v361
  %v363 = vmul.f32 %v336, 1.442695
  %v364 = vpow.pop %v363
  %v365 = vmul.f32 %v337, 1.442695
  %v366 = vpow.pop %v365
  %v367 = vmul.f32 %v338, 1.442695
  %v368 = vpow.pop %v367
  %v369 = vmul.f32 %v339, 1.442695
  %v370 = vpow.pop %v369
  %v371 = vmul.f32 %v340, 1.442695
  %v372 = vpow.pop %v371
  %v373 = vmul.f32 %v341, 1.442695
  %v374 = vpow.pop %v373
  %v375 = vmul.f32 %v342, 1.442695
  %v376 = vpow.pop %v375
  %v377 = vmul.f32 %v343, 1.442695
  %v378 = vpow.pop %v377
  %v379 = vmul.f32 %v344, 1.442695
  %v380 = vpow.pop %v379
  %v381 = vmul.f32 %v345, 1.442695
  %v382 = vpow.pop %v381
  %v383 = vmul.f32 %v346, 1.442695
  %v384 = vpow.pop %v383
  %v385 = vmul.f32 %v347, 1.442695
  %v386 = vpow.pop %v385
  %v387 = vmul.f32 %v348, 1.442695
  %v388 = vpow.pop %v387
  %v389 = vmul.f32 %v349, 1.442695
  %v390 = vpow.pop %v389
  %v391 = vmul.f32 %v350, 1.442695
  %v392 = vpow.pop %v391
  %v393 = vmul.f32 %v351, 1.442695
  %v394 = vpow.pop %v393
  %v395 = vmul.f32 %v352, 1.442695
  %v396 = vpow.pop %v395
  %v397 = vmul.f32 %v353, 1.442695
  %v398 = vpow.pop %v397
  %v399 = vmul.f32 %v354, 1.442695
  %v400 = vpow.pop %v399
  %v401 = vmul.f32 %v355, 1.442695
  %v402 = vpow.pop %v401
  %v403 = vmul.f32 %v356, 1.442695
  %v404 = vpow.pop %v403
  %v405 = vadd.f32 %v358, %v360
  %v406 = vadd.f32 %v405, %v362
  %407 = vadd.xlane.f32.xlu0 %v406
  %v408 = vpop.xlane.xlu0 %407
  %v409 = vadd.f32 %v364, %v366
  %v410 = vadd.f32 %v409, %v368
  %411 = vadd.xlane.f32.xlu0 %v410
  %v412 = vpop.xlane.xlu0 %411
  %v413 = vadd.f32 %v370, %v372
  %v414 = vadd.f32 %v413, %v374
  %415 = vadd.xlane.f32.xlu0 %v414
  %v416 = vpop.xlane.xlu0 %415
  %v417 = vadd.f32 %v376, %v378
  %v418 = vadd.f32 %v417, %v380
  %419 = vadd.xlane.f32.xlu0 %v418
  %v420 = vpop.xlane.xlu0 %419
  %v421 = vadd.f32 %v382, %v384
  %v422 = vadd.f32 %v421, %v386
  %423 = vadd.xlane.f32.xlu0 %v422
  %v424 = vpop.xlane.xlu0 %423
  %v425 = vadd.f32 %v388, %v390
  %v426 = vadd.f32 %v425, %v392
  %427 = vadd.xlane.f32.xlu0 %v426
  %v428 = vpop.xlane.xlu0 %427
  %v429 = vadd.f32 %v394, %v396
  %v430 = vadd.f32 %v429, %v398
  %431 = vadd.xlane.f32.xlu0 %v430
  %v432 = vpop.xlane.xlu0 %431
  %v433 = vadd.f32 %v400, %v402
  %v434 = vadd.f32 %v433, %v404
  %435 = vadd.xlane.f32.xlu0 %v434
  %v436 = vpop.xlane.xlu0 %435
  %v437 = vlog2.pop %v408
  %v438 = vmul.f32 %v437, 0.6931472
  %v439 = vlog2.pop %v412
  %v440 = vmul.f32 %v439, 0.6931472
  %v441 = vlog2.pop %v416
  %v442 = vmul.f32 %v441, 0.6931472
  %v443 = vlog2.pop %v420
  %v444 = vmul.f32 %v443, 0.6931472
  %v445 = vlog2.pop %v424
  %v446 = vmul.f32 %v445, 0.6931472
  %v447 = vlog2.pop %v428
  %v448 = vmul.f32 %v447, 0.6931472
  %v449 = vlog2.pop %v432
  %v450 = vmul.f32 %v449, 0.6931472
  %v451 = vlog2.pop %v436
  %v452 = vmul.f32 %v451, 0.6931472
  %v453 = vsub.f32 %v333, %v438
  %v454 = vsub.f32 %v334, %v438
  %v455 = vsub.f32 %v335, %v438
  %v456 = vsub.f32 %v336, %v440
  %v457 = vsub.f32 %v337, %v440
  %v458 = vsub.f32 %v338, %v440
  %v459 = vsub.f32 %v339, %v442
  %v460 = vsub.f32 %v340, %v442
  %v461 = vsub.f32 %v341, %v442
  %v462 = vsub.f32 %v342, %v444
  %v463 = vsub.f32 %v343, %v444
  %v464 = vsub.f32 %v344, %v444
  %v465 = vsub.f32 %v345, %v446
  %v466 = vsub.f32 %v346, %v446
  %v467 = vsub.f32 %v347, %v446
  %v468 = vsub.f32 %v348, %v448
  %v469 = vsub.f32 %v349, %v448
  %v470 = vsub.f32 %v350, %v448
  %v471 = vsub.f32 %v351, %v450
  %v472 = vsub.f32 %v352, %v450
  %v473 = vsub.f32 %v353, %v450
  %v474 = vsub.f32 %v354, %v452
  %v475 = vsub.f32 %v355, %v452
  %v476 = vsub.f32 %v356, %v452
  %477 = vst [vmem:[%s3] sm:$0xff] %v453
  %478 = vst [vmem:[%s3 + $0x8] sm:$0xff] %v454
  %479 = vst [vmem:[%s3 + $0x10] sm:$0xff] %v455
  %480 = vst [vmem:[%s3 + $0x18] sm:$0xff] %v456
  %481 = vst [vmem:[%s3 + $0x20] sm:$0xff] %v457
  %482 = vst [vmem:[%s3 + $0x28] sm:$0xff] %v458
  %483 = vst [vmem:[%s3 + $0x30] sm:$0xff] %v459
  %484 = vst [vmem:[%s3 + $0x38] sm:$0xff] %v460
  %485 = vst [vmem:[%s3 + $0x40] sm:$0xff] %v461
  %486 = vst [vmem:[%s3 + $0x48] sm:$0xff] %v462
  %487 = vst [vmem:[%s3 + $0x50] sm:$0xff] %v463
  %488 = vst [vmem:[%s3 + $0x58] sm:$0xff] %v464
  %489 = vst [vmem:[%s3 + $0x60] sm:$0xff] %v465
  %490 = vst [vmem:[%s3 + $0x68] sm:$0xff] %v466
  %491 = vst [vmem:[%s3 + $0x70] sm:$0xff] %v467
  %492 = vst [vmem:[%s3 + $0x78] sm:$0xff] %v468
  %493 = vst [vmem:[%s3 + $0x80] sm:$0xff] %v469
  %494 = vst [vmem:[%s3 + $0x88] sm:$0xff] %v470
  %495 = vst [vmem:[%s3 + $0x90] sm:$0xff] %v471
  %496 = vst [vmem:[%s3 + $0x98] sm:$0xff] %v472
  %497 = vst [vmem:[%s3 + $0xa0] sm:$0xff] %v473
  %498 = vst [vmem:[%s3 + $0xa8] sm:$0xff] %v474
  %499 = vst [vmem:[%s3 + $0xb0] sm:$0xff] %v475
  %500 = vst [vmem:[%s3 + $0xb8] sm:$0xff] %v476
  // Predicated region
  $region14: #{seq2seq_forward.5} parent=0 // pred_check
    _
  $region15: #{seq2seq_forward.5} parent=0 // pred_check_branch
    %502 = sbr.rel (0) target = $region17
  $region16: #{seq2seq_forward.5} parent=0 // pred_region
    _
  $region17: #{seq2seq_forward.5} parent=0 // pred_fallthru
    _
  // Predicated region
  $region18: #{seq2seq_forward.5} parent=0 // pred_check
    _
  $region19: #{seq2seq_forward.5} parent=0 // pred_check_branch
    %504 = sbr.rel (0) target = $region21
  $region20: #{seq2seq_forward.5} parent=0 // pred_region
    _
  $region21: #{seq2seq_forward.5} parent=0 // pred_fallthru
    _

</llo_original>
